<compile_context>
chip_gen: v7x
topology: tpu7x:2x2x1
jax: 0.10.0
libtpu: 0.0.40
codegen_flags: <defaults>
</compile_context>

<pallas_src>
import jax
import jax.numpy as jnp
from jax import lax
from jax.experimental import pallas as pl
from jax.experimental.pallas import tpu as pltpu

BOARD_N = 8          # chess board is n x n
NUM_CHANNELS = 32    # args.num_channels (small, synthetic)
KSIZE = 2            # args.kernel_size (stride=1, padding=0)
ACTION_SIZE = 128    # synthetic small action space
BN_EPS = 1e-5
SP_OUT = BOARD_N - 4                          # spatial size after 4 valid k=2 convs
FC1_IN = NUM_CHANNELS * SP_OUT * SP_OUT       # 512
HEAD_N = ((ACTION_SIZE + 1 + 127) // 128) * 128   # policy+value cols, lane padded

_VMEM = pl.BlockSpec(memory_space=pltpu.MemorySpace.VMEM)


# ----------------------------------------------------------------------------
# Fused Pallas kernel: conv1..4 (+BN+ReLU), flatten, fc1/fc2 (+BN+ReLU),
# fc3 -> log_softmax and fc4 -> tanh.
#
# Conv layout: activations are a 2-D canvas of shape (B*H, W*C) with channels
# on the lane axis.  out[r] = in[r] @ Wband0 + in[r+1] @ Wband1, where
# Wband[ki] is a banded block matrix (built offline) that realizes the kj/Cin
# contraction, with BN scale folded in.  Rows at per-batch boundaries are
# computed but never consumed ("garbage rows"); they stay finite.
# ----------------------------------------------------------------------------
def _fused_forward_kernel(
        x_ref,
        cb10, cb11, cs1, cb20, cb21, cs2, cb30, cb31, cs3, cb40, cb41, cs4,
        w1_ref, s1_ref, w2_ref, s2_ref, w34_ref, b34_ref,
        logp_ref, v_ref, fcin_ref):

    def conv_bn_relu(act, wb0_ref, wb1_ref, shift_ref):
        r = act.shape[0] - 1
        y = jnp.dot(act[:r, :].astype(jnp.bfloat16), wb0_ref[...],
                    preferred_element_type=jnp.float32)
        y = y + jnp.dot(act[1:r + 1, :].astype(jnp.bfloat16), wb1_ref[...],
                        preferred_element_type=jnp.float32)
        return jnp.maximum(y + shift_ref[...], 0.0)

    # conv stack on the (B*H, W*C) canvas (values stay in vregs/VMEM).
    act = x_ref[...]                                   # (B*8, 8)   Cin = 1
    act = conv_bn_relu(act, cb10, cb11, cs1)           # (B*8-1, 7*32)
    act = conv_bn_relu(act, cb20, cb21, cs2)           # (B*8-2, 6*32)
    act = conv_bn_relu(act, cb30, cb31, cs3)           # (B*8-3, 5*32)
    act = conv_bn_relu(act, cb40, cb41, cs4)           # (B*8-4, 4*32)

    # Flatten valid canvas rows (b, i<4) into the fc input (B, 512); fc1's
    # weight columns were permuted offline to match this (i, j, c) order.
    B = fcin_ref.shape[0]
    FW = SP_OUT * NUM_CHANNELS                         # 128
    for b in range(B):
        for i in range(SP_OUT):
            row = b * BOARD_N + i
            fcin_ref[b:b + 1, i * FW:(i + 1) * FW] = act[row:row + 1, :]

    x_fc = fcin_ref[...]                               # (B, 512) f32
    h1 = jnp.dot(x_fc.astype(jnp.bfloat16), w1_ref[...],
                 preferred_element_type=jnp.float32)
    h1 = jnp.maximum(h1 + s1_ref[...], 0.0)            # fc1 + BN + ReLU
    h2 = jnp.dot(h1.astype(jnp.bfloat16), w2_ref[...],
                 preferred_element_type=jnp.float32)
    h2 = jnp.maximum(h2 + s2_ref[...], 0.0)            # fc2 + BN + ReLU
    # Dropout is identity in eval mode.

    # Combined policy+value head: one (B, 512) @ (512, 256) matmul.
    z = jnp.dot(h2.astype(jnp.bfloat16), w34_ref[...],
                preferred_element_type=jnp.float32) + b34_ref[...]
    a = logp_ref.shape[1]
    pi = z[:, :a]
    m = jnp.max(pi, axis=-1, keepdims=True)
    logz = jnp.log(jnp.sum(jnp.exp(pi - m), axis=-1, keepdims=True)) + m
    logp_ref[...] = pi - logz
    v_ref[...] = jnp.tanh(z[:, a:a + 1])


def chess_nnet_forward(x, prep):
    """x: (B, board_n, board_n); prep: output of prepare_params."""
    B = x.shape[0]
    canvas = x.reshape(B * BOARD_N, BOARD_N).astype(jnp.float32)
    args = (canvas,) + prep["conv"] + (prep["w1"], prep["s1"], prep["w2"],
                                       prep["s2"], prep["w34"], prep["b34"])
    return pl.pallas_call(
        _fused_forward_kernel,
        out_shape=(jax.ShapeDtypeStruct((B, ACTION_SIZE), jnp.float32),
                   jax.ShapeDtypeStruct((B, 1), jnp.float32)),
        in_specs=[_VMEM] * len(args),
        out_specs=(_VMEM, _VMEM),
        scratch_shapes=[pltpu.VMEM((B, FC1_IN), jnp.float32)],
        compiler_params=pltpu.CompilerParams(vmem_limit_bytes=32 * 1024 * 1024),
    )(*args)


# ----------------------------------------------------------------------------
# Offline weight preparation (run once, outside the jitted forward).
# ----------------------------------------------------------------------------
def fold_bn(bias, gamma, beta, mean, var, eps=BN_EPS):
    scale = gamma / jnp.sqrt(var + eps)
    shift = beta + (bias - mean) * scale
    return scale, shift


def prepare_params(p):
    """Folds eval-mode BN into weights/shifts, builds banded conv matmul
    weights for the (B*H, W*C) canvas, pre-transposes/permutes fc weights,
    packs the two heads, and casts all MXU weight operands to bf16."""
    conv = []
    w_in, cin = BOARD_N, 1
    for l in range(1, 5):
        w = p[f"conv{l}_w"]                       # (Cout, Cin, k, k), torch layout
        cout = w.shape[0]
        scale, shift = fold_bn(p[f"conv{l}_b"], p[f"bn{l}_g"], p[f"bn{l}_b"],
                               p[f"bn{l}_m"], p[f"bn{l}_v"])
        w_out = w_in - KSIZE + 1
        for ki in range(KSIZE):
            # Wband[ki][(jo+kj)*Cin + ci, jo*Cout + co] = w[co,ci,ki,kj]*scale[co]
            band = jnp.zeros((w_in * cin, w_out * cout), jnp.float32)
            for kj in range(KSIZE):
                blk = (w[:, :, ki, kj] * scale[:, None]).T          # (Cin, Cout)
                for jo in range(w_out):
                    band = band.at[(jo + kj) * cin:(jo + kj + 1) * cin,
                                   jo * cout:(jo + 1) * cout].set(blk)
            conv.append(band.astype(jnp.bfloat16))
        conv.append(jnp.tile(shift, w_out).reshape(1, w_out * cout)
                    .astype(jnp.float32))
        w_in, cin = w_out, cout

    # fc1: permute input columns from torch NCHW flatten (c, i, j) to the
    # canvas flatten order (i, j, c), fold BN scale, pre-transpose.
    C, sp = NUM_CHANNELS, SP_OUT
    perm = jnp.array([c * sp * sp + i * sp + j
                      for i in range(sp) for j in range(sp) for c in range(C)],
                     dtype=jnp.int32)
    s1, sh1 = fold_bn(p["fc1_b"], p["fcbn1_g"], p["fcbn1_b"],
                      p["fcbn1_m"], p["fcbn1_v"])
    w1 = (p["fc1_w"][:, perm] * s1[:, None]).T.astype(jnp.bfloat16)   # (512, 1024)
    s2, sh2 = fold_bn(p["fc2_b"], p["fcbn2_g"], p["fcbn2_b"],
                      p["fcbn2_m"], p["fcbn2_v"])
    w2 = (p["fc2_w"] * s2[:, None]).T.astype(jnp.bfloat16)            # (1024, 512)

    # Packed heads: cols [0:A) = fc3, col A = fc4, rest zero (lane padding).
    w34 = jnp.zeros((w2.shape[1], HEAD_N), jnp.float32)
    w34 = w34.at[:, :ACTION_SIZE].set(p["fc3_w"].T)
    w34 = w34.at[:, ACTION_SIZE].set(p["fc4_w"][0])
    b34 = jnp.zeros((HEAD_N,), jnp.float32)
    b34 = b34.at[:ACTION_SIZE].set(p["fc3_b"])
    b34 = b34.at[ACTION_SIZE].set(p["fc4_b"][0])

    return {
        "conv": tuple(conv),
        "w1": w1, "s1": sh1.reshape(1, -1).astype(jnp.float32),
        "w2": w2, "s2": sh2.reshape(1, -1).astype(jnp.float32),
        "w34": w34.astype(jnp.bfloat16), "b34": b34.reshape(1, HEAD_N),
    }


# ----------------------------------------------------------------------------
# Pure-JAX reference (mirrors PyTorch eval-mode forward, f32)
# ----------------------------------------------------------------------------
def reference_forward(x, p):
    B = x.shape[0]
    h = x.reshape(B, 1, BOARD_N, BOARD_N).astype(jnp.float32)
    for i in range(1, 5):
        w = p[f"conv{i}_w"]
        h = lax.conv_general_dilated(h, w, (1, 1), "VALID",
                                     dimension_numbers=("NCHW", "OIHW", "NCHW"))
        h = h + p[f"conv{i}_b"][None, :, None, None]
        g, b_, m, v = (p[f"bn{i}_g"], p[f"bn{i}_b"], p[f"bn{i}_m"], p[f"bn{i}_v"])
        h = g[None, :, None, None] * (h - m[None, :, None, None]) / \
            jnp.sqrt(v[None, :, None, None] + BN_EPS) + b_[None, :, None, None]
        h = jnp.maximum(h, 0.0)
    flat = h.reshape(B, -1)

    def fc_bn_relu(xx, w, b, g, bb, m, v):
        y = xx @ w.T + b
        y = g * (y - m) / jnp.sqrt(v + BN_EPS) + bb
        return jnp.maximum(y, 0.0)

    h1 = fc_bn_relu(flat, p["fc1_w"], p["fc1_b"], p["fcbn1_g"], p["fcbn1_b"],
                    p["fcbn1_m"], p["fcbn1_v"])
    h2 = fc_bn_relu(h1, p["fc2_w"], p["fc2_b"], p["fcbn2_g"], p["fcbn2_b"],
                    p["fcbn2_m"], p["fcbn2_v"])
    pi = h2 @ p["fc3_w"].T + p["fc3_b"]
    logp = pi - jax.scipy.special.logsumexp(pi, axis=1, keepdims=True)
    v = jnp.tanh(h2 @ p["fc4_w"].T + p["fc4_b"])
    return logp, v


# ----------------------------------------------------------------------------
# Deterministic parameter construction (synthetic, not a checkpoint load)
# ----------------------------------------------------------------------------
def init_params(key):
    p = {}
    keys = iter(jax.random.split(key, 64))

    def w(shape, s=0.05):
        return (s * jax.random.normal(next(keys), shape)).astype(jnp.float32)

    def bn(n, prefix):
        p[f"{prefix}_g"] = (1.0 + 0.1 * jax.random.normal(next(keys), (n,))).astype(jnp.float32)
        p[f"{prefix}_b"] = w((n,), 0.1)
        p[f"{prefix}_m"] = w((n,), 0.1)
        p[f"{prefix}_v"] = jax.random.uniform(next(keys), (n,), minval=0.5,
                                              maxval=1.5).astype(jnp.float32)

    C = NUM_CHANNELS
    p["conv1_w"] = w((C, 1, KSIZE, KSIZE)); p["conv1_b"] = w((C,), 0.02)
    for i in (2, 3, 4):
        p[f"conv{i}_w"] = w((C, C, KSIZE, KSIZE)); p[f"conv{i}_b"] = w((C,), 0.02)
    for i in (1, 2, 3, 4):
        bn(C, f"bn{i}")

    p["fc1_w"] = w((1024, FC1_IN)); p["fc1_b"] = w((1024,), 0.02)
    bn(1024, "fcbn1")
    p["fc2_w"] = w((512, 1024)); p["fc2_b"] = w((512,), 0.02)
    bn(512, "fcbn2")
    p["fc3_w"] = w((ACTION_SIZE, 512)); p["fc3_b"] = w((ACTION_SIZE,), 0.02)
    p["fc4_w"] = w((1, 512)); p["fc4_b"] = w((1,), 0.02)
    return p


if __name__ == "__main__":
    key = jax.random.PRNGKey(0)
    k_x, k_p = jax.random.split(key)
    params = init_params(k_p)
    x = jax.random.normal(k_x, (2, BOARD_N, BOARD_N), dtype=jnp.float32)

    prep = prepare_params(params)          # one-time offline weight prep
    fwd = jax.jit(chess_nnet_forward)
    log_pi, v = fwd(x, prep)
    jax.block_until_ready((log_pi, v))

    ref_log_pi, ref_v = reference_forward(x, params)
    assert log_pi.shape == (2, ACTION_SIZE) and v.shape == (2, 1)
    # bf16 MXU operands (f32 accumulation) -> slightly looser tolerance vs f32 ref.
    assert jnp.allclose(log_pi, ref_log_pi, atol=2e-2, rtol=2e-2)
    assert jnp.allclose(v, ref_v, atol=2e-2, rtol=2e-2)

    print("KERNEL_OK")
</pallas_src>

<mosaic_0001>
module attributes {stable_mosaic.version = 11 : i64} {
  func.func @_fused_forward_kernel(%arg0: memref<16x8xf32, #tpu.memory_space<vmem>>, %arg1: memref<8x224xbf16, #tpu.memory_space<vmem>>, %arg2: memref<8x224xbf16, #tpu.memory_space<vmem>>, %arg3: memref<1x224xf32, #tpu.memory_space<vmem>>, %arg4: memref<224x192xbf16, #tpu.memory_space<vmem>>, %arg5: memref<224x192xbf16, #tpu.memory_space<vmem>>, %arg6: memref<1x192xf32, #tpu.memory_space<vmem>>, %arg7: memref<192x160xbf16, #tpu.memory_space<vmem>>, %arg8: memref<192x160xbf16, #tpu.memory_space<vmem>>, %arg9: memref<1x160xf32, #tpu.memory_space<vmem>>, %arg10: memref<160x128xbf16, #tpu.memory_space<vmem>>, %arg11: memref<160x128xbf16, #tpu.memory_space<vmem>>, %arg12: memref<1x128xf32, #tpu.memory_space<vmem>>, %arg13: memref<512x1024xbf16, #tpu.memory_space<vmem>>, %arg14: memref<1x1024xf32, #tpu.memory_space<vmem>>, %arg15: memref<1024x512xbf16, #tpu.memory_space<vmem>>, %arg16: memref<1x512xf32, #tpu.memory_space<vmem>>, %arg17: memref<512x256xbf16, #tpu.memory_space<vmem>>, %arg18: memref<1x256xf32, #tpu.memory_space<vmem>>, %arg19: memref<2x128xf32, #tpu.memory_space<vmem>>, %arg20: memref<2x1xf32, #tpu.memory_space<vmem>>, %arg21: memref<2x512xf32, #tpu.memory_space<vmem>>) attributes {dimension_semantics = [], scalar_prefetch = 0 : i64, scratch_operands = 1 : i64, tpu.core_type = #tpu.core_type<tc>} {
    %c0 = arith.constant 0 : index
    %c0_0 = arith.constant 0 : index
    %0 = vector.load %arg0[%c0, %c0_0] : memref<16x8xf32, #tpu.memory_space<vmem>>, vector<16x8xf32>
    %1 = vector.extract_strided_slice %0 {offsets = [0, 0], sizes = [15, 8], strides = [1, 1]} : vector<16x8xf32> to vector<15x8xf32>
    %2 = arith.truncf %1 : vector<15x8xf32> to vector<15x8xbf16>
    %c0_1 = arith.constant 0 : index
    %c0_2 = arith.constant 0 : index
    %3 = vector.load %arg1[%c0_1, %c0_2] : memref<8x224xbf16, #tpu.memory_space<vmem>>, vector<8x224xbf16>
    %cst = arith.constant dense<0.000000e+00> : vector<15x224xf32>
    %4 = tpu.matmul %2, %3, %cst {dimension_numbers = #tpu.dot_dimension_numbers<[1], [0], [0], [1], [0, 0, 1, 1], [], []>} : vector<15x8xbf16>, vector<8x224xbf16>, vector<15x224xf32> -> vector<15x224xf32>
    %5 = vector.extract_strided_slice %0 {offsets = [1, 0], sizes = [15, 8], strides = [1, 1]} : vector<16x8xf32> to vector<15x8xf32>
    %6 = arith.truncf %5 : vector<15x8xf32> to vector<15x8xbf16>
    %c0_3 = arith.constant 0 : index
    %c0_4 = arith.constant 0 : index
    %7 = vector.load %arg2[%c0_3, %c0_4] : memref<8x224xbf16, #tpu.memory_space<vmem>>, vector<8x224xbf16>
    %cst_5 = arith.constant dense<0.000000e+00> : vector<15x224xf32>
    %8 = tpu.matmul %6, %7, %cst_5 {dimension_numbers = #tpu.dot_dimension_numbers<[1], [0], [0], [1], [0, 0, 1, 1], [], []>} : vector<15x8xbf16>, vector<8x224xbf16>, vector<15x224xf32> -> vector<15x224xf32>
    %9 = arith.addf %4, %8 : vector<15x224xf32>
    %c0_6 = arith.constant 0 : index
    %c0_7 = arith.constant 0 : index
    %10 = vector.load %arg3[%c0_6, %c0_7] : memref<1x224xf32, #tpu.memory_space<vmem>>, vector<1x224xf32>
    %11 = vector.broadcast %10 : vector<1x224xf32> to vector<15x224xf32>
    %12 = arith.addf %9, %11 : vector<15x224xf32>
    %cst_8 = arith.constant 0.000000e+00 : f32
    %13 = vector.broadcast %cst_8 : f32 to vector<15x224xf32>
    %14 = arith.maximumf %12, %13 : vector<15x224xf32>
    %15 = vector.extract_strided_slice %14 {offsets = [0, 0], sizes = [14, 224], strides = [1, 1]} : vector<15x224xf32> to vector<14x224xf32>
    %16 = arith.truncf %15 : vector<14x224xf32> to vector<14x224xbf16>
    %c0_9 = arith.constant 0 : index
    %c0_10 = arith.constant 0 : index
    %17 = vector.load %arg4[%c0_9, %c0_10] : memref<224x192xbf16, #tpu.memory_space<vmem>>, vector<224x192xbf16>
    %cst_11 = arith.constant dense<0.000000e+00> : vector<14x192xf32>
    %18 = tpu.matmul %16, %17, %cst_11 {dimension_numbers = #tpu.dot_dimension_numbers<[1], [0], [0], [1], [0, 0, 1, 1], [], []>} : vector<14x224xbf16>, vector<224x192xbf16>, vector<14x192xf32> -> vector<14x192xf32>
    %19 = vector.extract_strided_slice %14 {offsets = [1, 0], sizes = [14, 224], strides = [1, 1]} : vector<15x224xf32> to vector<14x224xf32>
    %20 = arith.truncf %19 : vector<14x224xf32> to vector<14x224xbf16>
    %c0_12 = arith.constant 0 : index
    %c0_13 = arith.constant 0 : index
    %21 = vector.load %arg5[%c0_12, %c0_13] : memref<224x192xbf16, #tpu.memory_space<vmem>>, vector<224x192xbf16>
    %cst_14 = arith.constant dense<0.000000e+00> : vector<14x192xf32>
    %22 = tpu.matmul %20, %21, %cst_14 {dimension_numbers = #tpu.dot_dimension_numbers<[1], [0], [0], [1], [0, 0, 1, 1], [], []>} : vector<14x224xbf16>, vector<224x192xbf16>, vector<14x192xf32> -> vector<14x192xf32>
    %23 = arith.addf %18, %22 : vector<14x192xf32>
    %c0_15 = arith.constant 0 : index
    %c0_16 = arith.constant 0 : index
    %24 = vector.load %arg6[%c0_15, %c0_16] : memref<1x192xf32, #tpu.memory_space<vmem>>, vector<1x192xf32>
    %25 = vector.broadcast %24 : vector<1x192xf32> to vector<14x192xf32>
    %26 = arith.addf %23, %25 : vector<14x192xf32>
    %cst_17 = arith.constant 0.000000e+00 : f32
    %27 = vector.broadcast %cst_17 : f32 to vector<14x192xf32>
    %28 = arith.maximumf %26, %27 : vector<14x192xf32>
    %29 = vector.extract_strided_slice %28 {offsets = [0, 0], sizes = [13, 192], strides = [1, 1]} : vector<14x192xf32> to vector<13x192xf32>
    %30 = arith.truncf %29 : vector<13x192xf32> to vector<13x192xbf16>
    %c0_18 = arith.constant 0 : index
    %c0_19 = arith.constant 0 : index
    %31 = vector.load %arg7[%c0_18, %c0_19] : memref<192x160xbf16, #tpu.memory_space<vmem>>, vector<192x160xbf16>
    %cst_20 = arith.constant dense<0.000000e+00> : vector<13x160xf32>
    %32 = tpu.matmul %30, %31, %cst_20 {dimension_numbers = #tpu.dot_dimension_numbers<[1], [0], [0], [1], [0, 0, 1, 1], [], []>} : vector<13x192xbf16>, vector<192x160xbf16>, vector<13x160xf32> -> vector<13x160xf32>
    %33 = vector.extract_strided_slice %28 {offsets = [1, 0], sizes = [13, 192], strides = [1, 1]} : vector<14x192xf32> to vector<13x192xf32>
    %34 = arith.truncf %33 : vector<13x192xf32> to vector<13x192xbf16>
    %c0_21 = arith.constant 0 : index
    %c0_22 = arith.constant 0 : index
    %35 = vector.load %arg8[%c0_21, %c0_22] : memref<192x160xbf16, #tpu.memory_space<vmem>>, vector<192x160xbf16>
    %cst_23 = arith.constant dense<0.000000e+00> : vector<13x160xf32>
    %36 = tpu.matmul %34, %35, %cst_23 {dimension_numbers = #tpu.dot_dimension_numbers<[1], [0], [0], [1], [0, 0, 1, 1], [], []>} : vector<13x192xbf16>, vector<192x160xbf16>, vector<13x160xf32> -> vector<13x160xf32>
    %37 = arith.addf %32, %36 : vector<13x160xf32>
    %c0_24 = arith.constant 0 : index
    %c0_25 = arith.constant 0 : index
    %38 = vector.load %arg9[%c0_24, %c0_25] : memref<1x160xf32, #tpu.memory_space<vmem>>, vector<1x160xf32>
    %39 = vector.broadcast %38 : vector<1x160xf32> to vector<13x160xf32>
    %40 = arith.addf %37, %39 : vector<13x160xf32>
    %cst_26 = arith.constant 0.000000e+00 : f32
    %41 = vector.broadcast %cst_26 : f32 to vector<13x160xf32>
    %42 = arith.maximumf %40, %41 : vector<13x160xf32>
    %43 = vector.extract_strided_slice %42 {offsets = [0, 0], sizes = [12, 160], strides = [1, 1]} : vector<13x160xf32> to vector<12x160xf32>
    %44 = arith.truncf %43 : vector<12x160xf32> to vector<12x160xbf16>
    %c0_27 = arith.constant 0 : index
    %c0_28 = arith.constant 0 : index
    %45 = vector.load %arg10[%c0_27, %c0_28] : memref<160x128xbf16, #tpu.memory_space<vmem>>, vector<160x128xbf16>
    %cst_29 = arith.constant dense<0.000000e+00> : vector<12x128xf32>
    %46 = tpu.matmul %44, %45, %cst_29 {dimension_numbers = #tpu.dot_dimension_numbers<[1], [0], [0], [1], [0, 0, 1, 1], [], []>} : vector<12x160xbf16>, vector<160x128xbf16>, vector<12x128xf32> -> vector<12x128xf32>
    %47 = vector.extract_strided_slice %42 {offsets = [1, 0], sizes = [12, 160], strides = [1, 1]} : vector<13x160xf32> to vector<12x160xf32>
    %48 = arith.truncf %47 : vector<12x160xf32> to vector<12x160xbf16>
    %c0_30 = arith.constant 0 : index
    %c0_31 = arith.constant 0 : index
    %49 = vector.load %arg11[%c0_30, %c0_31] : memref<160x128xbf16, #tpu.memory_space<vmem>>, vector<160x128xbf16>
    %cst_32 = arith.constant dense<0.000000e+00> : vector<12x128xf32>
    %50 = tpu.matmul %48, %49, %cst_32 {dimension_numbers = #tpu.dot_dimension_numbers<[1], [0], [0], [1], [0, 0, 1, 1], [], []>} : vector<12x160xbf16>, vector<160x128xbf16>, vector<12x128xf32> -> vector<12x128xf32>
    %51 = arith.addf %46, %50 : vector<12x128xf32>
    %c0_33 = arith.constant 0 : index
    %c0_34 = arith.constant 0 : index
    %52 = vector.load %arg12[%c0_33, %c0_34] : memref<1x128xf32, #tpu.memory_space<vmem>>, vector<1x128xf32>
    %53 = vector.broadcast %52 : vector<1x128xf32> to vector<12x128xf32>
    %54 = arith.addf %51, %53 : vector<12x128xf32>
    %cst_35 = arith.constant 0.000000e+00 : f32
    %55 = vector.broadcast %cst_35 : f32 to vector<12x128xf32>
    %56 = arith.maximumf %54, %55 : vector<12x128xf32>
    %57 = vector.extract_strided_slice %56 {offsets = [0, 0], sizes = [1, 128], strides = [1, 1]} : vector<12x128xf32> to vector<1x128xf32>
    %c0_36 = arith.constant 0 : index
    %c0_37 = arith.constant 0 : index
    %58 = vector.load %arg21[%c0_36, %c0_37] : memref<2x512xf32, #tpu.memory_space<vmem>>, vector<1x128xf32>
    tpu.vector_store %arg21[%c0_36, %c0_37], %57 {strides = array<i32>} : memref<2x512xf32, #tpu.memory_space<vmem>>, vector<1x128xf32>,
    %59 = vector.extract_strided_slice %56 {offsets = [1, 0], sizes = [1, 128], strides = [1, 1]} : vector<12x128xf32> to vector<1x128xf32>
    %c0_38 = arith.constant 0 : index
    %c128 = arith.constant 128 : index
    %60 = vector.load %arg21[%c0_38, %c128] : memref<2x512xf32, #tpu.memory_space<vmem>>, vector<1x128xf32>
    tpu.vector_store %arg21[%c0_38, %c128], %59 {strides = array<i32>} : memref<2x512xf32, #tpu.memory_space<vmem>>, vector<1x128xf32>,
    %61 = vector.extract_strided_slice %56 {offsets = [2, 0], sizes = [1, 128], strides = [1, 1]} : vector<12x128xf32> to vector<1x128xf32>
    %c0_39 = arith.constant 0 : index
    %c256 = arith.constant 256 : index
    %62 = vector.load %arg21[%c0_39, %c256] : memref<2x512xf32, #tpu.memory_space<vmem>>, vector<1x128xf32>
    tpu.vector_store %arg21[%c0_39, %c256], %61 {strides = array<i32>} : memref<2x512xf32, #tpu.memory_space<vmem>>, vector<1x128xf32>,
    %63 = vector.extract_strided_slice %56 {offsets = [3, 0], sizes = [1, 128], strides = [1, 1]} : vector<12x128xf32> to vector<1x128xf32>
    %c0_40 = arith.constant 0 : index
    %c384 = arith.constant 384 : index
    %64 = vector.load %arg21[%c0_40, %c384] : memref<2x512xf32, #tpu.memory_space<vmem>>, vector<1x128xf32>
    tpu.vector_store %arg21[%c0_40, %c384], %63 {strides = array<i32>} : memref<2x512xf32, #tpu.memory_space<vmem>>, vector<1x128xf32>,
    %65 = vector.extract_strided_slice %56 {offsets = [8, 0], sizes = [1, 128], strides = [1, 1]} : vector<12x128xf32> to vector<1x128xf32>
    %c1 = arith.constant 1 : index
    %c0_41 = arith.constant 0 : index
    %66 = vector.load %arg21[%c1, %c0_41] : memref<2x512xf32, #tpu.memory_space<vmem>>, vector<1x128xf32>
    tpu.vector_store %arg21[%c1, %c0_41], %65 {strides = array<i32>} : memref<2x512xf32, #tpu.memory_space<vmem>>, vector<1x128xf32>,
    %67 = vector.extract_strided_slice %56 {offsets = [9, 0], sizes = [1, 128], strides = [1, 1]} : vector<12x128xf32> to vector<1x128xf32>
    %c1_42 = arith.constant 1 : index
    %c128_43 = arith.constant 128 : index
    %68 = vector.load %arg21[%c1_42, %c128_43] : memref<2x512xf32, #tpu.memory_space<vmem>>, vector<1x128xf32>
    tpu.vector_store %arg21[%c1_42, %c128_43], %67 {strides = array<i32>} : memref<2x512xf32, #tpu.memory_space<vmem>>, vector<1x128xf32>,
    %69 = vector.extract_strided_slice %56 {offsets = [10, 0], sizes = [1, 128], strides = [1, 1]} : vector<12x128xf32> to vector<1x128xf32>
    %c1_44 = arith.constant 1 : index
    %c256_45 = arith.constant 256 : index
    %70 = vector.load %arg21[%c1_44, %c256_45] : memref<2x512xf32, #tpu.memory_space<vmem>>, vector<1x128xf32>
    tpu.vector_store %arg21[%c1_44, %c256_45], %69 {strides = array<i32>} : memref<2x512xf32, #tpu.memory_space<vmem>>, vector<1x128xf32>,
    %71 = vector.extract_strided_slice %56 {offsets = [11, 0], sizes = [1, 128], strides = [1, 1]} : vector<12x128xf32> to vector<1x128xf32>
    %c1_46 = arith.constant 1 : index
    %c384_47 = arith.constant 384 : index
    %72 = vector.load %arg21[%c1_46, %c384_47] : memref<2x512xf32, #tpu.memory_space<vmem>>, vector<1x128xf32>
    tpu.vector_store %arg21[%c1_46, %c384_47], %71 {strides = array<i32>} : memref<2x512xf32, #tpu.memory_space<vmem>>, vector<1x128xf32>,
    %c0_48 = arith.constant 0 : index
    %c0_49 = arith.constant 0 : index
    %73 = vector.load %arg21[%c0_48, %c0_49] : memref<2x512xf32, #tpu.memory_space<vmem>>, vector<2x512xf32>
    %74 = arith.truncf %73 : vector<2x512xf32> to vector<2x512xbf16>
    %c0_50 = arith.constant 0 : index
    %c0_51 = arith.constant 0 : index
    %75 = vector.load %arg13[%c0_50, %c0_51] : memref<512x1024xbf16, #tpu.memory_space<vmem>>, vector<512x1024xbf16>
    %cst_52 = arith.constant dense<0.000000e+00> : vector<2x1024xf32>
    %76 = tpu.matmul %74, %75, %cst_52 {dimension_numbers = #tpu.dot_dimension_numbers<[1], [0], [0], [1], [0, 0, 1, 1], [], []>} : vector<2x512xbf16>, vector<512x1024xbf16>, vector<2x1024xf32> -> vector<2x1024xf32>
    %c0_53 = arith.constant 0 : index
    %c0_54 = arith.constant 0 : index
    %77 = vector.load %arg14[%c0_53, %c0_54] : memref<1x1024xf32, #tpu.memory_space<vmem>>, vector<1x1024xf32>
    %78 = vector.broadcast %77 : vector<1x1024xf32> to vector<2x1024xf32>
    %79 = arith.addf %76, %78 : vector<2x1024xf32>
    %cst_55 = arith.constant 0.000000e+00 : f32
    %80 = vector.broadcast %cst_55 : f32 to vector<2x1024xf32>
    %81 = arith.maximumf %79, %80 : vector<2x1024xf32>
    %82 = arith.truncf %81 : vector<2x1024xf32> to vector<2x1024xbf16>
    %c0_56 = arith.constant 0 : index
    %c0_57 = arith.constant 0 : index
    %83 = vector.load %arg15[%c0_56, %c0_57] : memref<1024x512xbf16, #tpu.memory_space<vmem>>, vector<1024x512xbf16>
    %cst_58 = arith.constant dense<0.000000e+00> : vector<2x512xf32>
    %84 = tpu.matmul %82, %83, %cst_58 {dimension_numbers = #tpu.dot_dimension_numbers<[1], [0], [0], [1], [0, 0, 1, 1], [], []>} : vector<2x1024xbf16>, vector<1024x512xbf16>, vector<2x512xf32> -> vector<2x512xf32>
    %c0_59 = arith.constant 0 : index
    %c0_60 = arith.constant 0 : index
    %85 = vector.load %arg16[%c0_59, %c0_60] : memref<1x512xf32, #tpu.memory_space<vmem>>, vector<1x512xf32>
    %86 = vector.broadcast %85 : vector<1x512xf32> to vector<2x512xf32>
    %87 = arith.addf %84, %86 : vector<2x512xf32>
    %cst_61 = arith.constant 0.000000e+00 : f32
    %88 = vector.broadcast %cst_61 : f32 to vector<2x512xf32>
    %89 = arith.maximumf %87, %88 : vector<2x512xf32>
    %90 = arith.truncf %89 : vector<2x512xf32> to vector<2x512xbf16>
    %c0_62 = arith.constant 0 : index
    %c0_63 = arith.constant 0 : index
    %91 = vector.load %arg17[%c0_62, %c0_63] : memref<512x256xbf16, #tpu.memory_space<vmem>>, vector<512x256xbf16>
    %cst_64 = arith.constant dense<0.000000e+00> : vector<2x256xf32>
    %92 = tpu.matmul %90, %91, %cst_64 {dimension_numbers = #tpu.dot_dimension_numbers<[1], [0], [0], [1], [0, 0, 1, 1], [], []>} : vector<2x512xbf16>, vector<512x256xbf16>, vector<2x256xf32> -> vector<2x256xf32>
    %c0_65 = arith.constant 0 : index
    %c0_66 = arith.constant 0 : index
    %93 = vector.load %arg18[%c0_65, %c0_66] : memref<1x256xf32, #tpu.memory_space<vmem>>, vector<1x256xf32>
    %94 = vector.broadcast %93 : vector<1x256xf32> to vector<2x256xf32>
    %95 = arith.addf %92, %94 : vector<2x256xf32>
    %96 = vector.extract_strided_slice %95 {offsets = [0, 0], sizes = [2, 128], strides = [1, 1]} : vector<2x256xf32> to vector<2x128xf32>
    %cst_67 = arith.constant dense<0xFF800000> : vector<2xf32>
    %97 = vector.multi_reduction <maximumf>, %96, %cst_67 [1] : vector<2x128xf32> to vector<2xf32>
    %98 = vector.shape_cast %97 : vector<2xf32> to vector<2x1xf32>
    %99 = vector.broadcast %98 : vector<2x1xf32> to vector<2x128xf32>
    %100 = arith.subf %96, %99 : vector<2x128xf32>
    %101 = math.exp %100 : vector<2x128xf32>
    %cst_68 = arith.constant dense<0.000000e+00> : vector<2xf32>
    %102 = vector.multi_reduction <add>, %101, %cst_68 [1] : vector<2x128xf32> to vector<2xf32>
    %103 = vector.shape_cast %102 : vector<2xf32> to vector<2x1xf32>
    %104 = math.log %103 : vector<2x1xf32>
    %105 = arith.addf %104, %98 : vector<2x1xf32>
    %106 = vector.broadcast %105 : vector<2x1xf32> to vector<2x128xf32>
    %107 = arith.subf %96, %106 : vector<2x128xf32>
    %c0_69 = arith.constant 0 : index
    %c0_70 = arith.constant 0 : index
    %108 = vector.load %arg19[%c0_69, %c0_70] : memref<2x128xf32, #tpu.memory_space<vmem>>, vector<2x128xf32>
    tpu.vector_store %arg19[%c0_69, %c0_70], %107 {strides = array<i32>} : memref<2x128xf32, #tpu.memory_space<vmem>>, vector<2x128xf32>,
    %109 = vector.extract_strided_slice %95 {offsets = [0, 128], sizes = [2, 1], strides = [1, 1]} : vector<2x256xf32> to vector<2x1xf32>
    %110 = math.tanh %109 : vector<2x1xf32>
    %c0_71 = arith.constant 0 : index
    %c0_72 = arith.constant 0 : index
    %111 = vector.load %arg20[%c0_71, %c0_72] : memref<2x1xf32, #tpu.memory_space<vmem>>, vector<2x1xf32>
    tpu.vector_store %arg20[%c0_71, %c0_72], %110 {strides = array<i32>} : memref<2x1xf32, #tpu.memory_space<vmem>>, vector<2x1xf32>,
    return
  }
}

</mosaic_0001>

<llo_original>
// kernel: chess_nnet_forward.1
$region0: #{chess_nnet_forward.1}
  #allocation0 [shape = 'u32[]', space=smem, size = 0x4, offset = 0x4, fixed_abs, tag = 'smem constant byte address 0x4 - core index']
  #allocation1 [shape = 'u32[144,128]{1,0:T(1,128)}', space=vmem, size = 0x12000, scoped, tag = 'internal scratch']
  #allocation2 [shape = 'f32[2,512]{1,0:T(2,128)}', space=vmem, size = 0x1000, scoped, tag = 'scratch operand']
  %s0 = inlined_call_operand.vmem [shape: f32[16,8], index: 0, kind: input, shape index: {}]
  %s1 = inlined_call_operand.vmem [shape: bf16[8,224], index: 1, kind: input, shape index: {}]
  %s2 = inlined_call_operand.vmem [shape: bf16[8,224], index: 2, kind: input, shape index: {}]
  %s3 = inlined_call_operand.vmem [shape: f32[1,224], index: 3, kind: input, shape index: {}]
  %s4 = inlined_call_operand.vmem [shape: bf16[224,192], index: 4, kind: input, shape index: {}]
  %s5 = inlined_call_operand.vmem [shape: bf16[224,192], index: 5, kind: input, shape index: {}]
  %s6 = inlined_call_operand.vmem [shape: f32[1,192], index: 6, kind: input, shape index: {}]
  %s7 = inlined_call_operand.vmem [shape: bf16[192,160], index: 7, kind: input, shape index: {}]
  %s8 = inlined_call_operand.vmem [shape: bf16[192,160], index: 8, kind: input, shape index: {}]
  %s9 = inlined_call_operand.vmem [shape: f32[1,160], index: 9, kind: input, shape index: {}]
  %s10 = inlined_call_operand.vmem [shape: bf16[160,128], index: 10, kind: input, shape index: {}]
  %s11 = inlined_call_operand.vmem [shape: bf16[160,128], index: 11, kind: input, shape index: {}]
  %s12 = inlined_call_operand.vmem [shape: f32[1,128], index: 12, kind: input, shape index: {}]
  %s13 = inlined_call_operand.hbm [shape: bf16[512,1024], index: 13, kind: input, shape index: {}]
  %s14 = inlined_call_operand.vmem [shape: f32[1,1024], index: 14, kind: input, shape index: {}]
  %s15 = inlined_call_operand.hbm [shape: bf16[1024,512], index: 15, kind: input, shape index: {}]
  %s16 = inlined_call_operand.vmem [shape: f32[1,512], index: 16, kind: input, shape index: {}]
  %s17 = inlined_call_operand.vmem [shape: bf16[512,256], index: 17, kind: input, shape index: {}]
  %s18 = inlined_call_operand.vmem [shape: f32[1,256], index: 18, kind: input, shape index: {}]
  %s19 = inlined_call_operand.hbm [shape: f32[2,128], index: 19, kind: output, shape index: {0}]
  %s20 = inlined_call_operand.vmem [shape: f32[2,1], index: 20, kind: output, shape index: {1}]
  %21 = xla_tuple %s19, %s20
  %s22 = sld [smem:[#allocation0]]
  $region102: #{chess_nnet_forward.1} parent=0
    _
  %s24 = ssub.s32 1, %s22
  %s25 = scalar_select 0, %s24, %s22
  $region1: #{chess_nnet_forward.1} parent=0
    #allocation3 [shape = 'u8[1048576]{0}', space=vmem, size = 0x100000, scoped, tag = 'input window, operand 13, single buffered']
    #allocation4 [shape = 's32[1]{0}', space=sflag, size = 0x4, scoped, tag = 'scoped memory for chess_nnet_forward.1']
    #allocation5 [shape = 's32[1]{0}', space=sflag, size = 0x4, scoped, tag = 'scoped memory for chess_nnet_forward.1']
    #allocation6 [shape = 'u8[1048576]{0}', space=vmem, size = 0x100000, scoped, tag = 'input window, operand 15, single buffered']
    #allocation7 [shape = 's32[1]{0}', space=sflag, size = 0x4, scoped, tag = 'scoped memory for chess_nnet_forward.1']
    #allocation8 [shape = 'u8[1024]{0}', space=vmem, size = 0x400, scoped, tag = 'output window, operand 0, single buffered']
    %26 = vsyncpa [#allocation4], 0
    %27 = vsyncpa [#allocation7], 0
    %28 = vsyncpa [#allocation5], 0
    // Predicated region
    $region2: #{chess_nnet_forward.1} parent=1 // pred_check
      _
    $region3: #{chess_nnet_forward.1} parent=1 // pred_check_branch
      %30 = sbr.rel (0) target = $region5
    $region4: #{chess_nnet_forward.1} parent=1 // pred_region
      _
    $region5: #{chess_nnet_forward.1} parent=1 // pred_fallthru
      _
    // Predicated region
    $region6: #{chess_nnet_forward.1} parent=1 // pred_check
      _
    $region7: #{chess_nnet_forward.1} parent=1 // pred_check_branch
      %32 = sbr.rel (0) target = $region9
    $region8: #{chess_nnet_forward.1} parent=1 // pred_region
      _
    $region9: #{chess_nnet_forward.1} parent=1 // pred_fallthru
      _
    // Predicated region
    $region10: #{chess_nnet_forward.1} parent=1 // pred_check
      _
    $region11: #{chess_nnet_forward.1} parent=1 // pred_check_branch
      %34 = sbr.rel (0) target = $region13
    $region12: #{chess_nnet_forward.1} parent=1 // pred_region
      _
    $region13: #{chess_nnet_forward.1} parent=1 // pred_fallthru
      _
    // Predicated region
    $region14: #{chess_nnet_forward.1} parent=1 // pred_check
      _
    $region15: #{chess_nnet_forward.1} parent=1 // pred_check_branch
      %36 = sbr.rel (0) target = $region17
    $region16: #{chess_nnet_forward.1} parent=1 // pred_region
      _
    $region17: #{chess_nnet_forward.1} parent=1 // pred_fallthru
      _
    // Predicated region
    $region18: #{chess_nnet_forward.1} parent=1 // pred_check
      _
    $region19: #{chess_nnet_forward.1} parent=1 // pred_check_branch
      %38 = sbr.rel (0) target = $region21
    $region20: #{chess_nnet_forward.1} parent=1 // pred_region
      _
    $region21: #{chess_nnet_forward.1} parent=1 // pred_fallthru
      _
    // Predicated region
    $region22: #{chess_nnet_forward.1} parent=1 // pred_check
      _
    $region23: #{chess_nnet_forward.1} parent=1 // pred_check_branch
      %40 = sbr.rel (0) target = $region25
    $region24: #{chess_nnet_forward.1} parent=1 // pred_region
      _
    $region25: #{chess_nnet_forward.1} parent=1 // pred_fallthru
      _
    // Predicated region
    $region26: #{chess_nnet_forward.1} parent=1 // pred_check
      _
    $region27: #{chess_nnet_forward.1} parent=1 // pred_check_branch
      %42 = sbr.rel (0) target = $region29
    $region28: #{chess_nnet_forward.1} parent=1 // pred_region
      _
    $region29: #{chess_nnet_forward.1} parent=1 // pred_fallthru
      _
    // Predicated region
    $region30: #{chess_nnet_forward.1} parent=1 // pred_check
      _
    $region31: #{chess_nnet_forward.1} parent=1 // pred_check_branch
      %44 = sbr.rel (0) target = $region33
    $region32: #{chess_nnet_forward.1} parent=1 // pred_region
      _
    $region33: #{chess_nnet_forward.1} parent=1 // pred_fallthru
      _
    // Predicated region
    $region34: #{chess_nnet_forward.1} parent=1 // pred_check
      _
    $region35: #{chess_nnet_forward.1} parent=1 // pred_check_branch
      %46 = sbr.rel (0) target = $region37
    $region36: #{chess_nnet_forward.1} parent=1 // pred_region
      _
    $region37: #{chess_nnet_forward.1} parent=1 // pred_fallthru
      _
    // Predicated region
    $region38: #{chess_nnet_forward.1} parent=1 // pred_check
      _
    $region39: #{chess_nnet_forward.1} parent=1 // pred_check_branch
      %48 = sbr.rel (0) target = $region41
    $region40: #{chess_nnet_forward.1} parent=1 // pred_region
      _
    $region41: #{chess_nnet_forward.1} parent=1 // pred_fallthru
      _
    // Predicated region
    $region42: #{chess_nnet_forward.1} parent=1 // pred_check
      _
    $region43: #{chess_nnet_forward.1} parent=1 // pred_check_branch
      %50 = sbr.rel (0) target = $region45
    $region44: #{chess_nnet_forward.1} parent=1 // pred_region
      _
    $region45: #{chess_nnet_forward.1} parent=1 // pred_fallthru
      _
    // Predicated region
    $region46: #{chess_nnet_forward.1} parent=1 // pred_check
      _
    $region47: #{chess_nnet_forward.1} parent=1 // pred_check_branch
      %52 = sbr.rel (0) target = $region49
    $region48: #{chess_nnet_forward.1} parent=1 // pred_region
      _
    $region49: #{chess_nnet_forward.1} parent=1 // pred_fallthru
      _
    // Predicated region
    $region50: #{chess_nnet_forward.1} parent=1 // pred_check
      _
    $region51: #{chess_nnet_forward.1} parent=1 // pred_check_branch
      %54 = sbr.rel (0) target = $region53
    $region52: #{chess_nnet_forward.1} parent=1 // pred_region
      _
    $region53: #{chess_nnet_forward.1} parent=1 // pred_fallthru
      _
    // Predicated region
    $region54: #{chess_nnet_forward.1} parent=1 // pred_check
      _
    $region55: #{chess_nnet_forward.1} parent=1 // pred_check_branch
      %56 = sbr.rel (0) target = $region57
    $region56: #{chess_nnet_forward.1} parent=1 // pred_region
      %s58 = ssub.s32 32768, 32768
      %59 = vsyncadd [#allocation4], %s58
      %s60 = sshll.u32 [#allocation3], 4
      %s61 = int_to_ptr.vmem [resolvable:$true] %s60
      %66 = dma.hbm_to_vmem [thread:$0]  %s13, 32768, %s61, [#allocation4], 512, 512, 32
    $region57: #{chess_nnet_forward.1} parent=1 // pred_fallthru
      _
    // Predicated region
    $region58: #{chess_nnet_forward.1} parent=1 // pred_check
      _
    $region59: #{chess_nnet_forward.1} parent=1 // pred_check_branch
      %68 = sbr.rel (0) target = $region61
    $region60: #{chess_nnet_forward.1} parent=1 // pred_region
      _
    $region61: #{chess_nnet_forward.1} parent=1 // pred_fallthru
      _
    // Predicated region
    $region62: #{chess_nnet_forward.1} parent=1 // pred_check
      _
    $region63: #{chess_nnet_forward.1} parent=1 // pred_check_branch
      %70 = sbr.rel (0) target = $region65
    $region64: #{chess_nnet_forward.1} parent=1 // pred_region
      %s72 = ssub.s32 32768, 32768
      %73 = vsyncadd [#allocation7], %s72
      %s74 = sshll.u32 [#allocation6], 4
      %s75 = int_to_ptr.vmem [resolvable:$true] %s74
      %80 = dma.hbm_to_vmem [thread:$0]  %s15, 32768, %s75, [#allocation7], 256, 256, 16
    $region65: #{chess_nnet_forward.1} parent=1 // pred_fallthru
      _
    // Predicated region
    $region66: #{chess_nnet_forward.1} parent=1 // pred_check
      _
    $region67: #{chess_nnet_forward.1} parent=1 // pred_check_branch
      %82 = sbr.rel (0) target = $region69
    $region68: #{chess_nnet_forward.1} parent=1 // pred_region
      _
    $region69: #{chess_nnet_forward.1} parent=1 // pred_fallthru
      _
    // Predicated region
    $region70: #{chess_nnet_forward.1} parent=1 // pred_check
      _
    $region71: #{chess_nnet_forward.1} parent=1 // pred_check_branch
      %84 = sbr.rel (0) target = $region73
    $region72: #{chess_nnet_forward.1} parent=1 // pred_region
      _
    $region73: #{chess_nnet_forward.1} parent=1 // pred_fallthru
      _
    // Predicated region
    $region74: #{chess_nnet_forward.1} parent=1 // pred_check
      _
    $region75: #{chess_nnet_forward.1} parent=1 // pred_check_branch
      %86 = sbr.rel (0) target = $region77
    $region76: #{chess_nnet_forward.1} parent=1 // pred_region
      _
    $region77: #{chess_nnet_forward.1} parent=1 // pred_fallthru
      _
    // Predicated region
    $region78: #{chess_nnet_forward.1} parent=1 // pred_check
      _
    $region79: #{chess_nnet_forward.1} parent=1 // pred_check_branch
      %88 = sbr.rel (0) target = $region81
    $region80: #{chess_nnet_forward.1} parent=1 // pred_region
      %89 = dma.done [#allocation4], 32768
    $region81: #{chess_nnet_forward.1} parent=1 // pred_fallthru
      _
    // Predicated region
    $region82: #{chess_nnet_forward.1} parent=1 // pred_check
      _
    $region83: #{chess_nnet_forward.1} parent=1 // pred_check_branch
      %91 = sbr.rel (0) target = $region85
    $region84: #{chess_nnet_forward.1} parent=1 // pred_region
      %92 = dma.done [#allocation7], 32768
    $region85: #{chess_nnet_forward.1} parent=1 // pred_fallthru
      _
    %v94 = vld [vmem:[%s0] sm:$0xff]
    %v95 = vld [vmem:[%s0 + $0x8] sm:$0xff]
    %v96 = vpack.c.bf16 %v95, %v94
    %v97 = vld [vmem:[%s1] sm:$0xff]
    %v98 = vld [vmem:[%s2] sm:$0xff]
    %v100 = vshrl.u32 %v96, 16
    %v102 = vshll.u32 %v96, 16
    %v104 = vrot.slane %v102, 1
    %v105 = vor.u32 %v100, %v104
    %v107 = vunpack.c.l.b16 %v98
    %v108 = vunpack.c.h.b16 %v98
    %v109 = vpack.c.b16 %v107, %v107
    %v110 = vpack.c.b16 %v108, %v108
    %vm111 = vcmask 64512
    %v113 = vsel %vm111, %v105, 0
    %vm115 = vcmask 1043456
    %v117 = vsel %vm115, %v109, 0
    %v120 = vsel %vm115, %v110, 0
    %122 = vmatprep.subr.bf16.mxu0 %v120
    %123 = vmatpush1.bf16.msra.mxu0 %v117
    %124 = vmatprep.subr.bf16.mxu0 0
    %125 = vmatpush1.bf16.msra.mxu0 0
    %126 = vmatprep.subr.bf16.mxu0 0
    %127 = vmatpush1.bf16.msra.mxu0 0
    %128 = vmatprep.subr.bf16.mxu0 0
    %129 = vmatpush1.bf16.msra.mxu0 0
    %130 = vmatprep.subr.bf16.mxu0 0
    %131 = vmatpush1.bf16.msra.mxu0 0
    %132 = vmatprep.subr.bf16.mxu0 0
    %133 = vmatpush1.bf16.msra.mxu0 0
    %134 = vmatprep.subr.bf16.mxu0 0
    %135 = vmatpush1.bf16.msra.mxu0 0
    %136 = vmatprep.subr.bf16.mxu0 0
    %137 = vmatpush1.bf16.msra.mxu0 0
    %138 = vmatprep.subr.bf16.mxu0 0
    %139 = vmatpush1.bf16.msra.mxu0 0
    %140 = vmatprep.subr.bf16.mxu0 0
    %141 = vmatpush1.bf16.msra.mxu0 0
    %142 = vmatprep.subr.bf16.mxu0 0
    %143 = vmatpush1.bf16.msra.mxu0 0
    %144 = vmatprep.subr.bf16.mxu0 0
    %145 = vmatpush1.bf16.msra.mxu0 0
    %146 = vmatprep.subr.bf16.mxu0 0
    %147 = vmatpush1.bf16.msra.mxu0 0
    %148 = vmatprep.subr.bf16.mxu0 0
    %149 = vmatpush1.bf16.msra.mxu0 0
    %150 = vmatprep.subr.bf16.mxu0 0
    %151 = vmatpush1.bf16.msra.mxu0 0
    %152 = vmatprep.subr.bf16.mxu0 0
    %153 = vmatpush1.bf16.msra.mxu0 0
    %154 = vmatprep.mubr.bf16.mxu0 0
    %155 = vmatmul.mubr.bf16.gmra.mrb[0].mxu0 %v113
    %v156 = vpop.f32.mrb[0].mxu0
    %v157 = vadd.f32 0.0, %v156
    %v158 = vpop.f32.mrb[0].mxu0
    %v159 = vadd.f32 0.0, %v158
    %v160 = vpop.f32.mrb[0].mxu0
    %v161 = vadd.f32 0.0, %v160
    %v162 = vpop.f32.mrb[0].mxu0
    %v163 = vadd.f32 0.0, %v162
    %164 = vdwg.mxu0
    %v166 = vunpack.c.l.b16 %v97
    %v167 = vunpack.c.h.b16 %v97
    %v168 = vpack.c.b16 %v166, %v166
    %v169 = vpack.c.b16 %v167, %v167
    %v170 = vsel %vm111, %v96, 0
    %v173 = vsel %vm115, %v168, 0
    %v176 = vsel %vm115, %v169, 0
    %178 = vmatprep.subr.bf16.mxu0 %v176
    %179 = vmatpush1.bf16.msra.mxu0 %v173
    %180 = vmatprep.subr.bf16.mxu0 0
    %181 = vmatpush1.bf16.msra.mxu0 0
    %182 = vmatprep.subr.bf16.mxu0 0
    %183 = vmatpush1.bf16.msra.mxu0 0
    %184 = vmatprep.subr.bf16.mxu0 0
    %185 = vmatpush1.bf16.msra.mxu0 0
    %186 = vmatprep.subr.bf16.mxu0 0
    %187 = vmatpush1.bf16.msra.mxu0 0
    %188 = vmatprep.subr.bf16.mxu0 0
    %189 = vmatpush1.bf16.msra.mxu0 0
    %190 = vmatprep.subr.bf16.mxu0 0
    %191 = vmatpush1.bf16.msra.mxu0 0
    %192 = vmatprep.subr.bf16.mxu0 0
    %193 = vmatpush1.bf16.msra.mxu0 0
    %194 = vmatprep.subr.bf16.mxu0 0
    %195 = vmatpush1.bf16.msra.mxu0 0
    %196 = vmatprep.subr.bf16.mxu0 0
    %197 = vmatpush1.bf16.msra.mxu0 0
    %198 = vmatprep.subr.bf16.mxu0 0
    %199 = vmatpush1.bf16.msra.mxu0 0
    %200 = vmatprep.subr.bf16.mxu0 0
    %201 = vmatpush1.bf16.msra.mxu0 0
    %202 = vmatprep.subr.bf16.mxu0 0
    %203 = vmatpush1.bf16.msra.mxu0 0
    %204 = vmatprep.subr.bf16.mxu0 0
    %205 = vmatpush1.bf16.msra.mxu0 0
    %206 = vmatprep.subr.bf16.mxu0 0
    %207 = vmatpush1.bf16.msra.mxu0 0
    %208 = vmatprep.subr.bf16.mxu0 0
    %209 = vmatpush1.bf16.msra.mxu0 0
    %210 = vmatprep.mubr.bf16.mxu0 0
    %211 = vmatmul.mubr.bf16.gmra.mrb[0].mxu0 %v170
    %v212 = vpop.f32.mrb[0].mxu0
    %v213 = vadd.f32 %v157, %v212
    %v214 = vpop.f32.mrb[0].mxu0
    %v215 = vadd.f32 %v159, %v214
    %v216 = vpop.f32.mrb[0].mxu0
    %v217 = vadd.f32 %v161, %v216
    %v218 = vpop.f32.mrb[0].mxu0
    %v219 = vadd.f32 %v163, %v218
    %220 = vdwg.mxu0
    %v221 = vld [vmem:[%s3] sm:$0x3]
    %v223 = vlaneseq
    %v224 = vshrl.u32 %v223, 7
    %v225 = vsub.s32 0, %v224
    %v226 = vrot.slane %v221, %v225
    %v227 = vlaneseq
    %v228 = vshrl.u32 %v227, 7
    %v229 = vsub.s32 1, %v228
    %v230 = vrot.slane %v221, %v229
    %v233 = vadd.f32 %v213, %v226
    %v234 = vadd.f32 %v215, %v230
    %v235 = vadd.f32 %v217, %v226
    %v236 = vadd.f32 %v219, %v230
    %v237 = vmax.f32 %v233, 0.0
    %v238 = vmax.f32 %v234, 0.0
    %v239 = vmax.f32 %v235, 0.0
    %v240 = vmax.f32 %v236, 0.0
    %v241 = vpack.c.bf16 %v239, %v237
    %v242 = vpack.c.bf16 %v240, %v238
    %v243 = vld [vmem:[%s4] sm:$0xff]
    %v244 = vld [vmem:[%s4 + $0x8] sm:$0xff]
    %v245 = vld [vmem:[%s4 + $0x10] sm:$0xff]
    %v246 = vld [vmem:[%s4 + $0x18] sm:$0xff]
    %v247 = vld [vmem:[%s4 + $0x20] sm:$0xff]
    %v248 = vld [vmem:[%s4 + $0x28] sm:$0xff]
    %v249 = vld [vmem:[%s4 + $0x30] sm:$0xff]
    %v250 = vld [vmem:[%s4 + $0x38] sm:$0xff]
    %v251 = vld [vmem:[%s4 + $0x40] sm:$0xff]
    %v252 = vld [vmem:[%s4 + $0x48] sm:$0xff]
    %v253 = vld [vmem:[%s4 + $0x50] sm:$0xff]
    %v254 = vld [vmem:[%s4 + $0x58] sm:$0xff]
    %v255 = vld [vmem:[%s4 + $0x60] sm:$0xff]
    %v256 = vld [vmem:[%s4 + $0x68] sm:$0xff]
    %v257 = vld [vmem:[%s4 + $0x70] sm:$0xff]
    %v258 = vld [vmem:[%s4 + $0x78] sm:$0xff]
    %v259 = vld [vmem:[%s4 + $0x80] sm:$0xff]
    %v260 = vld [vmem:[%s4 + $0x88] sm:$0xff]
    %v261 = vld [vmem:[%s4 + $0x90] sm:$0xff]
    %v262 = vld [vmem:[%s4 + $0x98] sm:$0xff]
    %v263 = vld [vmem:[%s4 + $0xa0] sm:$0xff]
    %v264 = vld [vmem:[%s4 + $0xa8] sm:$0xff]
    %v265 = vld [vmem:[%s4 + $0xb0] sm:$0xff]
    %v266 = vld [vmem:[%s4 + $0xb8] sm:$0xff]
    %v267 = vld [vmem:[%s4 + $0xc0] sm:$0xff]
    %v268 = vld [vmem:[%s4 + $0xc8] sm:$0xff]
    %v269 = vld [vmem:[%s4 + $0xd0] sm:$0xff]
    %v270 = vld [vmem:[%s4 + $0xd8] sm:$0xff]
    %v271 = vld [vmem:[%s5] sm:$0xff]
    %v272 = vld [vmem:[%s5 + $0x8] sm:$0xff]
    %v273 = vld [vmem:[%s5 + $0x10] sm:$0xff]
    %v274 = vld [vmem:[%s5 + $0x18] sm:$0xff]
    %v275 = vld [vmem:[%s5 + $0x20] sm:$0xff]
    %v276 = vld [vmem:[%s5 + $0x28] sm:$0xff]
    %v277 = vld [vmem:[%s5 + $0x30] sm:$0xff]
    %v278 = vld [vmem:[%s5 + $0x38] sm:$0xff]
    %v279 = vld [vmem:[%s5 + $0x40] sm:$0xff]
    %v280 = vld [vmem:[%s5 + $0x48] sm:$0xff]
    %v281 = vld [vmem:[%s5 + $0x50] sm:$0xff]
    %v282 = vld [vmem:[%s5 + $0x58] sm:$0xff]
    %v283 = vld [vmem:[%s5 + $0x60] sm:$0xff]
    %v284 = vld [vmem:[%s5 + $0x68] sm:$0xff]
    %v285 = vld [vmem:[%s5 + $0x70] sm:$0xff]
    %v286 = vld [vmem:[%s5 + $0x78] sm:$0xff]
    %v287 = vld [vmem:[%s5 + $0x80] sm:$0xff]
    %v288 = vld [vmem:[%s5 + $0x88] sm:$0xff]
    %v289 = vld [vmem:[%s5 + $0x90] sm:$0xff]
    %v290 = vld [vmem:[%s5 + $0x98] sm:$0xff]
    %v291 = vld [vmem:[%s5 + $0xa0] sm:$0xff]
    %v292 = vld [vmem:[%s5 + $0xa8] sm:$0xff]
    %v293 = vld [vmem:[%s5 + $0xb0] sm:$0xff]
    %v294 = vld [vmem:[%s5 + $0xb8] sm:$0xff]
    %v295 = vld [vmem:[%s5 + $0xc0] sm:$0xff]
    %v296 = vld [vmem:[%s5 + $0xc8] sm:$0xff]
    %v297 = vld [vmem:[%s5 + $0xd0] sm:$0xff]
    %v298 = vld [vmem:[%s5 + $0xd8] sm:$0xff]
    %v300 = vshrl.u32 %v241, 16
    %v302 = vshll.u32 %v241, 16
    %v304 = vrot.slane %v302, 1
    %v305 = vor.u32 %v300, %v304
    %v307 = vshrl.u32 %v242, 16
    %v309 = vshll.u32 %v242, 16
    %v311 = vrot.slane %v309, 1
    %v312 = vor.u32 %v307, %v311
    %v342 = vunpack.c.l.b16 %v271
    %v343 = vunpack.c.h.b16 %v271
    %v344 = vunpack.c.l.b16 %v272
    %v345 = vunpack.c.h.b16 %v272
    %v346 = vunpack.c.l.b16 %v273
    %v347 = vunpack.c.h.b16 %v273
    %v348 = vunpack.c.l.b16 %v274
    %v349 = vunpack.c.h.b16 %v274
    %v350 = vunpack.c.l.b16 %v275
    %v351 = vunpack.c.h.b16 %v275
    %v352 = vunpack.c.l.b16 %v276
    %v353 = vunpack.c.h.b16 %v276
    %v354 = vunpack.c.l.b16 %v277
    %v355 = vunpack.c.h.b16 %v277
    %v356 = vunpack.c.l.b16 %v278
    %v357 = vunpack.c.h.b16 %v278
    %v358 = vunpack.c.l.b16 %v279
    %v359 = vunpack.c.h.b16 %v279
    %v360 = vunpack.c.l.b16 %v280
    %v361 = vunpack.c.h.b16 %v280
    %v362 = vunpack.c.l.b16 %v281
    %v363 = vunpack.c.h.b16 %v281
    %v364 = vunpack.c.l.b16 %v282
    %v365 = vunpack.c.h.b16 %v282
    %v366 = vunpack.c.l.b16 %v283
    %v367 = vunpack.c.h.b16 %v283
    %v368 = vunpack.c.l.b16 %v284
    %v369 = vunpack.c.h.b16 %v284
    %v370 = vunpack.c.l.b16 %v285
    %v371 = vunpack.c.h.b16 %v285
    %v372 = vunpack.c.l.b16 %v286
    %v373 = vunpack.c.h.b16 %v286
    %v374 = vunpack.c.l.b16 %v287
    %v375 = vunpack.c.h.b16 %v287
    %v376 = vunpack.c.l.b16 %v288
    %v377 = vunpack.c.h.b16 %v288
    %v378 = vunpack.c.l.b16 %v289
    %v379 = vunpack.c.h.b16 %v289
    %v380 = vunpack.c.l.b16 %v290
    %v381 = vunpack.c.h.b16 %v290
    %v382 = vunpack.c.l.b16 %v291
    %v383 = vunpack.c.h.b16 %v291
    %v384 = vunpack.c.l.b16 %v292
    %v385 = vunpack.c.h.b16 %v292
    %v386 = vunpack.c.l.b16 %v293
    %v387 = vunpack.c.h.b16 %v293
    %v388 = vunpack.c.l.b16 %v294
    %v389 = vunpack.c.h.b16 %v294
    %v390 = vunpack.c.l.b16 %v295
    %v391 = vunpack.c.h.b16 %v295
    %v392 = vunpack.c.l.b16 %v296
    %v393 = vunpack.c.h.b16 %v296
    %v394 = vunpack.c.l.b16 %v297
    %v395 = vunpack.c.h.b16 %v297
    %v396 = vunpack.c.l.b16 %v298
    %v397 = vunpack.c.h.b16 %v298
    %v398 = vpack.c.b16 %v344, %v342
    %v399 = vpack.c.b16 %v345, %v343
    %v400 = vpack.c.b16 %v348, %v346
    %v401 = vpack.c.b16 %v349, %v347
    %v402 = vpack.c.b16 %v352, %v350
    %v403 = vpack.c.b16 %v353, %v351
    %v404 = vpack.c.b16 %v356, %v354
    %v405 = vpack.c.b16 %v357, %v355
    %v406 = vpack.c.b16 %v360, %v358
    %v407 = vpack.c.b16 %v361, %v359
    %v408 = vpack.c.b16 %v364, %v362
    %v409 = vpack.c.b16 %v365, %v363
    %v410 = vpack.c.b16 %v368, %v366
    %v411 = vpack.c.b16 %v369, %v367
    %v412 = vpack.c.b16 %v372, %v370
    %v413 = vpack.c.b16 %v373, %v371
    %v414 = vpack.c.b16 %v376, %v374
    %v415 = vpack.c.b16 %v377, %v375
    %v416 = vpack.c.b16 %v380, %v378
    %v417 = vpack.c.b16 %v381, %v379
    %v418 = vpack.c.b16 %v384, %v382
    %v419 = vpack.c.b16 %v385, %v383
    %v420 = vpack.c.b16 %v388, %v386
    %v421 = vpack.c.b16 %v389, %v387
    %v422 = vpack.c.b16 %v392, %v390
    %v423 = vpack.c.b16 %v393, %v391
    %v424 = vpack.c.b16 %v396, %v394
    %v425 = vpack.c.b16 %v397, %v395
    %vm454 = vcmask 785408
    %v456 = vsel %vm454, %v312, 0
    %458 = vmatprep.subr.bf16.mxu0 %v399
    %459 = vmatpush1.bf16.msra.mxu0 %v398
    %460 = vmatprep.subr.bf16.mxu0 %v401
    %461 = vmatpush1.bf16.msra.mxu0 %v400
    %462 = vmatprep.subr.bf16.mxu0 %v403
    %463 = vmatpush1.bf16.msra.mxu0 %v402
    %464 = vmatprep.subr.bf16.mxu0 %v405
    %465 = vmatpush1.bf16.msra.mxu0 %v404
    %466 = vmatprep.subr.bf16.mxu0 %v407
    %467 = vmatpush1.bf16.msra.mxu0 %v406
    %468 = vmatprep.subr.bf16.mxu0 %v409
    %469 = vmatpush1.bf16.msra.mxu0 %v408
    %470 = vmatprep.subr.bf16.mxu0 %v411
    %471 = vmatpush1.bf16.msra.mxu0 %v410
    %472 = vmatprep.subr.bf16.mxu0 %v413
    %473 = vmatpush1.bf16.msra.mxu0 %v412
    %474 = vmatprep.subr.bf16.mxu0 %v415
    %475 = vmatpush1.bf16.msra.mxu0 %v414
    %476 = vmatprep.subr.bf16.mxu0 %v417
    %477 = vmatpush1.bf16.msra.mxu0 %v416
    %478 = vmatprep.subr.bf16.mxu0 %v419
    %479 = vmatpush1.bf16.msra.mxu0 %v418
    %480 = vmatprep.subr.bf16.mxu0 %v421
    %481 = vmatpush1.bf16.msra.mxu0 %v420
    %482 = vmatprep.subr.bf16.mxu0 %v423
    %483 = vmatpush1.bf16.msra.mxu0 %v422
    %484 = vmatprep.subr.bf16.mxu0 %v425
    %485 = vmatpush1.bf16.msra.mxu0 %v424
    %486 = vmatprep.subr.bf16.mxu0 0
    %487 = vmatpush1.bf16.msra.mxu0 0
    %488 = vmatprep.subr.bf16.mxu0 0
    %489 = vmatpush1.bf16.msra.mxu0 0
    %490 = vmatprep.mubr.bf16.mxu0 %v456
    %491 = vmatmul.mubr.bf16.gmra.mrb[0].mxu0 %v305
    %v492 = vpop.f32.mrb[0].mxu0
    %v493 = vadd.f32 0.0, %v492
    %v494 = vpop.f32.mrb[0].mxu0
    %v495 = vadd.f32 0.0, %v494
    %v496 = vpop.f32.mrb[0].mxu0
    %v497 = vadd.f32 0.0, %v496
    %v498 = vpop.f32.mrb[0].mxu0
    %v499 = vadd.f32 0.0, %v498
    %500 = vdwg.mxu0
    %v529 = vunpack.c.l.b16 %v243
    %v530 = vunpack.c.h.b16 %v243
    %v531 = vunpack.c.l.b16 %v244
    %v532 = vunpack.c.h.b16 %v244
    %v533 = vunpack.c.l.b16 %v245
    %v534 = vunpack.c.h.b16 %v245
    %v535 = vunpack.c.l.b16 %v246
    %v536 = vunpack.c.h.b16 %v246
    %v537 = vunpack.c.l.b16 %v247
    %v538 = vunpack.c.h.b16 %v247
    %v539 = vunpack.c.l.b16 %v248
    %v540 = vunpack.c.h.b16 %v248
    %v541 = vunpack.c.l.b16 %v249
    %v542 = vunpack.c.h.b16 %v249
    %v543 = vunpack.c.l.b16 %v250
    %v544 = vunpack.c.h.b16 %v250
    %v545 = vunpack.c.l.b16 %v251
    %v546 = vunpack.c.h.b16 %v251
    %v547 = vunpack.c.l.b16 %v252
    %v548 = vunpack.c.h.b16 %v252
    %v549 = vunpack.c.l.b16 %v253
    %v550 = vunpack.c.h.b16 %v253
    %v551 = vunpack.c.l.b16 %v254
    %v552 = vunpack.c.h.b16 %v254
    %v553 = vunpack.c.l.b16 %v255
    %v554 = vunpack.c.h.b16 %v255
    %v555 = vunpack.c.l.b16 %v256
    %v556 = vunpack.c.h.b16 %v256
    %v557 = vunpack.c.l.b16 %v257
    %v558 = vunpack.c.h.b16 %v257
    %v559 = vunpack.c.l.b16 %v258
    %v560 = vunpack.c.h.b16 %v258
    %v561 = vunpack.c.l.b16 %v259
    %v562 = vunpack.c.h.b16 %v259
    %v563 = vunpack.c.l.b16 %v260
    %v564 = vunpack.c.h.b16 %v260
    %v565 = vunpack.c.l.b16 %v261
    %v566 = vunpack.c.h.b16 %v261
    %v567 = vunpack.c.l.b16 %v262
    %v568 = vunpack.c.h.b16 %v262
    %v569 = vunpack.c.l.b16 %v263
    %v570 = vunpack.c.h.b16 %v263
    %v571 = vunpack.c.l.b16 %v264
    %v572 = vunpack.c.h.b16 %v264
    %v573 = vunpack.c.l.b16 %v265
    %v574 = vunpack.c.h.b16 %v265
    %v575 = vunpack.c.l.b16 %v266
    %v576 = vunpack.c.h.b16 %v266
    %v577 = vunpack.c.l.b16 %v267
    %v578 = vunpack.c.h.b16 %v267
    %v579 = vunpack.c.l.b16 %v268
    %v580 = vunpack.c.h.b16 %v268
    %v581 = vunpack.c.l.b16 %v269
    %v582 = vunpack.c.h.b16 %v269
    %v583 = vunpack.c.l.b16 %v270
    %v584 = vunpack.c.h.b16 %v270
    %v585 = vpack.c.b16 %v531, %v529
    %v586 = vpack.c.b16 %v532, %v530
    %v587 = vpack.c.b16 %v535, %v533
    %v588 = vpack.c.b16 %v536, %v534
    %v589 = vpack.c.b16 %v539, %v537
    %v590 = vpack.c.b16 %v540, %v538
    %v591 = vpack.c.b16 %v543, %v541
    %v592 = vpack.c.b16 %v544, %v542
    %v593 = vpack.c.b16 %v547, %v545
    %v594 = vpack.c.b16 %v548, %v546
    %v595 = vpack.c.b16 %v551, %v549
    %v596 = vpack.c.b16 %v552, %v550
    %v597 = vpack.c.b16 %v555, %v553
    %v598 = vpack.c.b16 %v556, %v554
    %v599 = vpack.c.b16 %v559, %v557
    %v600 = vpack.c.b16 %v560, %v558
    %v601 = vpack.c.b16 %v563, %v561
    %v602 = vpack.c.b16 %v564, %v562
    %v603 = vpack.c.b16 %v567, %v565
    %v604 = vpack.c.b16 %v568, %v566
    %v605 = vpack.c.b16 %v571, %v569
    %v606 = vpack.c.b16 %v572, %v570
    %v607 = vpack.c.b16 %v575, %v573
    %v608 = vpack.c.b16 %v576, %v574
    %v609 = vpack.c.b16 %v579, %v577
    %v610 = vpack.c.b16 %v580, %v578
    %v611 = vpack.c.b16 %v583, %v581
    %v612 = vpack.c.b16 %v584, %v582
    %v641 = vsel %vm454, %v242, 0
    %643 = vmatprep.subr.bf16.mxu0 %v586
    %644 = vmatpush1.bf16.msra.mxu0 %v585
    %645 = vmatprep.subr.bf16.mxu0 %v588
    %646 = vmatpush1.bf16.msra.mxu0 %v587
    %647 = vmatprep.subr.bf16.mxu0 %v590
    %648 = vmatpush1.bf16.msra.mxu0 %v589
    %649 = vmatprep.subr.bf16.mxu0 %v592
    %650 = vmatpush1.bf16.msra.mxu0 %v591
    %651 = vmatprep.subr.bf16.mxu0 %v594
    %652 = vmatpush1.bf16.msra.mxu0 %v593
    %653 = vmatprep.subr.bf16.mxu0 %v596
    %654 = vmatpush1.bf16.msra.mxu0 %v595
    %655 = vmatprep.subr.bf16.mxu0 %v598
    %656 = vmatpush1.bf16.msra.mxu0 %v597
    %657 = vmatprep.subr.bf16.mxu0 %v600
    %658 = vmatpush1.bf16.msra.mxu0 %v599
    %659 = vmatprep.subr.bf16.mxu0 %v602
    %660 = vmatpush1.bf16.msra.mxu0 %v601
    %661 = vmatprep.subr.bf16.mxu0 %v604
    %662 = vmatpush1.bf16.msra.mxu0 %v603
    %663 = vmatprep.subr.bf16.mxu0 %v606
    %664 = vmatpush1.bf16.msra.mxu0 %v605
    %665 = vmatprep.subr.bf16.mxu0 %v608
    %666 = vmatpush1.bf16.msra.mxu0 %v607
    %667 = vmatprep.subr.bf16.mxu0 %v610
    %668 = vmatpush1.bf16.msra.mxu0 %v609
    %669 = vmatprep.subr.bf16.mxu0 %v612
    %670 = vmatpush1.bf16.msra.mxu0 %v611
    %671 = vmatprep.subr.bf16.mxu0 0
    %672 = vmatpush1.bf16.msra.mxu0 0
    %673 = vmatprep.subr.bf16.mxu0 0
    %674 = vmatpush1.bf16.msra.mxu0 0
    %675 = vmatprep.mubr.bf16.mxu0 %v641
    %676 = vmatmul.mubr.bf16.gmra.mrb[0].mxu0 %v241
    %v677 = vpop.f32.mrb[0].mxu0
    %v678 = vadd.f32 %v493, %v677
    %v679 = vpop.f32.mrb[0].mxu0
    %v680 = vadd.f32 %v495, %v679
    %v681 = vpop.f32.mrb[0].mxu0
    %v682 = vadd.f32 %v497, %v681
    %v683 = vpop.f32.mrb[0].mxu0
    %v684 = vadd.f32 %v499, %v683
    %685 = vdwg.mxu0
    %v686 = vld [vmem:[%s6] sm:$0x3]
    %v688 = vlaneseq
    %v689 = vshrl.u32 %v688, 7
    %v690 = vsub.s32 0, %v689
    %v691 = vrot.slane %v686, %v690
    %v692 = vlaneseq
    %v693 = vshrl.u32 %v692, 7
    %v694 = vsub.s32 1, %v693
    %v695 = vrot.slane %v686, %v694
    %v698 = vadd.f32 %v678, %v691
    %v699 = vadd.f32 %v680, %v695
    %v700 = vadd.f32 %v682, %v691
    %v701 = vadd.f32 %v684, %v695
    %v702 = vmax.f32 %v698, 0.0
    %v703 = vmax.f32 %v699, 0.0
    %v704 = vmax.f32 %v700, 0.0
    %v705 = vmax.f32 %v701, 0.0
    %v706 = vpack.c.bf16 %v704, %v702
    %v707 = vpack.c.bf16 %v705, %v703
    %v708 = vld [vmem:[%s7] sm:$0xff]
    %v709 = vld [vmem:[%s7 + $0x8] sm:$0xff]
    %v710 = vld [vmem:[%s7 + $0x10] sm:$0xff]
    %v711 = vld [vmem:[%s7 + $0x18] sm:$0xff]
    %v712 = vld [vmem:[%s7 + $0x20] sm:$0xff]
    %v713 = vld [vmem:[%s7 + $0x28] sm:$0xff]
    %v714 = vld [vmem:[%s7 + $0x30] sm:$0xff]
    %v715 = vld [vmem:[%s7 + $0x38] sm:$0xff]
    %v716 = vld [vmem:[%s7 + $0x40] sm:$0xff]
    %v717 = vld [vmem:[%s7 + $0x48] sm:$0xff]
    %v718 = vld [vmem:[%s7 + $0x50] sm:$0xff]
    %v719 = vld [vmem:[%s7 + $0x58] sm:$0xff]
    %v720 = vld [vmem:[%s7 + $0x60] sm:$0xff]
    %v721 = vld [vmem:[%s7 + $0x68] sm:$0xff]
    %v722 = vld [vmem:[%s7 + $0x70] sm:$0xff]
    %v723 = vld [vmem:[%s7 + $0x78] sm:$0xff]
    %v724 = vld [vmem:[%s7 + $0x80] sm:$0xff]
    %v725 = vld [vmem:[%s7 + $0x88] sm:$0xff]
    %v726 = vld [vmem:[%s7 + $0x90] sm:$0xff]
    %v727 = vld [vmem:[%s7 + $0x98] sm:$0xff]
    %v728 = vld [vmem:[%s7 + $0xa0] sm:$0xff]
    %v729 = vld [vmem:[%s7 + $0xa8] sm:$0xff]
    %v730 = vld [vmem:[%s7 + $0xb0] sm:$0xff]
    %v731 = vld [vmem:[%s7 + $0xb8] sm:$0xff]
    %v732 = vld [vmem:[%s8] sm:$0xff]
    %v733 = vld [vmem:[%s8 + $0x8] sm:$0xff]
    %v734 = vld [vmem:[%s8 + $0x10] sm:$0xff]
    %v735 = vld [vmem:[%s8 + $0x18] sm:$0xff]
    %v736 = vld [vmem:[%s8 + $0x20] sm:$0xff]
    %v737 = vld [vmem:[%s8 + $0x28] sm:$0xff]
    %v738 = vld [vmem:[%s8 + $0x30] sm:$0xff]
    %v739 = vld [vmem:[%s8 + $0x38] sm:$0xff]
    %v740 = vld [vmem:[%s8 + $0x40] sm:$0xff]
    %v741 = vld [vmem:[%s8 + $0x48] sm:$0xff]
    %v742 = vld [vmem:[%s8 + $0x50] sm:$0xff]
    %v743 = vld [vmem:[%s8 + $0x58] sm:$0xff]
    %v744 = vld [vmem:[%s8 + $0x60] sm:$0xff]
    %v745 = vld [vmem:[%s8 + $0x68] sm:$0xff]
    %v746 = vld [vmem:[%s8 + $0x70] sm:$0xff]
    %v747 = vld [vmem:[%s8 + $0x78] sm:$0xff]
    %v748 = vld [vmem:[%s8 + $0x80] sm:$0xff]
    %v749 = vld [vmem:[%s8 + $0x88] sm:$0xff]
    %v750 = vld [vmem:[%s8 + $0x90] sm:$0xff]
    %v751 = vld [vmem:[%s8 + $0x98] sm:$0xff]
    %v752 = vld [vmem:[%s8 + $0xa0] sm:$0xff]
    %v753 = vld [vmem:[%s8 + $0xa8] sm:$0xff]
    %v754 = vld [vmem:[%s8 + $0xb0] sm:$0xff]
    %v755 = vld [vmem:[%s8 + $0xb8] sm:$0xff]
    %v757 = vshrl.u32 %v706, 16
    %v759 = vshll.u32 %v706, 16
    %v761 = vrot.slane %v759, 1
    %v762 = vor.u32 %v757, %v761
    %v764 = vshrl.u32 %v707, 16
    %v766 = vshll.u32 %v707, 16
    %v768 = vrot.slane %v766, 1
    %v769 = vor.u32 %v764, %v768
    %v795 = vunpack.c.l.b16 %v732
    %v796 = vunpack.c.h.b16 %v732
    %v797 = vunpack.c.l.b16 %v733
    %v798 = vunpack.c.h.b16 %v733
    %v799 = vunpack.c.l.b16 %v734
    %v800 = vunpack.c.h.b16 %v734
    %v801 = vunpack.c.l.b16 %v735
    %v802 = vunpack.c.h.b16 %v735
    %v803 = vunpack.c.l.b16 %v736
    %v804 = vunpack.c.h.b16 %v736
    %v805 = vunpack.c.l.b16 %v737
    %v806 = vunpack.c.h.b16 %v737
    %v807 = vunpack.c.l.b16 %v738
    %v808 = vunpack.c.h.b16 %v738
    %v809 = vunpack.c.l.b16 %v739
    %v810 = vunpack.c.h.b16 %v739
    %v811 = vunpack.c.l.b16 %v740
    %v812 = vunpack.c.h.b16 %v740
    %v813 = vunpack.c.l.b16 %v741
    %v814 = vunpack.c.h.b16 %v741
    %v815 = vunpack.c.l.b16 %v742
    %v816 = vunpack.c.h.b16 %v742
    %v817 = vunpack.c.l.b16 %v743
    %v818 = vunpack.c.h.b16 %v743
    %v819 = vunpack.c.l.b16 %v744
    %v820 = vunpack.c.h.b16 %v744
    %v821 = vunpack.c.l.b16 %v745
    %v822 = vunpack.c.h.b16 %v745
    %v823 = vunpack.c.l.b16 %v746
    %v824 = vunpack.c.h.b16 %v746
    %v825 = vunpack.c.l.b16 %v747
    %v826 = vunpack.c.h.b16 %v747
    %v827 = vunpack.c.l.b16 %v748
    %v828 = vunpack.c.h.b16 %v748
    %v829 = vunpack.c.l.b16 %v749
    %v830 = vunpack.c.h.b16 %v749
    %v831 = vunpack.c.l.b16 %v750
    %v832 = vunpack.c.h.b16 %v750
    %v833 = vunpack.c.l.b16 %v751
    %v834 = vunpack.c.h.b16 %v751
    %v835 = vunpack.c.l.b16 %v752
    %v836 = vunpack.c.h.b16 %v752
    %v837 = vunpack.c.l.b16 %v753
    %v838 = vunpack.c.h.b16 %v753
    %v839 = vunpack.c.l.b16 %v754
    %v840 = vunpack.c.h.b16 %v754
    %v841 = vunpack.c.l.b16 %v755
    %v842 = vunpack.c.h.b16 %v755
    %v843 = vpack.c.b16 %v797, %v795
    %v844 = vpack.c.b16 %v798, %v796
    %v845 = vpack.c.b16 %v801, %v799
    %v846 = vpack.c.b16 %v802, %v800
    %v847 = vpack.c.b16 %v805, %v803
    %v848 = vpack.c.b16 %v806, %v804
    %v849 = vpack.c.b16 %v809, %v807
    %v850 = vpack.c.b16 %v810, %v808
    %v851 = vpack.c.b16 %v813, %v811
    %v852 = vpack.c.b16 %v814, %v812
    %v853 = vpack.c.b16 %v817, %v815
    %v854 = vpack.c.b16 %v818, %v816
    %v855 = vpack.c.b16 %v821, %v819
    %v856 = vpack.c.b16 %v822, %v820
    %v857 = vpack.c.b16 %v825, %v823
    %v858 = vpack.c.b16 %v826, %v824
    %v859 = vpack.c.b16 %v829, %v827
    %v860 = vpack.c.b16 %v830, %v828
    %v861 = vpack.c.b16 %v833, %v831
    %v862 = vpack.c.b16 %v834, %v832
    %v863 = vpack.c.b16 %v837, %v835
    %v864 = vpack.c.b16 %v838, %v836
    %v865 = vpack.c.b16 %v841, %v839
    %v866 = vpack.c.b16 %v842, %v840
    %vm891 = vcmask 523264
    %v893 = vsel %vm891, %v769, 0
    %895 = vmatprep.subr.bf16.mxu0 %v844
    %896 = vmatpush1.bf16.msra.mxu0 %v843
    %897 = vmatprep.subr.bf16.mxu0 %v846
    %898 = vmatpush1.bf16.msra.mxu0 %v845
    %899 = vmatprep.subr.bf16.mxu0 %v848
    %900 = vmatpush1.bf16.msra.mxu0 %v847
    %901 = vmatprep.subr.bf16.mxu0 %v850
    %902 = vmatpush1.bf16.msra.mxu0 %v849
    %903 = vmatprep.subr.bf16.mxu0 %v852
    %904 = vmatpush1.bf16.msra.mxu0 %v851
    %905 = vmatprep.subr.bf16.mxu0 %v854
    %906 = vmatpush1.bf16.msra.mxu0 %v853
    %907 = vmatprep.subr.bf16.mxu0 %v856
    %908 = vmatpush1.bf16.msra.mxu0 %v855
    %909 = vmatprep.subr.bf16.mxu0 %v858
    %910 = vmatpush1.bf16.msra.mxu0 %v857
    %911 = vmatprep.subr.bf16.mxu0 %v860
    %912 = vmatpush1.bf16.msra.mxu0 %v859
    %913 = vmatprep.subr.bf16.mxu0 %v862
    %914 = vmatpush1.bf16.msra.mxu0 %v861
    %915 = vmatprep.subr.bf16.mxu0 %v864
    %916 = vmatpush1.bf16.msra.mxu0 %v863
    %917 = vmatprep.subr.bf16.mxu0 %v866
    %918 = vmatpush1.bf16.msra.mxu0 %v865
    %919 = vmatprep.subr.bf16.mxu0 0
    %920 = vmatpush1.bf16.msra.mxu0 0
    %921 = vmatprep.subr.bf16.mxu0 0
    %922 = vmatpush1.bf16.msra.mxu0 0
    %923 = vmatprep.subr.bf16.mxu0 0
    %924 = vmatpush1.bf16.msra.mxu0 0
    %925 = vmatprep.subr.bf16.mxu0 0
    %926 = vmatpush1.bf16.msra.mxu0 0
    %927 = vmatprep.mubr.bf16.mxu0 %v893
    %928 = vmatmul.mubr.bf16.gmra.mrb[0].mxu0 %v762
    %v929 = vpop.f32.mrb[0].mxu0
    %v930 = vadd.f32 0.0, %v929
    %v931 = vpop.f32.mrb[0].mxu0
    %v932 = vadd.f32 0.0, %v931
    %v933 = vpop.f32.mrb[0].mxu0
    %v934 = vadd.f32 0.0, %v933
    %v935 = vpop.f32.mrb[0].mxu0
    %v936 = vadd.f32 0.0, %v935
    %937 = vdwg.mxu0
    %v962 = vunpack.c.l.b16 %v708
    %v963 = vunpack.c.h.b16 %v708
    %v964 = vunpack.c.l.b16 %v709
    %v965 = vunpack.c.h.b16 %v709
    %v966 = vunpack.c.l.b16 %v710
    %v967 = vunpack.c.h.b16 %v710
    %v968 = vunpack.c.l.b16 %v711
    %v969 = vunpack.c.h.b16 %v711
    %v970 = vunpack.c.l.b16 %v712
    %v971 = vunpack.c.h.b16 %v712
    %v972 = vunpack.c.l.b16 %v713
    %v973 = vunpack.c.h.b16 %v713
    %v974 = vunpack.c.l.b16 %v714
    %v975 = vunpack.c.h.b16 %v714
    %v976 = vunpack.c.l.b16 %v715
    %v977 = vunpack.c.h.b16 %v715
    %v978 = vunpack.c.l.b16 %v716
    %v979 = vunpack.c.h.b16 %v716
    %v980 = vunpack.c.l.b16 %v717
    %v981 = vunpack.c.h.b16 %v717
    %v982 = vunpack.c.l.b16 %v718
    %v983 = vunpack.c.h.b16 %v718
    %v984 = vunpack.c.l.b16 %v719
    %v985 = vunpack.c.h.b16 %v719
    %v986 = vunpack.c.l.b16 %v720
    %v987 = vunpack.c.h.b16 %v720
    %v988 = vunpack.c.l.b16 %v721
    %v989 = vunpack.c.h.b16 %v721
    %v990 = vunpack.c.l.b16 %v722
    %v991 = vunpack.c.h.b16 %v722
    %v992 = vunpack.c.l.b16 %v723
    %v993 = vunpack.c.h.b16 %v723
    %v994 = vunpack.c.l.b16 %v724
    %v995 = vunpack.c.h.b16 %v724
    %v996 = vunpack.c.l.b16 %v725
    %v997 = vunpack.c.h.b16 %v725
    %v998 = vunpack.c.l.b16 %v726
    %v999 = vunpack.c.h.b16 %v726
    %v1000 = vunpack.c.l.b16 %v727
    %v1001 = vunpack.c.h.b16 %v727
    %v1002 = vunpack.c.l.b16 %v728
    %v1003 = vunpack.c.h.b16 %v728
    %v1004 = vunpack.c.l.b16 %v729
    %v1005 = vunpack.c.h.b16 %v729
    %v1006 = vunpack.c.l.b16 %v730
    %v1007 = vunpack.c.h.b16 %v730
    %v1008 = vunpack.c.l.b16 %v731
    %v1009 = vunpack.c.h.b16 %v731
    %v1010 = vpack.c.b16 %v964, %v962
    %v1011 = vpack.c.b16 %v965, %v963
    %v1012 = vpack.c.b16 %v968, %v966
    %v1013 = vpack.c.b16 %v969, %v967
    %v1014 = vpack.c.b16 %v972, %v970
    %v1015 = vpack.c.b16 %v973, %v971
    %v1016 = vpack.c.b16 %v976, %v974
    %v1017 = vpack.c.b16 %v977, %v975
    %v1018 = vpack.c.b16 %v980, %v978
    %v1019 = vpack.c.b16 %v981, %v979
    %v1020 = vpack.c.b16 %v984, %v982
    %v1021 = vpack.c.b16 %v985, %v983
    %v1022 = vpack.c.b16 %v988, %v986
    %v1023 = vpack.c.b16 %v989, %v987
    %v1024 = vpack.c.b16 %v992, %v990
    %v1025 = vpack.c.b16 %v993, %v991
    %v1026 = vpack.c.b16 %v996, %v994
    %v1027 = vpack.c.b16 %v997, %v995
    %v1028 = vpack.c.b16 %v1000, %v998
    %v1029 = vpack.c.b16 %v1001, %v999
    %v1030 = vpack.c.b16 %v1004, %v1002
    %v1031 = vpack.c.b16 %v1005, %v1003
    %v1032 = vpack.c.b16 %v1008, %v1006
    %v1033 = vpack.c.b16 %v1009, %v1007
    %v1058 = vsel %vm891, %v707, 0
    %1060 = vmatprep.subr.bf16.mxu0 %v1011
    %1061 = vmatpush1.bf16.msra.mxu0 %v1010
    %1062 = vmatprep.subr.bf16.mxu0 %v1013
    %1063 = vmatpush1.bf16.msra.mxu0 %v1012
    %1064 = vmatprep.subr.bf16.mxu0 %v1015
    %1065 = vmatpush1.bf16.msra.mxu0 %v1014
    %1066 = vmatprep.subr.bf16.mxu0 %v1017
    %1067 = vmatpush1.bf16.msra.mxu0 %v1016
    %1068 = vmatprep.subr.bf16.mxu0 %v1019
    %1069 = vmatpush1.bf16.msra.mxu0 %v1018
    %1070 = vmatprep.subr.bf16.mxu0 %v1021
    %1071 = vmatpush1.bf16.msra.mxu0 %v1020
    %1072 = vmatprep.subr.bf16.mxu0 %v1023
    %1073 = vmatpush1.bf16.msra.mxu0 %v1022
    %1074 = vmatprep.subr.bf16.mxu0 %v1025
    %1075 = vmatpush1.bf16.msra.mxu0 %v1024
    %1076 = vmatprep.subr.bf16.mxu0 %v1027
    %1077 = vmatpush1.bf16.msra.mxu0 %v1026
    %1078 = vmatprep.subr.bf16.mxu0 %v1029
    %1079 = vmatpush1.bf16.msra.mxu0 %v1028
    %1080 = vmatprep.subr.bf16.mxu0 %v1031
    %1081 = vmatpush1.bf16.msra.mxu0 %v1030
    %1082 = vmatprep.subr.bf16.mxu0 %v1033
    %1083 = vmatpush1.bf16.msra.mxu0 %v1032
    %1084 = vmatprep.subr.bf16.mxu0 0
    %1085 = vmatpush1.bf16.msra.mxu0 0
    %1086 = vmatprep.subr.bf16.mxu0 0
    %1087 = vmatpush1.bf16.msra.mxu0 0
    %1088 = vmatprep.subr.bf16.mxu0 0
    %1089 = vmatpush1.bf16.msra.mxu0 0
    %1090 = vmatprep.subr.bf16.mxu0 0
    %1091 = vmatpush1.bf16.msra.mxu0 0
    %1092 = vmatprep.mubr.bf16.mxu0 %v1058
    %1093 = vmatmul.mubr.bf16.gmra.mrb[0].mxu0 %v706
    %v1094 = vpop.f32.mrb[0].mxu0
    %v1095 = vadd.f32 %v930, %v1094
    %v1096 = vpop.f32.mrb[0].mxu0
    %v1097 = vadd.f32 %v932, %v1096
    %v1098 = vpop.f32.mrb[0].mxu0
    %v1099 = vadd.f32 %v934, %v1098
    %v1100 = vpop.f32.mrb[0].mxu0
    %v1101 = vadd.f32 %v936, %v1100
    %1102 = vdwg.mxu0
    %v1103 = vld [vmem:[%s9] sm:$0x3]
    %v1105 = vlaneseq
    %v1106 = vshrl.u32 %v1105, 7
    %v1107 = vsub.s32 0, %v1106
    %v1108 = vrot.slane %v1103, %v1107
    %v1109 = vlaneseq
    %v1110 = vshrl.u32 %v1109, 7
    %v1111 = vsub.s32 1, %v1110
    %v1112 = vrot.slane %v1103, %v1111
    %v1115 = vadd.f32 %v1095, %v1108
    %v1116 = vadd.f32 %v1097, %v1112
    %v1117 = vadd.f32 %v1099, %v1108
    %v1118 = vadd.f32 %v1101, %v1112
    %v1119 = vmax.f32 %v1115, 0.0
    %v1120 = vmax.f32 %v1116, 0.0
    %v1121 = vmax.f32 %v1117, 0.0
    %v1122 = vmax.f32 %v1118, 0.0
    %v1123 = vpack.c.bf16 %v1121, %v1119
    %v1124 = vpack.c.bf16 %v1122, %v1120
    %v1125 = vld [vmem:[%s10] sm:$0xf]
    %v1126 = vld [vmem:[%s10 + $0x4] sm:$0xf]
    %v1127 = vld [vmem:[%s10 + $0x8] sm:$0xf]
    %v1128 = vld [vmem:[%s10 + $0xc] sm:$0xf]
    %v1129 = vld [vmem:[%s10 + $0x10] sm:$0xf]
    %v1130 = vld [vmem:[%s10 + $0x14] sm:$0xf]
    %v1131 = vld [vmem:[%s10 + $0x18] sm:$0xf]
    %v1132 = vld [vmem:[%s10 + $0x1c] sm:$0xf]
    %v1133 = vld [vmem:[%s10 + $0x20] sm:$0xf]
    %v1134 = vld [vmem:[%s10 + $0x24] sm:$0xf]
    %v1135 = vld [vmem:[%s10 + $0x28] sm:$0xf]
    %v1136 = vld [vmem:[%s10 + $0x2c] sm:$0xf]
    %v1137 = vld [vmem:[%s10 + $0x30] sm:$0xf]
    %v1138 = vld [vmem:[%s10 + $0x34] sm:$0xf]
    %v1139 = vld [vmem:[%s10 + $0x38] sm:$0xf]
    %v1140 = vld [vmem:[%s10 + $0x3c] sm:$0xf]
    %v1141 = vld [vmem:[%s10 + $0x40] sm:$0xf]
    %v1142 = vld [vmem:[%s10 + $0x44] sm:$0xf]
    %v1143 = vld [vmem:[%s10 + $0x48] sm:$0xf]
    %v1144 = vld [vmem:[%s10 + $0x4c] sm:$0xf]
    %v1145 = vld [vmem:[%s11] sm:$0xf]
    %v1146 = vld [vmem:[%s11 + $0x4] sm:$0xf]
    %v1147 = vld [vmem:[%s11 + $0x8] sm:$0xf]
    %v1148 = vld [vmem:[%s11 + $0xc] sm:$0xf]
    %v1149 = vld [vmem:[%s11 + $0x10] sm:$0xf]
    %v1150 = vld [vmem:[%s11 + $0x14] sm:$0xf]
    %v1151 = vld [vmem:[%s11 + $0x18] sm:$0xf]
    %v1152 = vld [vmem:[%s11 + $0x1c] sm:$0xf]
    %v1153 = vld [vmem:[%s11 + $0x20] sm:$0xf]
    %v1154 = vld [vmem:[%s11 + $0x24] sm:$0xf]
    %v1155 = vld [vmem:[%s11 + $0x28] sm:$0xf]
    %v1156 = vld [vmem:[%s11 + $0x2c] sm:$0xf]
    %v1157 = vld [vmem:[%s11 + $0x30] sm:$0xf]
    %v1158 = vld [vmem:[%s11 + $0x34] sm:$0xf]
    %v1159 = vld [vmem:[%s11 + $0x38] sm:$0xf]
    %v1160 = vld [vmem:[%s11 + $0x3c] sm:$0xf]
    %v1161 = vld [vmem:[%s11 + $0x40] sm:$0xf]
    %v1162 = vld [vmem:[%s11 + $0x44] sm:$0xf]
    %v1163 = vld [vmem:[%s11 + $0x48] sm:$0xf]
    %v1164 = vld [vmem:[%s11 + $0x4c] sm:$0xf]
    %v1166 = vshrl.u32 %v1123, 16
    %v1168 = vshll.u32 %v1123, 16
    %v1170 = vrot.slane %v1168, 1
    %v1171 = vor.u32 %v1166, %v1170
    %v1173 = vshrl.u32 %v1124, 16
    %v1175 = vshll.u32 %v1124, 16
    %v1177 = vrot.slane %v1175, 1
    %v1178 = vor.u32 %v1173, %v1177
    %v1200 = vunpack.c.l.b16 %v1145
    %v1201 = vunpack.c.l.b16 %v1146
    %v1202 = vunpack.c.l.b16 %v1147
    %v1203 = vunpack.c.l.b16 %v1148
    %v1204 = vunpack.c.l.b16 %v1149
    %v1205 = vunpack.c.l.b16 %v1150
    %v1206 = vunpack.c.l.b16 %v1151
    %v1207 = vunpack.c.l.b16 %v1152
    %v1208 = vunpack.c.l.b16 %v1153
    %v1209 = vunpack.c.l.b16 %v1154
    %v1210 = vunpack.c.l.b16 %v1155
    %v1211 = vunpack.c.l.b16 %v1156
    %v1212 = vunpack.c.l.b16 %v1157
    %v1213 = vunpack.c.l.b16 %v1158
    %v1214 = vunpack.c.l.b16 %v1159
    %v1215 = vunpack.c.l.b16 %v1160
    %v1216 = vunpack.c.l.b16 %v1161
    %v1217 = vunpack.c.l.b16 %v1162
    %v1218 = vunpack.c.l.b16 %v1163
    %v1219 = vunpack.c.l.b16 %v1164
    %v1220 = vpack.c.b16 %v1201, %v1200
    %v1221 = vpack.c.b16 %v1203, %v1202
    %v1222 = vpack.c.b16 %v1205, %v1204
    %v1223 = vpack.c.b16 %v1207, %v1206
    %v1224 = vpack.c.b16 %v1209, %v1208
    %v1225 = vpack.c.b16 %v1211, %v1210
    %v1226 = vpack.c.b16 %v1213, %v1212
    %v1227 = vpack.c.b16 %v1215, %v1214
    %v1228 = vpack.c.b16 %v1217, %v1216
    %v1229 = vpack.c.b16 %v1219, %v1218
    %vm1240 = vcmask 261120
    %v1242 = vsel %vm1240, %v1178, 0
    %1244 = vmatprep.subr.bf16.mxu0 0
    %1245 = vmatpush1.bf16.msra.mxu0 %v1220
    %1246 = vmatprep.subr.bf16.mxu0 0
    %1247 = vmatpush1.bf16.msra.mxu0 %v1221
    %1248 = vmatprep.subr.bf16.mxu0 0
    %1249 = vmatpush1.bf16.msra.mxu0 %v1222
    %1250 = vmatprep.subr.bf16.mxu0 0
    %1251 = vmatpush1.bf16.msra.mxu0 %v1223
    %1252 = vmatprep.subr.bf16.mxu0 0
    %1253 = vmatpush1.bf16.msra.mxu0 %v1224
    %1254 = vmatprep.subr.bf16.mxu0 0
    %1255 = vmatpush1.bf16.msra.mxu0 %v1225
    %1256 = vmatprep.subr.bf16.mxu0 0
    %1257 = vmatpush1.bf16.msra.mxu0 %v1226
    %1258 = vmatprep.subr.bf16.mxu0 0
    %1259 = vmatpush1.bf16.msra.mxu0 %v1227
    %1260 = vmatprep.subr.bf16.mxu0 0
    %1261 = vmatpush1.bf16.msra.mxu0 %v1228
    %1262 = vmatprep.subr.bf16.mxu0 0
    %1263 = vmatpush1.bf16.msra.mxu0 %v1229
    %1264 = vmatprep.subr.bf16.mxu0 0
    %1265 = vmatpush1.bf16.msra.mxu0 0
    %1266 = vmatprep.subr.bf16.mxu0 0
    %1267 = vmatpush1.bf16.msra.mxu0 0
    %1268 = vmatprep.subr.bf16.mxu0 0
    %1269 = vmatpush1.bf16.msra.mxu0 0
    %1270 = vmatprep.subr.bf16.mxu0 0
    %1271 = vmatpush1.bf16.msra.mxu0 0
    %1272 = vmatprep.subr.bf16.mxu0 0
    %1273 = vmatpush1.bf16.msra.mxu0 0
    %1274 = vmatprep.subr.bf16.mxu0 0
    %1275 = vmatpush1.bf16.msra.mxu0 0
    %1276 = vmatprep.mubr.bf16.mxu0 %v1242
    %1277 = vmatmul.mubr.bf16.gmra.mrb[0].mxu0 %v1171
    %v1278 = vpop.f32.mrb[0].mxu0
    %v1279 = vadd.f32 0.0, %v1278
    %v1280 = vpop.f32.mrb[0].mxu0
    %v1281 = vpop.f32.mrb[0].mxu0
    %v1282 = vadd.f32 0.0, %v1281
    %v1283 = vpop.f32.mrb[0].mxu0
    %1284 = vdwg.mxu0
    %v1305 = vunpack.c.l.b16 %v1125
    %v1306 = vunpack.c.l.b16 %v1126
    %v1307 = vunpack.c.l.b16 %v1127
    %v1308 = vunpack.c.l.b16 %v1128
    %v1309 = vunpack.c.l.b16 %v1129
    %v1310 = vunpack.c.l.b16 %v1130
    %v1311 = vunpack.c.l.b16 %v1131
    %v1312 = vunpack.c.l.b16 %v1132
    %v1313 = vunpack.c.l.b16 %v1133
    %v1314 = vunpack.c.l.b16 %v1134
    %v1315 = vunpack.c.l.b16 %v1135
    %v1316 = vunpack.c.l.b16 %v1136
    %v1317 = vunpack.c.l.b16 %v1137
    %v1318 = vunpack.c.l.b16 %v1138
    %v1319 = vunpack.c.l.b16 %v1139
    %v1320 = vunpack.c.l.b16 %v1140
    %v1321 = vunpack.c.l.b16 %v1141
    %v1322 = vunpack.c.l.b16 %v1142
    %v1323 = vunpack.c.l.b16 %v1143
    %v1324 = vunpack.c.l.b16 %v1144
    %v1325 = vpack.c.b16 %v1306, %v1305
    %v1326 = vpack.c.b16 %v1308, %v1307
    %v1327 = vpack.c.b16 %v1310, %v1309
    %v1328 = vpack.c.b16 %v1312, %v1311
    %v1329 = vpack.c.b16 %v1314, %v1313
    %v1330 = vpack.c.b16 %v1316, %v1315
    %v1331 = vpack.c.b16 %v1318, %v1317
    %v1332 = vpack.c.b16 %v1320, %v1319
    %v1333 = vpack.c.b16 %v1322, %v1321
    %v1334 = vpack.c.b16 %v1324, %v1323
    %v1345 = vsel %vm1240, %v1124, 0
    %1347 = vmatprep.subr.bf16.mxu0 0
    %1348 = vmatpush1.bf16.msra.mxu0 %v1325
    %1349 = vmatprep.subr.bf16.mxu0 0
    %1350 = vmatpush1.bf16.msra.mxu0 %v1326
    %1351 = vmatprep.subr.bf16.mxu0 0
    %1352 = vmatpush1.bf16.msra.mxu0 %v1327
    %1353 = vmatprep.subr.bf16.mxu0 0
    %1354 = vmatpush1.bf16.msra.mxu0 %v1328
    %1355 = vmatprep.subr.bf16.mxu0 0
    %1356 = vmatpush1.bf16.msra.mxu0 %v1329
    %1357 = vmatprep.subr.bf16.mxu0 0
    %1358 = vmatpush1.bf16.msra.mxu0 %v1330
    %1359 = vmatprep.subr.bf16.mxu0 0
    %1360 = vmatpush1.bf16.msra.mxu0 %v1331
    %1361 = vmatprep.subr.bf16.mxu0 0
    %1362 = vmatpush1.bf16.msra.mxu0 %v1332
    %1363 = vmatprep.subr.bf16.mxu0 0
    %1364 = vmatpush1.bf16.msra.mxu0 %v1333
    %1365 = vmatprep.subr.bf16.mxu0 0
    %1366 = vmatpush1.bf16.msra.mxu0 %v1334
    %1367 = vmatprep.subr.bf16.mxu0 0
    %1368 = vmatpush1.bf16.msra.mxu0 0
    %1369 = vmatprep.subr.bf16.mxu0 0
    %1370 = vmatpush1.bf16.msra.mxu0 0
    %1371 = vmatprep.subr.bf16.mxu0 0
    %1372 = vmatpush1.bf16.msra.mxu0 0
    %1373 = vmatprep.subr.bf16.mxu0 0
    %1374 = vmatpush1.bf16.msra.mxu0 0
    %1375 = vmatprep.subr.bf16.mxu0 0
    %1376 = vmatpush1.bf16.msra.mxu0 0
    %1377 = vmatprep.subr.bf16.mxu0 0
    %1378 = vmatpush1.bf16.msra.mxu0 0
    %1379 = vmatprep.mubr.bf16.mxu0 %v1345
    %1380 = vmatmul.mubr.bf16.gmra.mrb[0].mxu0 %v1123
    %v1381 = vpop.f32.mrb[0].mxu0
    %v1382 = vadd.f32 %v1279, %v1381
    %v1383 = vpop.f32.mrb[0].mxu0
    %v1384 = vpop.f32.mrb[0].mxu0
    %v1385 = vadd.f32 %v1282, %v1384
    %v1386 = vpop.f32.mrb[0].mxu0
    %1387 = vdwg.mxu0
    %v1388 = vld [vmem:[%s12] sm:$0x1]
    %v1390 = vlaneseq
    %v1391 = vshrl.u32 %v1390, 7
    %v1392 = vsub.s32 0, %v1391
    %v1393 = vrot.slane %v1388, %v1392
    %v1395 = vadd.f32 %v1382, %v1393
    %v1396 = vadd.f32 %v1385, %v1393
    %v1397 = vmax.f32 %v1395, 0.0
    %v1398 = vmax.f32 %v1396, 0.0
    %1399 = vst [vmem:[#allocation2] sm:$0x1] %v1397
    %v1402 = vunpack.c.l.s4 1983009808
    %v1403 = vunpack.c.0.s8 %v1402
    %v1404 = vlaneseq
    %v1405 = vshrl.u32 %v1404, 7
    %v1406 = vsub.s32 %v1403, %v1405
    %v1407 = vrot.slane %v1397, %v1406
    %v1408 = vrot.slane %v1407, 7
    %v1409 = vrot.slane %v1408, 2
    %1411 = vst [vmem:[#allocation2 + $0x2] sm:$0x1] %v1409
    %v1412 = vcombine.high %v1407, %v1407
    %1414 = vst [vmem:[#allocation2 + $0x4] sm:$0x1] %v1412
    %v1415 = vrot.slane %v1412, 7
    %v1416 = vrot.slane %v1415, 2
    %1418 = vst [vmem:[#allocation2 + $0x6] sm:$0x1] %v1416
    %1419 = vst [vmem:[#allocation2 + $0x1] sm:$0x1] %v1398
    %v1422 = vunpack.c.l.s4 1983009808
    %v1423 = vunpack.c.0.s8 %v1422
    %v1424 = vlaneseq
    %v1425 = vshrl.u32 %v1424, 7
    %v1426 = vsub.s32 %v1423, %v1425
    %v1427 = vrot.slane %v1398, %v1426
    %v1428 = vrot.slane %v1427, 7
    %v1429 = vrot.slane %v1428, 2
    %1431 = vst [vmem:[#allocation2 + $0x3] sm:$0x1] %v1429
    %v1432 = vcombine.high %v1427, %v1427
    %1434 = vst [vmem:[#allocation2 + $0x5] sm:$0x1] %v1432
    %v1435 = vrot.slane %v1432, 7
    %v1436 = vrot.slane %v1435, 2
    %1438 = vst [vmem:[#allocation2 + $0x7] sm:$0x1] %v1436
    %v1439 = vld [vmem:[#allocation2] sm:$0xff]
    %v1441 = vcombine.high %v1439, %v1439
    %v1443 = vunpack.c.l.s4 1983009808
    %v1444 = vunpack.c.0.s8 %v1443
    %v1445 = vlaneseq
    %v1446 = vshrl.u32 %v1445, 7
    %v1447 = vsub.s32 %v1444, %v1446
    %v1448 = vrot.slane %v1439, %v1447
    %v1450 = vunpack.c.l.s4 1983009808
    %v1451 = vunpack.c.0.s8 %v1450
    %v1452 = vlaneseq
    %v1453 = vshrl.u32 %v1452, 7
    %v1454 = vsub.s32 %v1451, %v1453
    %v1455 = vrot.slane %v1441, %v1454
    %v1456 = vcombine.high %v1448, %v1448
    %v1457 = vcombine.high %v1455, %v1455
    %v1462 = vpack.c.bf16 %v1448, %v1448
    %v1463 = vpack.c.bf16 %v1456, %v1456
    %v1464 = vpack.c.bf16 %v1455, %v1455
    %v1465 = vpack.c.bf16 %v1457, %v1457
    %v1466 = vld [vmem:[#allocation3] sm:$0xff]
    %v1467 = vld [vmem:[#allocation3 + $0x8] sm:$0xff]
    %v1468 = vld [vmem:[#allocation3 + $0x10] sm:$0xff]
    %v1469 = vld [vmem:[#allocation3 + $0x18] sm:$0xff]
    %v1470 = vld [vmem:[#allocation3 + $0x20] sm:$0xff]
    %v1471 = vld [vmem:[#allocation3 + $0x28] sm:$0xff]
    %v1472 = vld [vmem:[#allocation3 + $0x30] sm:$0xff]
    %v1473 = vld [vmem:[#allocation3 + $0x38] sm:$0xff]
    %v1474 = vld [vmem:[#allocation3 + $0x40] sm:$0xff]
    %v1475 = vld [vmem:[#allocation3 + $0x48] sm:$0xff]
    %v1476 = vld [vmem:[#allocation3 + $0x50] sm:$0xff]
    %v1477 = vld [vmem:[#allocation3 + $0x58] sm:$0xff]
    %v1478 = vld [vmem:[#allocation3 + $0x60] sm:$0xff]
    %v1479 = vld [vmem:[#allocation3 + $0x68] sm:$0xff]
    %v1480 = vld [vmem:[#allocation3 + $0x70] sm:$0xff]
    %v1481 = vld [vmem:[#allocation3 + $0x78] sm:$0xff]
    %v1482 = vld [vmem:[#allocation3 + $0x80] sm:$0xff]
    %v1483 = vld [vmem:[#allocation3 + $0x88] sm:$0xff]
    %v1484 = vld [vmem:[#allocation3 + $0x90] sm:$0xff]
    %v1485 = vld [vmem:[#allocation3 + $0x98] sm:$0xff]
    %v1486 = vld [vmem:[#allocation3 + $0xa0] sm:$0xff]
    %v1487 = vld [vmem:[#allocation3 + $0xa8] sm:$0xff]
    %v1488 = vld [vmem:[#allocation3 + $0xb0] sm:$0xff]
    %v1489 = vld [vmem:[#allocation3 + $0xb8] sm:$0xff]
    %v1490 = vld [vmem:[#allocation3 + $0xc0] sm:$0xff]
    %v1491 = vld [vmem:[#allocation3 + $0xc8] sm:$0xff]
    %v1492 = vld [vmem:[#allocation3 + $0xd0] sm:$0xff]
    %v1493 = vld [vmem:[#allocation3 + $0xd8] sm:$0xff]
    %v1494 = vld [vmem:[#allocation3 + $0xe0] sm:$0xff]
    %v1495 = vld [vmem:[#allocation3 + $0xe8] sm:$0xff]
    %v1496 = vld [vmem:[#allocation3 + $0xf0] sm:$0xff]
    %v1497 = vld [vmem:[#allocation3 + $0xf8] sm:$0xff]
    %v1498 = vld [vmem:[#allocation3 + $0x100] sm:$0xff]
    %v1499 = vld [vmem:[#allocation3 + $0x108] sm:$0xff]
    %v1500 = vld [vmem:[#allocation3 + $0x110] sm:$0xff]
    %v1501 = vld [vmem:[#allocation3 + $0x118] sm:$0xff]
    %v1502 = vld [vmem:[#allocation3 + $0x120] sm:$0xff]
    %v1503 = vld [vmem:[#allocation3 + $0x128] sm:$0xff]
    %v1504 = vld [vmem:[#allocation3 + $0x130] sm:$0xff]
    %v1505 = vld [vmem:[#allocation3 + $0x138] sm:$0xff]
    %v1506 = vld [vmem:[#allocation3 + $0x140] sm:$0xff]
    %v1507 = vld [vmem:[#allocation3 + $0x148] sm:$0xff]
    %v1508 = vld [vmem:[#allocation3 + $0x150] sm:$0xff]
    %v1509 = vld [vmem:[#allocation3 + $0x158] sm:$0xff]
    %v1510 = vld [vmem:[#allocation3 + $0x160] sm:$0xff]
    %v1511 = vld [vmem:[#allocation3 + $0x168] sm:$0xff]
    %v1512 = vld [vmem:[#allocation3 + $0x170] sm:$0xff]
    %v1513 = vld [vmem:[#allocation3 + $0x178] sm:$0xff]
    %v1514 = vld [vmem:[#allocation3 + $0x180] sm:$0xff]
    %v1515 = vld [vmem:[#allocation3 + $0x188] sm:$0xff]
    %v1516 = vld [vmem:[#allocation3 + $0x190] sm:$0xff]
    %v1517 = vld [vmem:[#allocation3 + $0x198] sm:$0xff]
    %v1518 = vld [vmem:[#allocation3 + $0x1a0] sm:$0xff]
    %v1519 = vld [vmem:[#allocation3 + $0x1a8] sm:$0xff]
    %v1520 = vld [vmem:[#allocation3 + $0x1b0] sm:$0xff]
    %v1521 = vld [vmem:[#allocation3 + $0x1b8] sm:$0xff]
    %v1522 = vld [vmem:[#allocation3 + $0x1c0] sm:$0xff]
    %v1523 = vld [vmem:[#allocation3 + $0x1c8] sm:$0xff]
    %v1524 = vld [vmem:[#allocation3 + $0x1d0] sm:$0xff]
    %v1525 = vld [vmem:[#allocation3 + $0x1d8] sm:$0xff]
    %v1526 = vld [vmem:[#allocation3 + $0x1e0] sm:$0xff]
    %v1527 = vld [vmem:[#allocation3 + $0x1e8] sm:$0xff]
    %v1528 = vld [vmem:[#allocation3 + $0x1f0] sm:$0xff]
    %v1529 = vld [vmem:[#allocation3 + $0x1f8] sm:$0xff]
    %v1530 = vld [vmem:[#allocation3 + $0x200] sm:$0xff]
    %v1531 = vld [vmem:[#allocation3 + $0x208] sm:$0xff]
    %v1532 = vld [vmem:[#allocation3 + $0x210] sm:$0xff]
    %v1533 = vld [vmem:[#allocation3 + $0x218] sm:$0xff]
    %v1534 = vld [vmem:[#allocation3 + $0x220] sm:$0xff]
    %v1535 = vld [vmem:[#allocation3 + $0x228] sm:$0xff]
    %v1536 = vld [vmem:[#allocation3 + $0x230] sm:$0xff]
    %v1537 = vld [vmem:[#allocation3 + $0x238] sm:$0xff]
    %v1538 = vld [vmem:[#allocation3 + $0x240] sm:$0xff]
    %v1539 = vld [vmem:[#allocation3 + $0x248] sm:$0xff]
    %v1540 = vld [vmem:[#allocation3 + $0x250] sm:$0xff]
    %v1541 = vld [vmem:[#allocation3 + $0x258] sm:$0xff]
    %v1542 = vld [vmem:[#allocation3 + $0x260] sm:$0xff]
    %v1543 = vld [vmem:[#allocation3 + $0x268] sm:$0xff]
    %v1544 = vld [vmem:[#allocation3 + $0x270] sm:$0xff]
    %v1545 = vld [vmem:[#allocation3 + $0x278] sm:$0xff]
    %v1546 = vld [vmem:[#allocation3 + $0x280] sm:$0xff]
    %v1547 = vld [vmem:[#allocation3 + $0x288] sm:$0xff]
    %v1548 = vld [vmem:[#allocation3 + $0x290] sm:$0xff]
    %v1549 = vld [vmem:[#allocation3 + $0x298] sm:$0xff]
    %v1550 = vld [vmem:[#allocation3 + $0x2a0] sm:$0xff]
    %v1551 = vld [vmem:[#allocation3 + $0x2a8] sm:$0xff]
    %v1552 = vld [vmem:[#allocation3 + $0x2b0] sm:$0xff]
    %v1553 = vld [vmem:[#allocation3 + $0x2b8] sm:$0xff]
    %v1554 = vld [vmem:[#allocation3 + $0x2c0] sm:$0xff]
    %v1555 = vld [vmem:[#allocation3 + $0x2c8] sm:$0xff]
    %v1556 = vld [vmem:[#allocation3 + $0x2d0] sm:$0xff]
    %v1557 = vld [vmem:[#allocation3 + $0x2d8] sm:$0xff]
    %v1558 = vld [vmem:[#allocation3 + $0x2e0] sm:$0xff]
    %v1559 = vld [vmem:[#allocation3 + $0x2e8] sm:$0xff]
    %v1560 = vld [vmem:[#allocation3 + $0x2f0] sm:$0xff]
    %v1561 = vld [vmem:[#allocation3 + $0x2f8] sm:$0xff]
    %v1562 = vld [vmem:[#allocation3 + $0x300] sm:$0xff]
    %v1563 = vld [vmem:[#allocation3 + $0x308] sm:$0xff]
    %v1564 = vld [vmem:[#allocation3 + $0x310] sm:$0xff]
    %v1565 = vld [vmem:[#allocation3 + $0x318] sm:$0xff]
    %v1566 = vld [vmem:[#allocation3 + $0x320] sm:$0xff]
    %v1567 = vld [vmem:[#allocation3 + $0x328] sm:$0xff]
    %v1568 = vld [vmem:[#allocation3 + $0x330] sm:$0xff]
    %v1569 = vld [vmem:[#allocation3 + $0x338] sm:$0xff]
    %v1570 = vld [vmem:[#allocation3 + $0x340] sm:$0xff]
    %v1571 = vld [vmem:[#allocation3 + $0x348] sm:$0xff]
    %v1572 = vld [vmem:[#allocation3 + $0x350] sm:$0xff]
    %v1573 = vld [vmem:[#allocation3 + $0x358] sm:$0xff]
    %v1574 = vld [vmem:[#allocation3 + $0x360] sm:$0xff]
    %v1575 = vld [vmem:[#allocation3 + $0x368] sm:$0xff]
    %v1576 = vld [vmem:[#allocation3 + $0x370] sm:$0xff]
    %v1577 = vld [vmem:[#allocation3 + $0x378] sm:$0xff]
    %v1578 = vld [vmem:[#allocation3 + $0x380] sm:$0xff]
    %v1579 = vld [vmem:[#allocation3 + $0x388] sm:$0xff]
    %v1580 = vld [vmem:[#allocation3 + $0x390] sm:$0xff]
    %v1581 = vld [vmem:[#allocation3 + $0x398] sm:$0xff]
    %v1582 = vld [vmem:[#allocation3 + $0x3a0] sm:$0xff]
    %v1583 = vld [vmem:[#allocation3 + $0x3a8] sm:$0xff]
    %v1584 = vld [vmem:[#allocation3 + $0x3b0] sm:$0xff]
    %v1585 = vld [vmem:[#allocation3 + $0x3b8] sm:$0xff]
    %v1586 = vld [vmem:[#allocation3 + $0x3c0] sm:$0xff]
    %v1587 = vld [vmem:[#allocation3 + $0x3c8] sm:$0xff]
    %v1588 = vld [vmem:[#allocation3 + $0x3d0] sm:$0xff]
    %v1589 = vld [vmem:[#allocation3 + $0x3d8] sm:$0xff]
    %v1590 = vld [vmem:[#allocation3 + $0x3e0] sm:$0xff]
    %v1591 = vld [vmem:[#allocation3 + $0x3e8] sm:$0xff]
    %v1592 = vld [vmem:[#allocation3 + $0x3f0] sm:$0xff]
    %v1593 = vld [vmem:[#allocation3 + $0x3f8] sm:$0xff]
    %v1594 = vld [vmem:[#allocation3 + $0x400] sm:$0xff]
    %v1595 = vld [vmem:[#allocation3 + $0x408] sm:$0xff]
    %v1596 = vld [vmem:[#allocation3 + $0x410] sm:$0xff]
    %v1597 = vld [vmem:[#allocation3 + $0x418] sm:$0xff]
    %v1598 = vld [vmem:[#allocation3 + $0x420] sm:$0xff]
    %v1599 = vld [vmem:[#allocation3 + $0x428] sm:$0xff]
    %v1600 = vld [vmem:[#allocation3 + $0x430] sm:$0xff]
    %v1601 = vld [vmem:[#allocation3 + $0x438] sm:$0xff]
    %v1602 = vld [vmem:[#allocation3 + $0x440] sm:$0xff]
    %v1603 = vld [vmem:[#allocation3 + $0x448] sm:$0xff]
    %v1604 = vld [vmem:[#allocation3 + $0x450] sm:$0xff]
    %v1605 = vld [vmem:[#allocation3 + $0x458] sm:$0xff]
    %v1606 = vld [vmem:[#allocation3 + $0x460] sm:$0xff]
    %v1607 = vld [vmem:[#allocation3 + $0x468] sm:$0xff]
    %v1608 = vld [vmem:[#allocation3 + $0x470] sm:$0xff]
    %v1609 = vld [vmem:[#allocation3 + $0x478] sm:$0xff]
    %v1610 = vld [vmem:[#allocation3 + $0x480] sm:$0xff]
    %v1611 = vld [vmem:[#allocation3 + $0x488] sm:$0xff]
    %v1612 = vld [vmem:[#allocation3 + $0x490] sm:$0xff]
    %v1613 = vld [vmem:[#allocation3 + $0x498] sm:$0xff]
    %v1614 = vld [vmem:[#allocation3 + $0x4a0] sm:$0xff]
    %v1615 = vld [vmem:[#allocation3 + $0x4a8] sm:$0xff]
    %v1616 = vld [vmem:[#allocation3 + $0x4b0] sm:$0xff]
    %v1617 = vld [vmem:[#allocation3 + $0x4b8] sm:$0xff]
    %v1618 = vld [vmem:[#allocation3 + $0x4c0] sm:$0xff]
    %v1619 = vld [vmem:[#allocation3 + $0x4c8] sm:$0xff]
    %v1620 = vld [vmem:[#allocation3 + $0x4d0] sm:$0xff]
    %v1621 = vld [vmem:[#allocation3 + $0x4d8] sm:$0xff]
    %v1622 = vld [vmem:[#allocation3 + $0x4e0] sm:$0xff]
    %v1623 = vld [vmem:[#allocation3 + $0x4e8] sm:$0xff]
    %v1624 = vld [vmem:[#allocation3 + $0x4f0] sm:$0xff]
    %v1625 = vld [vmem:[#allocation3 + $0x4f8] sm:$0xff]
    %v1626 = vld [vmem:[#allocation3 + $0x500] sm:$0xff]
    %v1627 = vld [vmem:[#allocation3 + $0x508] sm:$0xff]
    %v1628 = vld [vmem:[#allocation3 + $0x510] sm:$0xff]
    %v1629 = vld [vmem:[#allocation3 + $0x518] sm:$0xff]
    %v1630 = vld [vmem:[#allocation3 + $0x520] sm:$0xff]
    %v1631 = vld [vmem:[#allocation3 + $0x528] sm:$0xff]
    %v1632 = vld [vmem:[#allocation3 + $0x530] sm:$0xff]
    %v1633 = vld [vmem:[#allocation3 + $0x538] sm:$0xff]
    %v1634 = vld [vmem:[#allocation3 + $0x540] sm:$0xff]
    %v1635 = vld [vmem:[#allocation3 + $0x548] sm:$0xff]
    %v1636 = vld [vmem:[#allocation3 + $0x550] sm:$0xff]
    %v1637 = vld [vmem:[#allocation3 + $0x558] sm:$0xff]
    %v1638 = vld [vmem:[#allocation3 + $0x560] sm:$0xff]
    %v1639 = vld [vmem:[#allocation3 + $0x568] sm:$0xff]
    %v1640 = vld [vmem:[#allocation3 + $0x570] sm:$0xff]
    %v1641 = vld [vmem:[#allocation3 + $0x578] sm:$0xff]
    %v1642 = vld [vmem:[#allocation3 + $0x580] sm:$0xff]
    %v1643 = vld [vmem:[#allocation3 + $0x588] sm:$0xff]
    %v1644 = vld [vmem:[#allocation3 + $0x590] sm:$0xff]
    %v1645 = vld [vmem:[#allocation3 + $0x598] sm:$0xff]
    %v1646 = vld [vmem:[#allocation3 + $0x5a0] sm:$0xff]
    %v1647 = vld [vmem:[#allocation3 + $0x5a8] sm:$0xff]
    %v1648 = vld [vmem:[#allocation3 + $0x5b0] sm:$0xff]
    %v1649 = vld [vmem:[#allocation3 + $0x5b8] sm:$0xff]
    %v1650 = vld [vmem:[#allocation3 + $0x5c0] sm:$0xff]
    %v1651 = vld [vmem:[#allocation3 + $0x5c8] sm:$0xff]
    %v1652 = vld [vmem:[#allocation3 + $0x5d0] sm:$0xff]
    %v1653 = vld [vmem:[#allocation3 + $0x5d8] sm:$0xff]
    %v1654 = vld [vmem:[#allocation3 + $0x5e0] sm:$0xff]
    %v1655 = vld [vmem:[#allocation3 + $0x5e8] sm:$0xff]
    %v1656 = vld [vmem:[#allocation3 + $0x5f0] sm:$0xff]
    %v1657 = vld [vmem:[#allocation3 + $0x5f8] sm:$0xff]
    %v1658 = vld [vmem:[#allocation3 + $0x600] sm:$0xff]
    %v1659 = vld [vmem:[#allocation3 + $0x608] sm:$0xff]
    %v1660 = vld [vmem:[#allocation3 + $0x610] sm:$0xff]
    %v1661 = vld [vmem:[#allocation3 + $0x618] sm:$0xff]
    %v1662 = vld [vmem:[#allocation3 + $0x620] sm:$0xff]
    %v1663 = vld [vmem:[#allocation3 + $0x628] sm:$0xff]
    %v1664 = vld [vmem:[#allocation3 + $0x630] sm:$0xff]
    %v1665 = vld [vmem:[#allocation3 + $0x638] sm:$0xff]
    %v1666 = vld [vmem:[#allocation3 + $0x640] sm:$0xff]
    %v1667 = vld [vmem:[#allocation3 + $0x648] sm:$0xff]
    %v1668 = vld [vmem:[#allocation3 + $0x650] sm:$0xff]
    %v1669 = vld [vmem:[#allocation3 + $0x658] sm:$0xff]
    %v1670 = vld [vmem:[#allocation3 + $0x660] sm:$0xff]
    %v1671 = vld [vmem:[#allocation3 + $0x668] sm:$0xff]
    %v1672 = vld [vmem:[#allocation3 + $0x670] sm:$0xff]
    %v1673 = vld [vmem:[#allocation3 + $0x678] sm:$0xff]
    %v1674 = vld [vmem:[#allocation3 + $0x680] sm:$0xff]
    %v1675 = vld [vmem:[#allocation3 + $0x688] sm:$0xff]
    %v1676 = vld [vmem:[#allocation3 + $0x690] sm:$0xff]
    %v1677 = vld [vmem:[#allocation3 + $0x698] sm:$0xff]
    %v1678 = vld [vmem:[#allocation3 + $0x6a0] sm:$0xff]
    %v1679 = vld [vmem:[#allocation3 + $0x6a8] sm:$0xff]
    %v1680 = vld [vmem:[#allocation3 + $0x6b0] sm:$0xff]
    %v1681 = vld [vmem:[#allocation3 + $0x6b8] sm:$0xff]
    %v1682 = vld [vmem:[#allocation3 + $0x6c0] sm:$0xff]
    %v1683 = vld [vmem:[#allocation3 + $0x6c8] sm:$0xff]
    %v1684 = vld [vmem:[#allocation3 + $0x6d0] sm:$0xff]
    %v1685 = vld [vmem:[#allocation3 + $0x6d8] sm:$0xff]
    %v1686 = vld [vmem:[#allocation3 + $0x6e0] sm:$0xff]
    %v1687 = vld [vmem:[#allocation3 + $0x6e8] sm:$0xff]
    %v1688 = vld [vmem:[#allocation3 + $0x6f0] sm:$0xff]
    %v1689 = vld [vmem:[#allocation3 + $0x6f8] sm:$0xff]
    %v1690 = vld [vmem:[#allocation3 + $0x700] sm:$0xff]
    %v1691 = vld [vmem:[#allocation3 + $0x708] sm:$0xff]
    %v1692 = vld [vmem:[#allocation3 + $0x710] sm:$0xff]
    %v1693 = vld [vmem:[#allocation3 + $0x718] sm:$0xff]
    %v1694 = vld [vmem:[#allocation3 + $0x720] sm:$0xff]
    %v1695 = vld [vmem:[#allocation3 + $0x728] sm:$0xff]
    %v1696 = vld [vmem:[#allocation3 + $0x730] sm:$0xff]
    %v1697 = vld [vmem:[#allocation3 + $0x738] sm:$0xff]
    %v1698 = vld [vmem:[#allocation3 + $0x740] sm:$0xff]
    %v1699 = vld [vmem:[#allocation3 + $0x748] sm:$0xff]
    %v1700 = vld [vmem:[#allocation3 + $0x750] sm:$0xff]
    %v1701 = vld [vmem:[#allocation3 + $0x758] sm:$0xff]
    %v1702 = vld [vmem:[#allocation3 + $0x760] sm:$0xff]
    %v1703 = vld [vmem:[#allocation3 + $0x768] sm:$0xff]
    %v1704 = vld [vmem:[#allocation3 + $0x770] sm:$0xff]
    %v1705 = vld [vmem:[#allocation3 + $0x778] sm:$0xff]
    %v1706 = vld [vmem:[#allocation3 + $0x780] sm:$0xff]
    %v1707 = vld [vmem:[#allocation3 + $0x788] sm:$0xff]
    %v1708 = vld [vmem:[#allocation3 + $0x790] sm:$0xff]
    %v1709 = vld [vmem:[#allocation3 + $0x798] sm:$0xff]
    %v1710 = vld [vmem:[#allocation3 + $0x7a0] sm:$0xff]
    %v1711 = vld [vmem:[#allocation3 + $0x7a8] sm:$0xff]
    %v1712 = vld [vmem:[#allocation3 + $0x7b0] sm:$0xff]
    %v1713 = vld [vmem:[#allocation3 + $0x7b8] sm:$0xff]
    %v1714 = vld [vmem:[#allocation3 + $0x7c0] sm:$0xff]
    %v1715 = vld [vmem:[#allocation3 + $0x7c8] sm:$0xff]
    %v1716 = vld [vmem:[#allocation3 + $0x7d0] sm:$0xff]
    %v1717 = vld [vmem:[#allocation3 + $0x7d8] sm:$0xff]
    %v1718 = vld [vmem:[#allocation3 + $0x7e0] sm:$0xff]
    %v1719 = vld [vmem:[#allocation3 + $0x7e8] sm:$0xff]
    %v1720 = vld [vmem:[#allocation3 + $0x7f0] sm:$0xff]
    %v1721 = vld [vmem:[#allocation3 + $0x7f8] sm:$0xff]
    %v1722 = vld [vmem:[%s14] sm:$0xff]
    %v1724 = vlaneseq
    %v1725 = vshrl.u32 %v1724, 7
    %v1726 = vsub.s32 0, %v1725
    %v1727 = vrot.slane %v1722, %v1726
    %v1728 = vlaneseq
    %v1729 = vshrl.u32 %v1728, 7
    %v1730 = vsub.s32 1, %v1729
    %v1731 = vrot.slane %v1722, %v1730
    %v1732 = vlaneseq
    %v1733 = vshrl.u32 %v1732, 7
    %v1734 = vsub.s32 2, %v1733
    %v1735 = vrot.slane %v1722, %v1734
    %v1736 = vlaneseq
    %v1737 = vshrl.u32 %v1736, 7
    %v1738 = vsub.s32 3, %v1737
    %v1739 = vrot.slane %v1722, %v1738
    %v1740 = vlaneseq
    %v1741 = vshrl.u32 %v1740, 7
    %v1742 = vsub.s32 4, %v1741
    %v1743 = vrot.slane %v1722, %v1742
    %v1744 = vlaneseq
    %v1745 = vshrl.u32 %v1744, 7
    %v1746 = vsub.s32 5, %v1745
    %v1747 = vrot.slane %v1722, %v1746
    %v1748 = vlaneseq
    %v1749 = vshrl.u32 %v1748, 7
    %v1750 = vsub.s32 6, %v1749
    %v1751 = vrot.slane %v1722, %v1750
    %v1752 = vlaneseq
    %v1753 = vshrl.u32 %v1752, 7
    %v1754 = vsub.s32 7, %v1753
    %v1755 = vrot.slane %v1722, %v1754
    %v2020 = vunpack.c.l.b16 %v1466
    %v2021 = vunpack.c.h.b16 %v1466
    %v2022 = vunpack.c.l.b16 %v1467
    %v2023 = vunpack.c.h.b16 %v1467
    %v2024 = vunpack.c.l.b16 %v1468
    %v2025 = vunpack.c.h.b16 %v1468
    %v2026 = vunpack.c.l.b16 %v1469
    %v2027 = vunpack.c.h.b16 %v1469
    %v2028 = vunpack.c.l.b16 %v1470
    %v2029 = vunpack.c.h.b16 %v1470
    %v2030 = vunpack.c.l.b16 %v1471
    %v2031 = vunpack.c.h.b16 %v1471
    %v2032 = vunpack.c.l.b16 %v1472
    %v2033 = vunpack.c.h.b16 %v1472
    %v2034 = vunpack.c.l.b16 %v1473
    %v2035 = vunpack.c.h.b16 %v1473
    %v2036 = vunpack.c.l.b16 %v1474
    %v2037 = vunpack.c.h.b16 %v1474
    %v2038 = vunpack.c.l.b16 %v1475
    %v2039 = vunpack.c.h.b16 %v1475
    %v2040 = vunpack.c.l.b16 %v1476
    %v2041 = vunpack.c.h.b16 %v1476
    %v2042 = vunpack.c.l.b16 %v1477
    %v2043 = vunpack.c.h.b16 %v1477
    %v2044 = vunpack.c.l.b16 %v1478
    %v2045 = vunpack.c.h.b16 %v1478
    %v2046 = vunpack.c.l.b16 %v1479
    %v2047 = vunpack.c.h.b16 %v1479
    %v2048 = vunpack.c.l.b16 %v1480
    %v2049 = vunpack.c.h.b16 %v1480
    %v2050 = vunpack.c.l.b16 %v1481
    %v2051 = vunpack.c.h.b16 %v1481
    %v2052 = vunpack.c.l.b16 %v1482
    %v2053 = vunpack.c.h.b16 %v1482
    %v2054 = vunpack.c.l.b16 %v1483
    %v2055 = vunpack.c.h.b16 %v1483
    %v2056 = vunpack.c.l.b16 %v1484
    %v2057 = vunpack.c.h.b16 %v1484
    %v2058 = vunpack.c.l.b16 %v1485
    %v2059 = vunpack.c.h.b16 %v1485
    %v2060 = vunpack.c.l.b16 %v1486
    %v2061 = vunpack.c.h.b16 %v1486
    %v2062 = vunpack.c.l.b16 %v1487
    %v2063 = vunpack.c.h.b16 %v1487
    %v2064 = vunpack.c.l.b16 %v1488
    %v2065 = vunpack.c.h.b16 %v1488
    %v2066 = vunpack.c.l.b16 %v1489
    %v2067 = vunpack.c.h.b16 %v1489
    %v2068 = vunpack.c.l.b16 %v1490
    %v2069 = vunpack.c.h.b16 %v1490
    %v2070 = vunpack.c.l.b16 %v1491
    %v2071 = vunpack.c.h.b16 %v1491
    %v2072 = vunpack.c.l.b16 %v1492
    %v2073 = vunpack.c.h.b16 %v1492
    %v2074 = vunpack.c.l.b16 %v1493
    %v2075 = vunpack.c.h.b16 %v1493
    %v2076 = vunpack.c.l.b16 %v1494
    %v2077 = vunpack.c.h.b16 %v1494
    %v2078 = vunpack.c.l.b16 %v1495
    %v2079 = vunpack.c.h.b16 %v1495
    %v2080 = vunpack.c.l.b16 %v1496
    %v2081 = vunpack.c.h.b16 %v1496
    %v2082 = vunpack.c.l.b16 %v1497
    %v2083 = vunpack.c.h.b16 %v1497
    %v2084 = vunpack.c.l.b16 %v1498
    %v2085 = vunpack.c.h.b16 %v1498
    %v2086 = vunpack.c.l.b16 %v1499
    %v2087 = vunpack.c.h.b16 %v1499
    %v2088 = vunpack.c.l.b16 %v1500
    %v2089 = vunpack.c.h.b16 %v1500
    %v2090 = vunpack.c.l.b16 %v1501
    %v2091 = vunpack.c.h.b16 %v1501
    %v2092 = vunpack.c.l.b16 %v1502
    %v2093 = vunpack.c.h.b16 %v1502
    %v2094 = vunpack.c.l.b16 %v1503
    %v2095 = vunpack.c.h.b16 %v1503
    %v2096 = vunpack.c.l.b16 %v1504
    %v2097 = vunpack.c.h.b16 %v1504
    %v2098 = vunpack.c.l.b16 %v1505
    %v2099 = vunpack.c.h.b16 %v1505
    %v2100 = vunpack.c.l.b16 %v1506
    %v2101 = vunpack.c.h.b16 %v1506
    %v2102 = vunpack.c.l.b16 %v1507
    %v2103 = vunpack.c.h.b16 %v1507
    %v2104 = vunpack.c.l.b16 %v1508
    %v2105 = vunpack.c.h.b16 %v1508
    %v2106 = vunpack.c.l.b16 %v1509
    %v2107 = vunpack.c.h.b16 %v1509
    %v2108 = vunpack.c.l.b16 %v1510
    %v2109 = vunpack.c.h.b16 %v1510
    %v2110 = vunpack.c.l.b16 %v1511
    %v2111 = vunpack.c.h.b16 %v1511
    %v2112 = vunpack.c.l.b16 %v1512
    %v2113 = vunpack.c.h.b16 %v1512
    %v2114 = vunpack.c.l.b16 %v1513
    %v2115 = vunpack.c.h.b16 %v1513
    %v2116 = vunpack.c.l.b16 %v1514
    %v2117 = vunpack.c.h.b16 %v1514
    %v2118 = vunpack.c.l.b16 %v1515
    %v2119 = vunpack.c.h.b16 %v1515
    %v2120 = vunpack.c.l.b16 %v1516
    %v2121 = vunpack.c.h.b16 %v1516
    %v2122 = vunpack.c.l.b16 %v1517
    %v2123 = vunpack.c.h.b16 %v1517
    %v2124 = vunpack.c.l.b16 %v1518
    %v2125 = vunpack.c.h.b16 %v1518
    %v2126 = vunpack.c.l.b16 %v1519
    %v2127 = vunpack.c.h.b16 %v1519
    %v2128 = vunpack.c.l.b16 %v1520
    %v2129 = vunpack.c.h.b16 %v1520
    %v2130 = vunpack.c.l.b16 %v1521
    %v2131 = vunpack.c.h.b16 %v1521
    %v2132 = vunpack.c.l.b16 %v1522
    %v2133 = vunpack.c.h.b16 %v1522
    %v2134 = vunpack.c.l.b16 %v1523
    %v2135 = vunpack.c.h.b16 %v1523
    %v2136 = vunpack.c.l.b16 %v1524
    %v2137 = vunpack.c.h.b16 %v1524
    %v2138 = vunpack.c.l.b16 %v1525
    %v2139 = vunpack.c.h.b16 %v1525
    %v2140 = vunpack.c.l.b16 %v1526
    %v2141 = vunpack.c.h.b16 %v1526
    %v2142 = vunpack.c.l.b16 %v1527
    %v2143 = vunpack.c.h.b16 %v1527
    %v2144 = vunpack.c.l.b16 %v1528
    %v2145 = vunpack.c.h.b16 %v1528
    %v2146 = vunpack.c.l.b16 %v1529
    %v2147 = vunpack.c.h.b16 %v1529
    %v2148 = vunpack.c.l.b16 %v1530
    %v2149 = vunpack.c.h.b16 %v1530
    %v2150 = vunpack.c.l.b16 %v1531
    %v2151 = vunpack.c.h.b16 %v1531
    %v2152 = vunpack.c.l.b16 %v1532
    %v2153 = vunpack.c.h.b16 %v1532
    %v2154 = vunpack.c.l.b16 %v1533
    %v2155 = vunpack.c.h.b16 %v1533
    %v2156 = vunpack.c.l.b16 %v1534
    %v2157 = vunpack.c.h.b16 %v1534
    %v2158 = vunpack.c.l.b16 %v1535
    %v2159 = vunpack.c.h.b16 %v1535
    %v2160 = vunpack.c.l.b16 %v1536
    %v2161 = vunpack.c.h.b16 %v1536
    %v2162 = vunpack.c.l.b16 %v1537
    %v2163 = vunpack.c.h.b16 %v1537
    %v2164 = vunpack.c.l.b16 %v1538
    %v2165 = vunpack.c.h.b16 %v1538
    %v2166 = vunpack.c.l.b16 %v1539
    %v2167 = vunpack.c.h.b16 %v1539
    %v2168 = vunpack.c.l.b16 %v1540
    %v2169 = vunpack.c.h.b16 %v1540
    %v2170 = vunpack.c.l.b16 %v1541
    %v2171 = vunpack.c.h.b16 %v1541
    %v2172 = vunpack.c.l.b16 %v1542
    %v2173 = vunpack.c.h.b16 %v1542
    %v2174 = vunpack.c.l.b16 %v1543
    %v2175 = vunpack.c.h.b16 %v1543
    %v2176 = vunpack.c.l.b16 %v1544
    %v2177 = vunpack.c.h.b16 %v1544
    %v2178 = vunpack.c.l.b16 %v1545
    %v2179 = vunpack.c.h.b16 %v1545
    %v2180 = vunpack.c.l.b16 %v1546
    %v2181 = vunpack.c.h.b16 %v1546
    %v2182 = vunpack.c.l.b16 %v1547
    %v2183 = vunpack.c.h.b16 %v1547
    %v2184 = vunpack.c.l.b16 %v1548
    %v2185 = vunpack.c.h.b16 %v1548
    %v2186 = vunpack.c.l.b16 %v1549
    %v2187 = vunpack.c.h.b16 %v1549
    %v2188 = vunpack.c.l.b16 %v1550
    %v2189 = vunpack.c.h.b16 %v1550
    %v2190 = vunpack.c.l.b16 %v1551
    %v2191 = vunpack.c.h.b16 %v1551
    %v2192 = vunpack.c.l.b16 %v1552
    %v2193 = vunpack.c.h.b16 %v1552
    %v2194 = vunpack.c.l.b16 %v1553
    %v2195 = vunpack.c.h.b16 %v1553
    %v2196 = vunpack.c.l.b16 %v1554
    %v2197 = vunpack.c.h.b16 %v1554
    %v2198 = vunpack.c.l.b16 %v1555
    %v2199 = vunpack.c.h.b16 %v1555
    %v2200 = vunpack.c.l.b16 %v1556
    %v2201 = vunpack.c.h.b16 %v1556
    %v2202 = vunpack.c.l.b16 %v1557
    %v2203 = vunpack.c.h.b16 %v1557
    %v2204 = vunpack.c.l.b16 %v1558
    %v2205 = vunpack.c.h.b16 %v1558
    %v2206 = vunpack.c.l.b16 %v1559
    %v2207 = vunpack.c.h.b16 %v1559
    %v2208 = vunpack.c.l.b16 %v1560
    %v2209 = vunpack.c.h.b16 %v1560
    %v2210 = vunpack.c.l.b16 %v1561
    %v2211 = vunpack.c.h.b16 %v1561
    %v2212 = vunpack.c.l.b16 %v1562
    %v2213 = vunpack.c.h.b16 %v1562
    %v2214 = vunpack.c.l.b16 %v1563
    %v2215 = vunpack.c.h.b16 %v1563
    %v2216 = vunpack.c.l.b16 %v1564
    %v2217 = vunpack.c.h.b16 %v1564
    %v2218 = vunpack.c.l.b16 %v1565
    %v2219 = vunpack.c.h.b16 %v1565
    %v2220 = vunpack.c.l.b16 %v1566
    %v2221 = vunpack.c.h.b16 %v1566
    %v2222 = vunpack.c.l.b16 %v1567
    %v2223 = vunpack.c.h.b16 %v1567
    %v2224 = vunpack.c.l.b16 %v1568
    %v2225 = vunpack.c.h.b16 %v1568
    %v2226 = vunpack.c.l.b16 %v1569
    %v2227 = vunpack.c.h.b16 %v1569
    %v2228 = vunpack.c.l.b16 %v1570
    %v2229 = vunpack.c.h.b16 %v1570
    %v2230 = vunpack.c.l.b16 %v1571
    %v2231 = vunpack.c.h.b16 %v1571
    %v2232 = vunpack.c.l.b16 %v1572
    %v2233 = vunpack.c.h.b16 %v1572
    %v2234 = vunpack.c.l.b16 %v1573
    %v2235 = vunpack.c.h.b16 %v1573
    %v2236 = vunpack.c.l.b16 %v1574
    %v2237 = vunpack.c.h.b16 %v1574
    %v2238 = vunpack.c.l.b16 %v1575
    %v2239 = vunpack.c.h.b16 %v1575
    %v2240 = vunpack.c.l.b16 %v1576
    %v2241 = vunpack.c.h.b16 %v1576
    %v2242 = vunpack.c.l.b16 %v1577
    %v2243 = vunpack.c.h.b16 %v1577
    %v2244 = vunpack.c.l.b16 %v1578
    %v2245 = vunpack.c.h.b16 %v1578
    %v2246 = vunpack.c.l.b16 %v1579
    %v2247 = vunpack.c.h.b16 %v1579
    %v2248 = vunpack.c.l.b16 %v1580
    %v2249 = vunpack.c.h.b16 %v1580
    %v2250 = vunpack.c.l.b16 %v1581
    %v2251 = vunpack.c.h.b16 %v1581
    %v2252 = vunpack.c.l.b16 %v1582
    %v2253 = vunpack.c.h.b16 %v1582
    %v2254 = vunpack.c.l.b16 %v1583
    %v2255 = vunpack.c.h.b16 %v1583
    %v2256 = vunpack.c.l.b16 %v1584
    %v2257 = vunpack.c.h.b16 %v1584
    %v2258 = vunpack.c.l.b16 %v1585
    %v2259 = vunpack.c.h.b16 %v1585
    %v2260 = vunpack.c.l.b16 %v1586
    %v2261 = vunpack.c.h.b16 %v1586
    %v2262 = vunpack.c.l.b16 %v1587
    %v2263 = vunpack.c.h.b16 %v1587
    %v2264 = vunpack.c.l.b16 %v1588
    %v2265 = vunpack.c.h.b16 %v1588
    %v2266 = vunpack.c.l.b16 %v1589
    %v2267 = vunpack.c.h.b16 %v1589
    %v2268 = vunpack.c.l.b16 %v1590
    %v2269 = vunpack.c.h.b16 %v1590
    %v2270 = vunpack.c.l.b16 %v1591
    %v2271 = vunpack.c.h.b16 %v1591
    %v2272 = vunpack.c.l.b16 %v1592
    %v2273 = vunpack.c.h.b16 %v1592
    %v2274 = vunpack.c.l.b16 %v1593
    %v2275 = vunpack.c.h.b16 %v1593
    %v2276 = vunpack.c.l.b16 %v1594
    %v2277 = vunpack.c.h.b16 %v1594
    %v2278 = vunpack.c.l.b16 %v1595
    %v2279 = vunpack.c.h.b16 %v1595
    %v2280 = vunpack.c.l.b16 %v1596
    %v2281 = vunpack.c.h.b16 %v1596
    %v2282 = vunpack.c.l.b16 %v1597
    %v2283 = vunpack.c.h.b16 %v1597
    %v2284 = vunpack.c.l.b16 %v1598
    %v2285 = vunpack.c.h.b16 %v1598
    %v2286 = vunpack.c.l.b16 %v1599
    %v2287 = vunpack.c.h.b16 %v1599
    %v2288 = vunpack.c.l.b16 %v1600
    %v2289 = vunpack.c.h.b16 %v1600
    %v2290 = vunpack.c.l.b16 %v1601
    %v2291 = vunpack.c.h.b16 %v1601
    %v2292 = vunpack.c.l.b16 %v1602
    %v2293 = vunpack.c.h.b16 %v1602
    %v2294 = vunpack.c.l.b16 %v1603
    %v2295 = vunpack.c.h.b16 %v1603
    %v2296 = vunpack.c.l.b16 %v1604
    %v2297 = vunpack.c.h.b16 %v1604
    %v2298 = vunpack.c.l.b16 %v1605
    %v2299 = vunpack.c.h.b16 %v1605
    %v2300 = vunpack.c.l.b16 %v1606
    %v2301 = vunpack.c.h.b16 %v1606
    %v2302 = vunpack.c.l.b16 %v1607
    %v2303 = vunpack.c.h.b16 %v1607
    %v2304 = vunpack.c.l.b16 %v1608
    %v2305 = vunpack.c.h.b16 %v1608
    %v2306 = vunpack.c.l.b16 %v1609
    %v2307 = vunpack.c.h.b16 %v1609
    %v2308 = vunpack.c.l.b16 %v1610
    %v2309 = vunpack.c.h.b16 %v1610
    %v2310 = vunpack.c.l.b16 %v1611
    %v2311 = vunpack.c.h.b16 %v1611
    %v2312 = vunpack.c.l.b16 %v1612
    %v2313 = vunpack.c.h.b16 %v1612
    %v2314 = vunpack.c.l.b16 %v1613
    %v2315 = vunpack.c.h.b16 %v1613
    %v2316 = vunpack.c.l.b16 %v1614
    %v2317 = vunpack.c.h.b16 %v1614
    %v2318 = vunpack.c.l.b16 %v1615
    %v2319 = vunpack.c.h.b16 %v1615
    %v2320 = vunpack.c.l.b16 %v1616
    %v2321 = vunpack.c.h.b16 %v1616
    %v2322 = vunpack.c.l.b16 %v1617
    %v2323 = vunpack.c.h.b16 %v1617
    %v2324 = vunpack.c.l.b16 %v1618
    %v2325 = vunpack.c.h.b16 %v1618
    %v2326 = vunpack.c.l.b16 %v1619
    %v2327 = vunpack.c.h.b16 %v1619
    %v2328 = vunpack.c.l.b16 %v1620
    %v2329 = vunpack.c.h.b16 %v1620
    %v2330 = vunpack.c.l.b16 %v1621
    %v2331 = vunpack.c.h.b16 %v1621
    %v2332 = vunpack.c.l.b16 %v1622
    %v2333 = vunpack.c.h.b16 %v1622
    %v2334 = vunpack.c.l.b16 %v1623
    %v2335 = vunpack.c.h.b16 %v1623
    %v2336 = vunpack.c.l.b16 %v1624
    %v2337 = vunpack.c.h.b16 %v1624
    %v2338 = vunpack.c.l.b16 %v1625
    %v2339 = vunpack.c.h.b16 %v1625
    %v2340 = vunpack.c.l.b16 %v1626
    %v2341 = vunpack.c.h.b16 %v1626
    %v2342 = vunpack.c.l.b16 %v1627
    %v2343 = vunpack.c.h.b16 %v1627
    %v2344 = vunpack.c.l.b16 %v1628
    %v2345 = vunpack.c.h.b16 %v1628
    %v2346 = vunpack.c.l.b16 %v1629
    %v2347 = vunpack.c.h.b16 %v1629
    %v2348 = vunpack.c.l.b16 %v1630
    %v2349 = vunpack.c.h.b16 %v1630
    %v2350 = vunpack.c.l.b16 %v1631
    %v2351 = vunpack.c.h.b16 %v1631
    %v2352 = vunpack.c.l.b16 %v1632
    %v2353 = vunpack.c.h.b16 %v1632
    %v2354 = vunpack.c.l.b16 %v1633
    %v2355 = vunpack.c.h.b16 %v1633
    %v2356 = vunpack.c.l.b16 %v1634
    %v2357 = vunpack.c.h.b16 %v1634
    %v2358 = vunpack.c.l.b16 %v1635
    %v2359 = vunpack.c.h.b16 %v1635
    %v2360 = vunpack.c.l.b16 %v1636
    %v2361 = vunpack.c.h.b16 %v1636
    %v2362 = vunpack.c.l.b16 %v1637
    %v2363 = vunpack.c.h.b16 %v1637
    %v2364 = vunpack.c.l.b16 %v1638
    %v2365 = vunpack.c.h.b16 %v1638
    %v2366 = vunpack.c.l.b16 %v1639
    %v2367 = vunpack.c.h.b16 %v1639
    %v2368 = vunpack.c.l.b16 %v1640
    %v2369 = vunpack.c.h.b16 %v1640
    %v2370 = vunpack.c.l.b16 %v1641
    %v2371 = vunpack.c.h.b16 %v1641
    %v2372 = vunpack.c.l.b16 %v1642
    %v2373 = vunpack.c.h.b16 %v1642
    %v2374 = vunpack.c.l.b16 %v1643
    %v2375 = vunpack.c.h.b16 %v1643
    %v2376 = vunpack.c.l.b16 %v1644
    %v2377 = vunpack.c.h.b16 %v1644
    %v2378 = vunpack.c.l.b16 %v1645
    %v2379 = vunpack.c.h.b16 %v1645
    %v2380 = vunpack.c.l.b16 %v1646
    %v2381 = vunpack.c.h.b16 %v1646
    %v2382 = vunpack.c.l.b16 %v1647
    %v2383 = vunpack.c.h.b16 %v1647
    %v2384 = vunpack.c.l.b16 %v1648
    %v2385 = vunpack.c.h.b16 %v1648
    %v2386 = vunpack.c.l.b16 %v1649
    %v2387 = vunpack.c.h.b16 %v1649
    %v2388 = vunpack.c.l.b16 %v1650
    %v2389 = vunpack.c.h.b16 %v1650
    %v2390 = vunpack.c.l.b16 %v1651
    %v2391 = vunpack.c.h.b16 %v1651
    %v2392 = vunpack.c.l.b16 %v1652
    %v2393 = vunpack.c.h.b16 %v1652
    %v2394 = vunpack.c.l.b16 %v1653
    %v2395 = vunpack.c.h.b16 %v1653
    %v2396 = vunpack.c.l.b16 %v1654
    %v2397 = vunpack.c.h.b16 %v1654
    %v2398 = vunpack.c.l.b16 %v1655
    %v2399 = vunpack.c.h.b16 %v1655
    %v2400 = vunpack.c.l.b16 %v1656
    %v2401 = vunpack.c.h.b16 %v1656
    %v2402 = vunpack.c.l.b16 %v1657
    %v2403 = vunpack.c.h.b16 %v1657
    %v2404 = vunpack.c.l.b16 %v1658
    %v2405 = vunpack.c.h.b16 %v1658
    %v2406 = vunpack.c.l.b16 %v1659
    %v2407 = vunpack.c.h.b16 %v1659
    %v2408 = vunpack.c.l.b16 %v1660
    %v2409 = vunpack.c.h.b16 %v1660
    %v2410 = vunpack.c.l.b16 %v1661
    %v2411 = vunpack.c.h.b16 %v1661
    %v2412 = vunpack.c.l.b16 %v1662
    %v2413 = vunpack.c.h.b16 %v1662
    %v2414 = vunpack.c.l.b16 %v1663
    %v2415 = vunpack.c.h.b16 %v1663
    %v2416 = vunpack.c.l.b16 %v1664
    %v2417 = vunpack.c.h.b16 %v1664
    %v2418 = vunpack.c.l.b16 %v1665
    %v2419 = vunpack.c.h.b16 %v1665
    %v2420 = vunpack.c.l.b16 %v1666
    %v2421 = vunpack.c.h.b16 %v1666
    %v2422 = vunpack.c.l.b16 %v1667
    %v2423 = vunpack.c.h.b16 %v1667
    %v2424 = vunpack.c.l.b16 %v1668
    %v2425 = vunpack.c.h.b16 %v1668
    %v2426 = vunpack.c.l.b16 %v1669
    %v2427 = vunpack.c.h.b16 %v1669
    %v2428 = vunpack.c.l.b16 %v1670
    %v2429 = vunpack.c.h.b16 %v1670
    %v2430 = vunpack.c.l.b16 %v1671
    %v2431 = vunpack.c.h.b16 %v1671
    %v2432 = vunpack.c.l.b16 %v1672
    %v2433 = vunpack.c.h.b16 %v1672
    %v2434 = vunpack.c.l.b16 %v1673
    %v2435 = vunpack.c.h.b16 %v1673
    %v2436 = vunpack.c.l.b16 %v1674
    %v2437 = vunpack.c.h.b16 %v1674
    %v2438 = vunpack.c.l.b16 %v1675
    %v2439 = vunpack.c.h.b16 %v1675
    %v2440 = vunpack.c.l.b16 %v1676
    %v2441 = vunpack.c.h.b16 %v1676
    %v2442 = vunpack.c.l.b16 %v1677
    %v2443 = vunpack.c.h.b16 %v1677
    %v2444 = vunpack.c.l.b16 %v1678
    %v2445 = vunpack.c.h.b16 %v1678
    %v2446 = vunpack.c.l.b16 %v1679
    %v2447 = vunpack.c.h.b16 %v1679
    %v2448 = vunpack.c.l.b16 %v1680
    %v2449 = vunpack.c.h.b16 %v1680
    %v2450 = vunpack.c.l.b16 %v1681
    %v2451 = vunpack.c.h.b16 %v1681
    %v2452 = vunpack.c.l.b16 %v1682
    %v2453 = vunpack.c.h.b16 %v1682
    %v2454 = vunpack.c.l.b16 %v1683
    %v2455 = vunpack.c.h.b16 %v1683
    %v2456 = vunpack.c.l.b16 %v1684
    %v2457 = vunpack.c.h.b16 %v1684
    %v2458 = vunpack.c.l.b16 %v1685
    %v2459 = vunpack.c.h.b16 %v1685
    %v2460 = vunpack.c.l.b16 %v1686
    %v2461 = vunpack.c.h.b16 %v1686
    %v2462 = vunpack.c.l.b16 %v1687
    %v2463 = vunpack.c.h.b16 %v1687
    %v2464 = vunpack.c.l.b16 %v1688
    %v2465 = vunpack.c.h.b16 %v1688
    %v2466 = vunpack.c.l.b16 %v1689
    %v2467 = vunpack.c.h.b16 %v1689
    %v2468 = vunpack.c.l.b16 %v1690
    %v2469 = vunpack.c.h.b16 %v1690
    %v2470 = vunpack.c.l.b16 %v1691
    %v2471 = vunpack.c.h.b16 %v1691
    %v2472 = vunpack.c.l.b16 %v1692
    %v2473 = vunpack.c.h.b16 %v1692
    %v2474 = vunpack.c.l.b16 %v1693
    %v2475 = vunpack.c.h.b16 %v1693
    %v2476 = vunpack.c.l.b16 %v1694
    %v2477 = vunpack.c.h.b16 %v1694
    %v2478 = vunpack.c.l.b16 %v1695
    %v2479 = vunpack.c.h.b16 %v1695
    %v2480 = vunpack.c.l.b16 %v1696
    %v2481 = vunpack.c.h.b16 %v1696
    %v2482 = vunpack.c.l.b16 %v1697
    %v2483 = vunpack.c.h.b16 %v1697
    %v2484 = vunpack.c.l.b16 %v1698
    %v2485 = vunpack.c.h.b16 %v1698
    %v2486 = vunpack.c.l.b16 %v1699
    %v2487 = vunpack.c.h.b16 %v1699
    %v2488 = vunpack.c.l.b16 %v1700
    %v2489 = vunpack.c.h.b16 %v1700
    %v2490 = vunpack.c.l.b16 %v1701
    %v2491 = vunpack.c.h.b16 %v1701
    %v2492 = vunpack.c.l.b16 %v1702
    %v2493 = vunpack.c.h.b16 %v1702
    %v2494 = vunpack.c.l.b16 %v1703
    %v2495 = vunpack.c.h.b16 %v1703
    %v2496 = vunpack.c.l.b16 %v1704
    %v2497 = vunpack.c.h.b16 %v1704
    %v2498 = vunpack.c.l.b16 %v1705
    %v2499 = vunpack.c.h.b16 %v1705
    %v2500 = vunpack.c.l.b16 %v1706
    %v2501 = vunpack.c.h.b16 %v1706
    %v2502 = vunpack.c.l.b16 %v1707
    %v2503 = vunpack.c.h.b16 %v1707
    %v2504 = vunpack.c.l.b16 %v1708
    %v2505 = vunpack.c.h.b16 %v1708
    %v2506 = vunpack.c.l.b16 %v1709
    %v2507 = vunpack.c.h.b16 %v1709
    %v2508 = vunpack.c.l.b16 %v1710
    %v2509 = vunpack.c.h.b16 %v1710
    %v2510 = vunpack.c.l.b16 %v1711
    %v2511 = vunpack.c.h.b16 %v1711
    %v2512 = vunpack.c.l.b16 %v1712
    %v2513 = vunpack.c.h.b16 %v1712
    %v2514 = vunpack.c.l.b16 %v1713
    %v2515 = vunpack.c.h.b16 %v1713
    %v2516 = vunpack.c.l.b16 %v1714
    %v2517 = vunpack.c.h.b16 %v1714
    %v2518 = vunpack.c.l.b16 %v1715
    %v2519 = vunpack.c.h.b16 %v1715
    %v2520 = vunpack.c.l.b16 %v1716
    %v2521 = vunpack.c.h.b16 %v1716
    %v2522 = vunpack.c.l.b16 %v1717
    %v2523 = vunpack.c.h.b16 %v1717
    %v2524 = vunpack.c.l.b16 %v1718
    %v2525 = vunpack.c.h.b16 %v1718
    %v2526 = vunpack.c.l.b16 %v1719
    %v2527 = vunpack.c.h.b16 %v1719
    %v2528 = vunpack.c.l.b16 %v1720
    %v2529 = vunpack.c.h.b16 %v1720
    %v2530 = vunpack.c.l.b16 %v1721
    %v2531 = vunpack.c.h.b16 %v1721
    %v2532 = vpack.c.b16 %v2028, %v2020
    %v2533 = vpack.c.b16 %v2029, %v2021
    %v2534 = vpack.c.b16 %v2030, %v2022
    %v2535 = vpack.c.b16 %v2031, %v2023
    %v2536 = vpack.c.b16 %v2032, %v2024
    %v2537 = vpack.c.b16 %v2033, %v2025
    %v2538 = vpack.c.b16 %v2034, %v2026
    %v2539 = vpack.c.b16 %v2035, %v2027
    %v2540 = vpack.c.b16 %v2044, %v2036
    %v2541 = vpack.c.b16 %v2045, %v2037
    %v2542 = vpack.c.b16 %v2046, %v2038
    %v2543 = vpack.c.b16 %v2047, %v2039
    %v2544 = vpack.c.b16 %v2048, %v2040
    %v2545 = vpack.c.b16 %v2049, %v2041
    %v2546 = vpack.c.b16 %v2050, %v2042
    %v2547 = vpack.c.b16 %v2051, %v2043
    %v2548 = vpack.c.b16 %v2060, %v2052
    %v2549 = vpack.c.b16 %v2061, %v2053
    %v2550 = vpack.c.b16 %v2062, %v2054
    %v2551 = vpack.c.b16 %v2063, %v2055
    %v2552 = vpack.c.b16 %v2064, %v2056
    %v2553 = vpack.c.b16 %v2065, %v2057
    %v2554 = vpack.c.b16 %v2066, %v2058
    %v2555 = vpack.c.b16 %v2067, %v2059
    %v2556 = vpack.c.b16 %v2076, %v2068
    %v2557 = vpack.c.b16 %v2077, %v2069
    %v2558 = vpack.c.b16 %v2078, %v2070
    %v2559 = vpack.c.b16 %v2079, %v2071
    %v2560 = vpack.c.b16 %v2080, %v2072
    %v2561 = vpack.c.b16 %v2081, %v2073
    %v2562 = vpack.c.b16 %v2082, %v2074
    %v2563 = vpack.c.b16 %v2083, %v2075
    %v2564 = vpack.c.b16 %v2092, %v2084
    %v2565 = vpack.c.b16 %v2093, %v2085
    %v2566 = vpack.c.b16 %v2094, %v2086
    %v2567 = vpack.c.b16 %v2095, %v2087
    %v2568 = vpack.c.b16 %v2096, %v2088
    %v2569 = vpack.c.b16 %v2097, %v2089
    %v2570 = vpack.c.b16 %v2098, %v2090
    %v2571 = vpack.c.b16 %v2099, %v2091
    %v2572 = vpack.c.b16 %v2108, %v2100
    %v2573 = vpack.c.b16 %v2109, %v2101
    %v2574 = vpack.c.b16 %v2110, %v2102
    %v2575 = vpack.c.b16 %v2111, %v2103
    %v2576 = vpack.c.b16 %v2112, %v2104
    %v2577 = vpack.c.b16 %v2113, %v2105
    %v2578 = vpack.c.b16 %v2114, %v2106
    %v2579 = vpack.c.b16 %v2115, %v2107
    %v2580 = vpack.c.b16 %v2124, %v2116
    %v2581 = vpack.c.b16 %v2125, %v2117
    %v2582 = vpack.c.b16 %v2126, %v2118
    %v2583 = vpack.c.b16 %v2127, %v2119
    %v2584 = vpack.c.b16 %v2128, %v2120
    %v2585 = vpack.c.b16 %v2129, %v2121
    %v2586 = vpack.c.b16 %v2130, %v2122
    %v2587 = vpack.c.b16 %v2131, %v2123
    %v2588 = vpack.c.b16 %v2140, %v2132
    %v2589 = vpack.c.b16 %v2141, %v2133
    %v2590 = vpack.c.b16 %v2142, %v2134
    %v2591 = vpack.c.b16 %v2143, %v2135
    %v2592 = vpack.c.b16 %v2144, %v2136
    %v2593 = vpack.c.b16 %v2145, %v2137
    %v2594 = vpack.c.b16 %v2146, %v2138
    %v2595 = vpack.c.b16 %v2147, %v2139
    %v2596 = vpack.c.b16 %v2156, %v2148
    %v2597 = vpack.c.b16 %v2157, %v2149
    %v2598 = vpack.c.b16 %v2158, %v2150
    %v2599 = vpack.c.b16 %v2159, %v2151
    %v2600 = vpack.c.b16 %v2160, %v2152
    %v2601 = vpack.c.b16 %v2161, %v2153
    %v2602 = vpack.c.b16 %v2162, %v2154
    %v2603 = vpack.c.b16 %v2163, %v2155
    %v2604 = vpack.c.b16 %v2172, %v2164
    %v2605 = vpack.c.b16 %v2173, %v2165
    %v2606 = vpack.c.b16 %v2174, %v2166
    %v2607 = vpack.c.b16 %v2175, %v2167
    %v2608 = vpack.c.b16 %v2176, %v2168
    %v2609 = vpack.c.b16 %v2177, %v2169
    %v2610 = vpack.c.b16 %v2178, %v2170
    %v2611 = vpack.c.b16 %v2179, %v2171
    %v2612 = vpack.c.b16 %v2188, %v2180
    %v2613 = vpack.c.b16 %v2189, %v2181
    %v2614 = vpack.c.b16 %v2190, %v2182
    %v2615 = vpack.c.b16 %v2191, %v2183
    %v2616 = vpack.c.b16 %v2192, %v2184
    %v2617 = vpack.c.b16 %v2193, %v2185
    %v2618 = vpack.c.b16 %v2194, %v2186
    %v2619 = vpack.c.b16 %v2195, %v2187
    %v2620 = vpack.c.b16 %v2204, %v2196
    %v2621 = vpack.c.b16 %v2205, %v2197
    %v2622 = vpack.c.b16 %v2206, %v2198
    %v2623 = vpack.c.b16 %v2207, %v2199
    %v2624 = vpack.c.b16 %v2208, %v2200
    %v2625 = vpack.c.b16 %v2209, %v2201
    %v2626 = vpack.c.b16 %v2210, %v2202
    %v2627 = vpack.c.b16 %v2211, %v2203
    %v2628 = vpack.c.b16 %v2220, %v2212
    %v2629 = vpack.c.b16 %v2221, %v2213
    %v2630 = vpack.c.b16 %v2222, %v2214
    %v2631 = vpack.c.b16 %v2223, %v2215
    %v2632 = vpack.c.b16 %v2224, %v2216
    %v2633 = vpack.c.b16 %v2225, %v2217
    %v2634 = vpack.c.b16 %v2226, %v2218
    %v2635 = vpack.c.b16 %v2227, %v2219
    %v2636 = vpack.c.b16 %v2236, %v2228
    %v2637 = vpack.c.b16 %v2237, %v2229
    %v2638 = vpack.c.b16 %v2238, %v2230
    %v2639 = vpack.c.b16 %v2239, %v2231
    %v2640 = vpack.c.b16 %v2240, %v2232
    %v2641 = vpack.c.b16 %v2241, %v2233
    %v2642 = vpack.c.b16 %v2242, %v2234
    %v2643 = vpack.c.b16 %v2243, %v2235
    %v2644 = vpack.c.b16 %v2252, %v2244
    %v2645 = vpack.c.b16 %v2253, %v2245
    %v2646 = vpack.c.b16 %v2254, %v2246
    %v2647 = vpack.c.b16 %v2255, %v2247
    %v2648 = vpack.c.b16 %v2256, %v2248
    %v2649 = vpack.c.b16 %v2257, %v2249
    %v2650 = vpack.c.b16 %v2258, %v2250
    %v2651 = vpack.c.b16 %v2259, %v2251
    %v2652 = vpack.c.b16 %v2268, %v2260
    %v2653 = vpack.c.b16 %v2269, %v2261
    %v2654 = vpack.c.b16 %v2270, %v2262
    %v2655 = vpack.c.b16 %v2271, %v2263
    %v2656 = vpack.c.b16 %v2272, %v2264
    %v2657 = vpack.c.b16 %v2273, %v2265
    %v2658 = vpack.c.b16 %v2274, %v2266
    %v2659 = vpack.c.b16 %v2275, %v2267
    %v2660 = vpack.c.b16 %v2284, %v2276
    %v2661 = vpack.c.b16 %v2285, %v2277
    %v2662 = vpack.c.b16 %v2286, %v2278
    %v2663 = vpack.c.b16 %v2287, %v2279
    %v2664 = vpack.c.b16 %v2288, %v2280
    %v2665 = vpack.c.b16 %v2289, %v2281
    %v2666 = vpack.c.b16 %v2290, %v2282
    %v2667 = vpack.c.b16 %v2291, %v2283
    %v2668 = vpack.c.b16 %v2300, %v2292
    %v2669 = vpack.c.b16 %v2301, %v2293
    %v2670 = vpack.c.b16 %v2302, %v2294
    %v2671 = vpack.c.b16 %v2303, %v2295
    %v2672 = vpack.c.b16 %v2304, %v2296
    %v2673 = vpack.c.b16 %v2305, %v2297
    %v2674 = vpack.c.b16 %v2306, %v2298
    %v2675 = vpack.c.b16 %v2307, %v2299
    %v2676 = vpack.c.b16 %v2316, %v2308
    %v2677 = vpack.c.b16 %v2317, %v2309
    %v2678 = vpack.c.b16 %v2318, %v2310
    %v2679 = vpack.c.b16 %v2319, %v2311
    %v2680 = vpack.c.b16 %v2320, %v2312
    %v2681 = vpack.c.b16 %v2321, %v2313
    %v2682 = vpack.c.b16 %v2322, %v2314
    %v2683 = vpack.c.b16 %v2323, %v2315
    %v2684 = vpack.c.b16 %v2332, %v2324
    %v2685 = vpack.c.b16 %v2333, %v2325
    %v2686 = vpack.c.b16 %v2334, %v2326
    %v2687 = vpack.c.b16 %v2335, %v2327
    %v2688 = vpack.c.b16 %v2336, %v2328
    %v2689 = vpack.c.b16 %v2337, %v2329
    %v2690 = vpack.c.b16 %v2338, %v2330
    %v2691 = vpack.c.b16 %v2339, %v2331
    %v2692 = vpack.c.b16 %v2348, %v2340
    %v2693 = vpack.c.b16 %v2349, %v2341
    %v2694 = vpack.c.b16 %v2350, %v2342
    %v2695 = vpack.c.b16 %v2351, %v2343
    %v2696 = vpack.c.b16 %v2352, %v2344
    %v2697 = vpack.c.b16 %v2353, %v2345
    %v2698 = vpack.c.b16 %v2354, %v2346
    %v2699 = vpack.c.b16 %v2355, %v2347
    %v2700 = vpack.c.b16 %v2364, %v2356
    %v2701 = vpack.c.b16 %v2365, %v2357
    %v2702 = vpack.c.b16 %v2366, %v2358
    %v2703 = vpack.c.b16 %v2367, %v2359
    %v2704 = vpack.c.b16 %v2368, %v2360
    %v2705 = vpack.c.b16 %v2369, %v2361
    %v2706 = vpack.c.b16 %v2370, %v2362
    %v2707 = vpack.c.b16 %v2371, %v2363
    %v2708 = vpack.c.b16 %v2380, %v2372
    %v2709 = vpack.c.b16 %v2381, %v2373
    %v2710 = vpack.c.b16 %v2382, %v2374
    %v2711 = vpack.c.b16 %v2383, %v2375
    %v2712 = vpack.c.b16 %v2384, %v2376
    %v2713 = vpack.c.b16 %v2385, %v2377
    %v2714 = vpack.c.b16 %v2386, %v2378
    %v2715 = vpack.c.b16 %v2387, %v2379
    %v2716 = vpack.c.b16 %v2396, %v2388
    %v2717 = vpack.c.b16 %v2397, %v2389
    %v2718 = vpack.c.b16 %v2398, %v2390
    %v2719 = vpack.c.b16 %v2399, %v2391
    %v2720 = vpack.c.b16 %v2400, %v2392
    %v2721 = vpack.c.b16 %v2401, %v2393
    %v2722 = vpack.c.b16 %v2402, %v2394
    %v2723 = vpack.c.b16 %v2403, %v2395
    %v2724 = vpack.c.b16 %v2412, %v2404
    %v2725 = vpack.c.b16 %v2413, %v2405
    %v2726 = vpack.c.b16 %v2414, %v2406
    %v2727 = vpack.c.b16 %v2415, %v2407
    %v2728 = vpack.c.b16 %v2416, %v2408
    %v2729 = vpack.c.b16 %v2417, %v2409
    %v2730 = vpack.c.b16 %v2418, %v2410
    %v2731 = vpack.c.b16 %v2419, %v2411
    %v2732 = vpack.c.b16 %v2428, %v2420
    %v2733 = vpack.c.b16 %v2429, %v2421
    %v2734 = vpack.c.b16 %v2430, %v2422
    %v2735 = vpack.c.b16 %v2431, %v2423
    %v2736 = vpack.c.b16 %v2432, %v2424
    %v2737 = vpack.c.b16 %v2433, %v2425
    %v2738 = vpack.c.b16 %v2434, %v2426
    %v2739 = vpack.c.b16 %v2435, %v2427
    %v2740 = vpack.c.b16 %v2444, %v2436
    %v2741 = vpack.c.b16 %v2445, %v2437
    %v2742 = vpack.c.b16 %v2446, %v2438
    %v2743 = vpack.c.b16 %v2447, %v2439
    %v2744 = vpack.c.b16 %v2448, %v2440
    %v2745 = vpack.c.b16 %v2449, %v2441
    %v2746 = vpack.c.b16 %v2450, %v2442
    %v2747 = vpack.c.b16 %v2451, %v2443
    %v2748 = vpack.c.b16 %v2460, %v2452
    %v2749 = vpack.c.b16 %v2461, %v2453
    %v2750 = vpack.c.b16 %v2462, %v2454
    %v2751 = vpack.c.b16 %v2463, %v2455
    %v2752 = vpack.c.b16 %v2464, %v2456
    %v2753 = vpack.c.b16 %v2465, %v2457
    %v2754 = vpack.c.b16 %v2466, %v2458
    %v2755 = vpack.c.b16 %v2467, %v2459
    %v2756 = vpack.c.b16 %v2476, %v2468
    %v2757 = vpack.c.b16 %v2477, %v2469
    %v2758 = vpack.c.b16 %v2478, %v2470
    %v2759 = vpack.c.b16 %v2479, %v2471
    %v2760 = vpack.c.b16 %v2480, %v2472
    %v2761 = vpack.c.b16 %v2481, %v2473
    %v2762 = vpack.c.b16 %v2482, %v2474
    %v2763 = vpack.c.b16 %v2483, %v2475
    %v2764 = vpack.c.b16 %v2492, %v2484
    %v2765 = vpack.c.b16 %v2493, %v2485
    %v2766 = vpack.c.b16 %v2494, %v2486
    %v2767 = vpack.c.b16 %v2495, %v2487
    %v2768 = vpack.c.b16 %v2496, %v2488
    %v2769 = vpack.c.b16 %v2497, %v2489
    %v2770 = vpack.c.b16 %v2498, %v2490
    %v2771 = vpack.c.b16 %v2499, %v2491
    %v2772 = vpack.c.b16 %v2508, %v2500
    %v2773 = vpack.c.b16 %v2509, %v2501
    %v2774 = vpack.c.b16 %v2510, %v2502
    %v2775 = vpack.c.b16 %v2511, %v2503
    %v2776 = vpack.c.b16 %v2512, %v2504
    %v2777 = vpack.c.b16 %v2513, %v2505
    %v2778 = vpack.c.b16 %v2514, %v2506
    %v2779 = vpack.c.b16 %v2515, %v2507
    %v2780 = vpack.c.b16 %v2524, %v2516
    %v2781 = vpack.c.b16 %v2525, %v2517
    %v2782 = vpack.c.b16 %v2526, %v2518
    %v2783 = vpack.c.b16 %v2527, %v2519
    %v2784 = vpack.c.b16 %v2528, %v2520
    %v2785 = vpack.c.b16 %v2529, %v2521
    %v2786 = vpack.c.b16 %v2530, %v2522
    %v2787 = vpack.c.b16 %v2531, %v2523
    %3044 = vmatprep.subr.bf16.mxu0 %v2533
    %3045 = vmatpush1.bf16.msra.mxu0 %v2532
    %3046 = vmatprep.subr.bf16.mxu0 %v2541
    %3047 = vmatpush1.bf16.msra.mxu0 %v2540
    %3048 = vmatprep.subr.bf16.mxu0 %v2549
    %3049 = vmatpush1.bf16.msra.mxu0 %v2548
    %3050 = vmatprep.subr.bf16.mxu0 %v2557
    %3051 = vmatpush1.bf16.msra.mxu0 %v2556
    %3052 = vmatprep.subr.bf16.mxu0 %v2565
    %3053 = vmatpush1.bf16.msra.mxu0 %v2564
    %3054 = vmatprep.subr.bf16.mxu0 %v2573
    %3055 = vmatpush1.bf16.msra.mxu0 %v2572
    %3056 = vmatprep.subr.bf16.mxu0 %v2581
    %3057 = vmatpush1.bf16.msra.mxu0 %v2580
    %3058 = vmatprep.subr.bf16.mxu0 %v2589
    %3059 = vmatpush1.bf16.msra.mxu0 %v2588
    %3060 = vmatprep.subr.bf16.mxu0 %v2597
    %3061 = vmatpush1.bf16.msra.mxu0 %v2596
    %3062 = vmatprep.subr.bf16.mxu0 %v2605
    %3063 = vmatpush1.bf16.msra.mxu0 %v2604
    %3064 = vmatprep.subr.bf16.mxu0 %v2613
    %3065 = vmatpush1.bf16.msra.mxu0 %v2612
    %3066 = vmatprep.subr.bf16.mxu0 %v2621
    %3067 = vmatpush1.bf16.msra.mxu0 %v2620
    %3068 = vmatprep.subr.bf16.mxu0 %v2629
    %3069 = vmatpush1.bf16.msra.mxu0 %v2628
    %3070 = vmatprep.subr.bf16.mxu0 %v2637
    %3071 = vmatpush1.bf16.msra.mxu0 %v2636
    %3072 = vmatprep.subr.bf16.mxu0 %v2645
    %3073 = vmatpush1.bf16.msra.mxu0 %v2644
    %3074 = vmatprep.subr.bf16.mxu0 %v2653
    %3075 = vmatpush1.bf16.msra.mxu0 %v2652
    %3076 = vmatprep.mubr.bf16.mxu0 %v1463
    %3077 = vmatmul.mubr.bf16.gmra.mrb[0].mxu0 %v1462
    %v3078 = vpop.f32.mrb[0].mxu0
    %v3079 = vadd.f32 %v1727, %v3078
    %v3080 = vpop.f32.mrb[0].mxu0
    %v3081 = vadd.f32 %v1731, %v3080
    %v3082 = vpop.f32.mrb[0].mxu0
    %v3083 = vpop.f32.mrb[0].mxu0
    %3084 = vdwg.mxu0
    %3085 = vmatprep.subr.bf16.mxu0 %v2661
    %3086 = vmatpush1.bf16.msra.mxu0 %v2660
    %3087 = vmatprep.subr.bf16.mxu0 %v2669
    %3088 = vmatpush1.bf16.msra.mxu0 %v2668
    %3089 = vmatprep.subr.bf16.mxu0 %v2677
    %3090 = vmatpush1.bf16.msra.mxu0 %v2676
    %3091 = vmatprep.subr.bf16.mxu0 %v2685
    %3092 = vmatpush1.bf16.msra.mxu0 %v2684
    %3093 = vmatprep.subr.bf16.mxu0 %v2693
    %3094 = vmatpush1.bf16.msra.mxu0 %v2692
    %3095 = vmatprep.subr.bf16.mxu0 %v2701
    %3096 = vmatpush1.bf16.msra.mxu0 %v2700
    %3097 = vmatprep.subr.bf16.mxu0 %v2709
    %3098 = vmatpush1.bf16.msra.mxu0 %v2708
    %3099 = vmatprep.subr.bf16.mxu0 %v2717
    %3100 = vmatpush1.bf16.msra.mxu0 %v2716
    %3101 = vmatprep.subr.bf16.mxu0 %v2725
    %3102 = vmatpush1.bf16.msra.mxu0 %v2724
    %3103 = vmatprep.subr.bf16.mxu0 %v2733
    %3104 = vmatpush1.bf16.msra.mxu0 %v2732
    %3105 = vmatprep.subr.bf16.mxu0 %v2741
    %3106 = vmatpush1.bf16.msra.mxu0 %v2740
    %3107 = vmatprep.subr.bf16.mxu0 %v2749
    %3108 = vmatpush1.bf16.msra.mxu0 %v2748
    %3109 = vmatprep.subr.bf16.mxu0 %v2757
    %3110 = vmatpush1.bf16.msra.mxu0 %v2756
    %3111 = vmatprep.subr.bf16.mxu0 %v2765
    %3112 = vmatpush1.bf16.msra.mxu0 %v2764
    %3113 = vmatprep.subr.bf16.mxu0 %v2773
    %3114 = vmatpush1.bf16.msra.mxu0 %v2772
    %3115 = vmatprep.subr.bf16.mxu0 %v2781
    %3116 = vmatpush1.bf16.msra.mxu0 %v2780
    %3117 = vmatprep.mubr.bf16.mxu0 %v1465
    %3118 = vmatmul.mubr.bf16.gmra.mrb[0].mxu0 %v1464
    %v3119 = vpop.f32.mrb[0].mxu0
    %v3120 = vadd.f32 %v3079, %v3119
    %v3121 = vpop.f32.mrb[0].mxu0
    %v3122 = vadd.f32 %v3081, %v3121
    %v3123 = vpop.f32.mrb[0].mxu0
    %v3124 = vpop.f32.mrb[0].mxu0
    %3125 = vdwg.mxu0
    %3126 = vmatprep.subr.bf16.mxu0 %v2535
    %3127 = vmatpush1.bf16.msra.mxu0 %v2534
    %3128 = vmatprep.subr.bf16.mxu0 %v2543
    %3129 = vmatpush1.bf16.msra.mxu0 %v2542
    %3130 = vmatprep.subr.bf16.mxu0 %v2551
    %3131 = vmatpush1.bf16.msra.mxu0 %v2550
    %3132 = vmatprep.subr.bf16.mxu0 %v2559
    %3133 = vmatpush1.bf16.msra.mxu0 %v2558
    %3134 = vmatprep.subr.bf16.mxu0 %v2567
    %3135 = vmatpush1.bf16.msra.mxu0 %v2566
    %3136 = vmatprep.subr.bf16.mxu0 %v2575
    %3137 = vmatpush1.bf16.msra.mxu0 %v2574
    %3138 = vmatprep.subr.bf16.mxu0 %v2583
    %3139 = vmatpush1.bf16.msra.mxu0 %v2582
    %3140 = vmatprep.subr.bf16.mxu0 %v2591
    %3141 = vmatpush1.bf16.msra.mxu0 %v2590
    %3142 = vmatprep.subr.bf16.mxu0 %v2599
    %3143 = vmatpush1.bf16.msra.mxu0 %v2598
    %3144 = vmatprep.subr.bf16.mxu0 %v2607
    %3145 = vmatpush1.bf16.msra.mxu0 %v2606
    %3146 = vmatprep.subr.bf16.mxu0 %v2615
    %3147 = vmatpush1.bf16.msra.mxu0 %v2614
    %3148 = vmatprep.subr.bf16.mxu0 %v2623
    %3149 = vmatpush1.bf16.msra.mxu0 %v2622
    %3150 = vmatprep.subr.bf16.mxu0 %v2631
    %3151 = vmatpush1.bf16.msra.mxu0 %v2630
    %3152 = vmatprep.subr.bf16.mxu0 %v2639
    %3153 = vmatpush1.bf16.msra.mxu0 %v2638
    %3154 = vmatprep.subr.bf16.mxu0 %v2647
    %3155 = vmatpush1.bf16.msra.mxu0 %v2646
    %3156 = vmatprep.subr.bf16.mxu0 %v2655
    %3157 = vmatpush1.bf16.msra.mxu0 %v2654
    %3158 = vmatprep.mubr.bf16.mxu0 %v1463
    %3159 = vmatmul.mubr.bf16.gmra.mrb[0].mxu0 %v1462
    %v3160 = vpop.f32.mrb[0].mxu0
    %v3161 = vadd.f32 %v1735, %v3160
    %v3162 = vpop.f32.mrb[0].mxu0
    %v3163 = vadd.f32 %v1739, %v3162
    %v3164 = vpop.f32.mrb[0].mxu0
    %v3165 = vpop.f32.mrb[0].mxu0
    %3166 = vdwg.mxu0
    %3167 = vmatprep.subr.bf16.mxu0 %v2663
    %3168 = vmatpush1.bf16.msra.mxu0 %v2662
    %3169 = vmatprep.subr.bf16.mxu0 %v2671
    %3170 = vmatpush1.bf16.msra.mxu0 %v2670
    %3171 = vmatprep.subr.bf16.mxu0 %v2679
    %3172 = vmatpush1.bf16.msra.mxu0 %v2678
    %3173 = vmatprep.subr.bf16.mxu0 %v2687
    %3174 = vmatpush1.bf16.msra.mxu0 %v2686
    %3175 = vmatprep.subr.bf16.mxu0 %v2695
    %3176 = vmatpush1.bf16.msra.mxu0 %v2694
    %3177 = vmatprep.subr.bf16.mxu0 %v2703
    %3178 = vmatpush1.bf16.msra.mxu0 %v2702
    %3179 = vmatprep.subr.bf16.mxu0 %v2711
    %3180 = vmatpush1.bf16.msra.mxu0 %v2710
    %3181 = vmatprep.subr.bf16.mxu0 %v2719
    %3182 = vmatpush1.bf16.msra.mxu0 %v2718
    %3183 = vmatprep.subr.bf16.mxu0 %v2727
    %3184 = vmatpush1.bf16.msra.mxu0 %v2726
    %3185 = vmatprep.subr.bf16.mxu0 %v2735
    %3186 = vmatpush1.bf16.msra.mxu0 %v2734
    %3187 = vmatprep.subr.bf16.mxu0 %v2743
    %3188 = vmatpush1.bf16.msra.mxu0 %v2742
    %3189 = vmatprep.subr.bf16.mxu0 %v2751
    %3190 = vmatpush1.bf16.msra.mxu0 %v2750
    %3191 = vmatprep.subr.bf16.mxu0 %v2759
    %3192 = vmatpush1.bf16.msra.mxu0 %v2758
    %3193 = vmatprep.subr.bf16.mxu0 %v2767
    %3194 = vmatpush1.bf16.msra.mxu0 %v2766
    %3195 = vmatprep.subr.bf16.mxu0 %v2775
    %3196 = vmatpush1.bf16.msra.mxu0 %v2774
    %3197 = vmatprep.subr.bf16.mxu0 %v2783
    %3198 = vmatpush1.bf16.msra.mxu0 %v2782
    %3199 = vmatprep.mubr.bf16.mxu0 %v1465
    %3200 = vmatmul.mubr.bf16.gmra.mrb[0].mxu0 %v1464
    %v3201 = vpop.f32.mrb[0].mxu0
    %v3202 = vadd.f32 %v3161, %v3201
    %v3203 = vpop.f32.mrb[0].mxu0
    %v3204 = vadd.f32 %v3163, %v3203
    %v3205 = vpop.f32.mrb[0].mxu0
    %v3206 = vpop.f32.mrb[0].mxu0
    %3207 = vdwg.mxu0
    %3208 = vmatprep.subr.bf16.mxu0 %v2537
    %3209 = vmatpush1.bf16.msra.mxu0 %v2536
    %3210 = vmatprep.subr.bf16.mxu0 %v2545
    %3211 = vmatpush1.bf16.msra.mxu0 %v2544
    %3212 = vmatprep.subr.bf16.mxu0 %v2553
    %3213 = vmatpush1.bf16.msra.mxu0 %v2552
    %3214 = vmatprep.subr.bf16.mxu0 %v2561
    %3215 = vmatpush1.bf16.msra.mxu0 %v2560
    %3216 = vmatprep.subr.bf16.mxu0 %v2569
    %3217 = vmatpush1.bf16.msra.mxu0 %v2568
    %3218 = vmatprep.subr.bf16.mxu0 %v2577
    %3219 = vmatpush1.bf16.msra.mxu0 %v2576
    %3220 = vmatprep.subr.bf16.mxu0 %v2585
    %3221 = vmatpush1.bf16.msra.mxu0 %v2584
    %3222 = vmatprep.subr.bf16.mxu0 %v2593
    %3223 = vmatpush1.bf16.msra.mxu0 %v2592
    %3224 = vmatprep.subr.bf16.mxu0 %v2601
    %3225 = vmatpush1.bf16.msra.mxu0 %v2600
    %3226 = vmatprep.subr.bf16.mxu0 %v2609
    %3227 = vmatpush1.bf16.msra.mxu0 %v2608
    %3228 = vmatprep.subr.bf16.mxu0 %v2617
    %3229 = vmatpush1.bf16.msra.mxu0 %v2616
    %3230 = vmatprep.subr.bf16.mxu0 %v2625
    %3231 = vmatpush1.bf16.msra.mxu0 %v2624
    %3232 = vmatprep.subr.bf16.mxu0 %v2633
    %3233 = vmatpush1.bf16.msra.mxu0 %v2632
    %3234 = vmatprep.subr.bf16.mxu0 %v2641
    %3235 = vmatpush1.bf16.msra.mxu0 %v2640
    %3236 = vmatprep.subr.bf16.mxu0 %v2649
    %3237 = vmatpush1.bf16.msra.mxu0 %v2648
    %3238 = vmatprep.subr.bf16.mxu0 %v2657
    %3239 = vmatpush1.bf16.msra.mxu0 %v2656
    %3240 = vmatprep.mubr.bf16.mxu0 %v1463
    %3241 = vmatmul.mubr.bf16.gmra.mrb[0].mxu0 %v1462
    %v3242 = vpop.f32.mrb[0].mxu0
    %v3243 = vadd.f32 %v1743, %v3242
    %v3244 = vpop.f32.mrb[0].mxu0
    %v3245 = vadd.f32 %v1747, %v3244
    %v3246 = vpop.f32.mrb[0].mxu0
    %v3247 = vpop.f32.mrb[0].mxu0
    %3248 = vdwg.mxu0
    %3249 = vmatprep.subr.bf16.mxu0 %v2665
    %3250 = vmatpush1.bf16.msra.mxu0 %v2664
    %3251 = vmatprep.subr.bf16.mxu0 %v2673
    %3252 = vmatpush1.bf16.msra.mxu0 %v2672
    %3253 = vmatprep.subr.bf16.mxu0 %v2681
    %3254 = vmatpush1.bf16.msra.mxu0 %v2680
    %3255 = vmatprep.subr.bf16.mxu0 %v2689
    %3256 = vmatpush1.bf16.msra.mxu0 %v2688
    %3257 = vmatprep.subr.bf16.mxu0 %v2697
    %3258 = vmatpush1.bf16.msra.mxu0 %v2696
    %3259 = vmatprep.subr.bf16.mxu0 %v2705
    %3260 = vmatpush1.bf16.msra.mxu0 %v2704
    %3261 = vmatprep.subr.bf16.mxu0 %v2713
    %3262 = vmatpush1.bf16.msra.mxu0 %v2712
    %3263 = vmatprep.subr.bf16.mxu0 %v2721
    %3264 = vmatpush1.bf16.msra.mxu0 %v2720
    %3265 = vmatprep.subr.bf16.mxu0 %v2729
    %3266 = vmatpush1.bf16.msra.mxu0 %v2728
    %3267 = vmatprep.subr.bf16.mxu0 %v2737
    %3268 = vmatpush1.bf16.msra.mxu0 %v2736
    %3269 = vmatprep.subr.bf16.mxu0 %v2745
    %3270 = vmatpush1.bf16.msra.mxu0 %v2744
    %3271 = vmatprep.subr.bf16.mxu0 %v2753
    %3272 = vmatpush1.bf16.msra.mxu0 %v2752
    %3273 = vmatprep.subr.bf16.mxu0 %v2761
    %3274 = vmatpush1.bf16.msra.mxu0 %v2760
    %3275 = vmatprep.subr.bf16.mxu0 %v2769
    %3276 = vmatpush1.bf16.msra.mxu0 %v2768
    %3277 = vmatprep.subr.bf16.mxu0 %v2777
    %3278 = vmatpush1.bf16.msra.mxu0 %v2776
    %3279 = vmatprep.subr.bf16.mxu0 %v2785
    %3280 = vmatpush1.bf16.msra.mxu0 %v2784
    %3281 = vmatprep.mubr.bf16.mxu0 %v1465
    %3282 = vmatmul.mubr.bf16.gmra.mrb[0].mxu0 %v1464
    %v3283 = vpop.f32.mrb[0].mxu0
    %v3284 = vadd.f32 %v3243, %v3283
    %v3285 = vpop.f32.mrb[0].mxu0
    %v3286 = vadd.f32 %v3245, %v3285
    %v3287 = vpop.f32.mrb[0].mxu0
    %v3288 = vpop.f32.mrb[0].mxu0
    %3289 = vdwg.mxu0
    %3290 = vmatprep.subr.bf16.mxu0 %v2539
    %3291 = vmatpush1.bf16.msra.mxu0 %v2538
    %3292 = vmatprep.subr.bf16.mxu0 %v2547
    %3293 = vmatpush1.bf16.msra.mxu0 %v2546
    %3294 = vmatprep.subr.bf16.mxu0 %v2555
    %3295 = vmatpush1.bf16.msra.mxu0 %v2554
    %3296 = vmatprep.subr.bf16.mxu0 %v2563
    %3297 = vmatpush1.bf16.msra.mxu0 %v2562
    %3298 = vmatprep.subr.bf16.mxu0 %v2571
    %3299 = vmatpush1.bf16.msra.mxu0 %v2570
    %3300 = vmatprep.subr.bf16.mxu0 %v2579
    %3301 = vmatpush1.bf16.msra.mxu0 %v2578
    %3302 = vmatprep.subr.bf16.mxu0 %v2587
    %3303 = vmatpush1.bf16.msra.mxu0 %v2586
    %3304 = vmatprep.subr.bf16.mxu0 %v2595
    %3305 = vmatpush1.bf16.msra.mxu0 %v2594
    %3306 = vmatprep.subr.bf16.mxu0 %v2603
    %3307 = vmatpush1.bf16.msra.mxu0 %v2602
    %3308 = vmatprep.subr.bf16.mxu0 %v2611
    %3309 = vmatpush1.bf16.msra.mxu0 %v2610
    %3310 = vmatprep.subr.bf16.mxu0 %v2619
    %3311 = vmatpush1.bf16.msra.mxu0 %v2618
    %3312 = vmatprep.subr.bf16.mxu0 %v2627
    %3313 = vmatpush1.bf16.msra.mxu0 %v2626
    %3314 = vmatprep.subr.bf16.mxu0 %v2635
    %3315 = vmatpush1.bf16.msra.mxu0 %v2634
    %3316 = vmatprep.subr.bf16.mxu0 %v2643
    %3317 = vmatpush1.bf16.msra.mxu0 %v2642
    %3318 = vmatprep.subr.bf16.mxu0 %v2651
    %3319 = vmatpush1.bf16.msra.mxu0 %v2650
    %3320 = vmatprep.subr.bf16.mxu0 %v2659
    %3321 = vmatpush1.bf16.msra.mxu0 %v2658
    %3322 = vmatprep.mubr.bf16.mxu0 %v1463
    %3323 = vmatmul.mubr.bf16.gmra.mrb[0].mxu0 %v1462
    %v3324 = vpop.f32.mrb[0].mxu0
    %v3325 = vadd.f32 %v1751, %v3324
    %v3326 = vpop.f32.mrb[0].mxu0
    %v3327 = vadd.f32 %v1755, %v3326
    %v3328 = vpop.f32.mrb[0].mxu0
    %v3329 = vpop.f32.mrb[0].mxu0
    %3330 = vdwg.mxu0
    %3331 = vmatprep.subr.bf16.mxu0 %v2667
    %3332 = vmatpush1.bf16.msra.mxu0 %v2666
    %3333 = vmatprep.subr.bf16.mxu0 %v2675
    %3334 = vmatpush1.bf16.msra.mxu0 %v2674
    %3335 = vmatprep.subr.bf16.mxu0 %v2683
    %3336 = vmatpush1.bf16.msra.mxu0 %v2682
    %3337 = vmatprep.subr.bf16.mxu0 %v2691
    %3338 = vmatpush1.bf16.msra.mxu0 %v2690
    %3339 = vmatprep.subr.bf16.mxu0 %v2699
    %3340 = vmatpush1.bf16.msra.mxu0 %v2698
    %3341 = vmatprep.subr.bf16.mxu0 %v2707
    %3342 = vmatpush1.bf16.msra.mxu0 %v2706
    %3343 = vmatprep.subr.bf16.mxu0 %v2715
    %3344 = vmatpush1.bf16.msra.mxu0 %v2714
    %3345 = vmatprep.subr.bf16.mxu0 %v2723
    %3346 = vmatpush1.bf16.msra.mxu0 %v2722
    %3347 = vmatprep.subr.bf16.mxu0 %v2731
    %3348 = vmatpush1.bf16.msra.mxu0 %v2730
    %3349 = vmatprep.subr.bf16.mxu0 %v2739
    %3350 = vmatpush1.bf16.msra.mxu0 %v2738
    %3351 = vmatprep.subr.bf16.mxu0 %v2747
    %3352 = vmatpush1.bf16.msra.mxu0 %v2746
    %3353 = vmatprep.subr.bf16.mxu0 %v2755
    %3354 = vmatpush1.bf16.msra.mxu0 %v2754
    %3355 = vmatprep.subr.bf16.mxu0 %v2763
    %3356 = vmatpush1.bf16.msra.mxu0 %v2762
    %3357 = vmatprep.subr.bf16.mxu0 %v2771
    %3358 = vmatpush1.bf16.msra.mxu0 %v2770
    %3359 = vmatprep.subr.bf16.mxu0 %v2779
    %3360 = vmatpush1.bf16.msra.mxu0 %v2778
    %3361 = vmatprep.subr.bf16.mxu0 %v2787
    %3362 = vmatpush1.bf16.msra.mxu0 %v2786
    %3363 = vmatprep.mubr.bf16.mxu0 %v1465
    %3364 = vmatmul.mubr.bf16.gmra.mrb[0].mxu0 %v1464
    %v3365 = vpop.f32.mrb[0].mxu0
    %v3366 = vadd.f32 %v3325, %v3365
    %v3367 = vpop.f32.mrb[0].mxu0
    %v3368 = vadd.f32 %v3327, %v3367
    %v3369 = vpop.f32.mrb[0].mxu0
    %v3370 = vpop.f32.mrb[0].mxu0
    %3371 = vdwg.mxu0
    %v3372 = vmax.f32 %v3120, 0.0
    %v3373 = vmax.f32 %v3122, 0.0
    %v3374 = vmax.f32 %v3202, 0.0
    %v3375 = vmax.f32 %v3204, 0.0
    %v3376 = vmax.f32 %v3284, 0.0
    %v3377 = vmax.f32 %v3286, 0.0
    %v3378 = vmax.f32 %v3366, 0.0
    %v3379 = vmax.f32 %v3368, 0.0
    %v3380 = vpack.c.bf16 %v3372, %v3372
    %v3381 = vpack.c.bf16 %v3373, %v3373
    %v3382 = vpack.c.bf16 %v3374, %v3374
    %v3383 = vpack.c.bf16 %v3375, %v3375
    %v3384 = vpack.c.bf16 %v3376, %v3376
    %v3385 = vpack.c.bf16 %v3377, %v3377
    %v3386 = vpack.c.bf16 %v3378, %v3378
    %v3387 = vpack.c.bf16 %v3379, %v3379
    %v3388 = vld [vmem:[#allocation6] sm:$0xff]
    %v3389 = vld [vmem:[#allocation6 + $0x8] sm:$0xff]
    %v3390 = vld [vmem:[#allocation6 + $0x10] sm:$0xff]
    %v3391 = vld [vmem:[#allocation6 + $0x18] sm:$0xff]
    %v3392 = vld [vmem:[#allocation6 + $0x20] sm:$0xff]
    %v3393 = vld [vmem:[#allocation6 + $0x28] sm:$0xff]
    %v3394 = vld [vmem:[#allocation6 + $0x30] sm:$0xff]
    %v3395 = vld [vmem:[#allocation6 + $0x38] sm:$0xff]
    %v3396 = vld [vmem:[#allocation6 + $0x40] sm:$0xff]
    %v3397 = vld [vmem:[#allocation6 + $0x48] sm:$0xff]
    %v3398 = vld [vmem:[#allocation6 + $0x50] sm:$0xff]
    %v3399 = vld [vmem:[#allocation6 + $0x58] sm:$0xff]
    %v3400 = vld [vmem:[#allocation6 + $0x60] sm:$0xff]
    %v3401 = vld [vmem:[#allocation6 + $0x68] sm:$0xff]
    %v3402 = vld [vmem:[#allocation6 + $0x70] sm:$0xff]
    %v3403 = vld [vmem:[#allocation6 + $0x78] sm:$0xff]
    %v3404 = vld [vmem:[#allocation6 + $0x80] sm:$0xff]
    %v3405 = vld [vmem:[#allocation6 + $0x88] sm:$0xff]
    %v3406 = vld [vmem:[#allocation6 + $0x90] sm:$0xff]
    %v3407 = vld [vmem:[#allocation6 + $0x98] sm:$0xff]
    %v3408 = vld [vmem:[#allocation6 + $0xa0] sm:$0xff]
    %v3409 = vld [vmem:[#allocation6 + $0xa8] sm:$0xff]
    %v3410 = vld [vmem:[#allocation6 + $0xb0] sm:$0xff]
    %v3411 = vld [vmem:[#allocation6 + $0xb8] sm:$0xff]
    %v3412 = vld [vmem:[#allocation6 + $0xc0] sm:$0xff]
    %v3413 = vld [vmem:[#allocation6 + $0xc8] sm:$0xff]
    %v3414 = vld [vmem:[#allocation6 + $0xd0] sm:$0xff]
    %v3415 = vld [vmem:[#allocation6 + $0xd8] sm:$0xff]
    %v3416 = vld [vmem:[#allocation6 + $0xe0] sm:$0xff]
    %v3417 = vld [vmem:[#allocation6 + $0xe8] sm:$0xff]
    %v3418 = vld [vmem:[#allocation6 + $0xf0] sm:$0xff]
    %v3419 = vld [vmem:[#allocation6 + $0xf8] sm:$0xff]
    %v3420 = vld [vmem:[#allocation6 + $0x100] sm:$0xff]
    %v3421 = vld [vmem:[#allocation6 + $0x108] sm:$0xff]
    %v3422 = vld [vmem:[#allocation6 + $0x110] sm:$0xff]
    %v3423 = vld [vmem:[#allocation6 + $0x118] sm:$0xff]
    %v3424 = vld [vmem:[#allocation6 + $0x120] sm:$0xff]
    %v3425 = vld [vmem:[#allocation6 + $0x128] sm:$0xff]
    %v3426 = vld [vmem:[#allocation6 + $0x130] sm:$0xff]
    %v3427 = vld [vmem:[#allocation6 + $0x138] sm:$0xff]
    %v3428 = vld [vmem:[#allocation6 + $0x140] sm:$0xff]
    %v3429 = vld [vmem:[#allocation6 + $0x148] sm:$0xff]
    %v3430 = vld [vmem:[#allocation6 + $0x150] sm:$0xff]
    %v3431 = vld [vmem:[#allocation6 + $0x158] sm:$0xff]
    %v3432 = vld [vmem:[#allocation6 + $0x160] sm:$0xff]
    %v3433 = vld [vmem:[#allocation6 + $0x168] sm:$0xff]
    %v3434 = vld [vmem:[#allocation6 + $0x170] sm:$0xff]
    %v3435 = vld [vmem:[#allocation6 + $0x178] sm:$0xff]
    %v3436 = vld [vmem:[#allocation6 + $0x180] sm:$0xff]
    %v3437 = vld [vmem:[#allocation6 + $0x188] sm:$0xff]
    %v3438 = vld [vmem:[#allocation6 + $0x190] sm:$0xff]
    %v3439 = vld [vmem:[#allocation6 + $0x198] sm:$0xff]
    %v3440 = vld [vmem:[#allocation6 + $0x1a0] sm:$0xff]
    %v3441 = vld [vmem:[#allocation6 + $0x1a8] sm:$0xff]
    %v3442 = vld [vmem:[#allocation6 + $0x1b0] sm:$0xff]
    %v3443 = vld [vmem:[#allocation6 + $0x1b8] sm:$0xff]
    %v3444 = vld [vmem:[#allocation6 + $0x1c0] sm:$0xff]
    %v3445 = vld [vmem:[#allocation6 + $0x1c8] sm:$0xff]
    %v3446 = vld [vmem:[#allocation6 + $0x1d0] sm:$0xff]
    %v3447 = vld [vmem:[#allocation6 + $0x1d8] sm:$0xff]
    %v3448 = vld [vmem:[#allocation6 + $0x1e0] sm:$0xff]
    %v3449 = vld [vmem:[#allocation6 + $0x1e8] sm:$0xff]
    %v3450 = vld [vmem:[#allocation6 + $0x1f0] sm:$0xff]
    %v3451 = vld [vmem:[#allocation6 + $0x1f8] sm:$0xff]
    %v3452 = vld [vmem:[#allocation6 + $0x200] sm:$0xff]
    %v3453 = vld [vmem:[#allocation6 + $0x208] sm:$0xff]
    %v3454 = vld [vmem:[#allocation6 + $0x210] sm:$0xff]
    %v3455 = vld [vmem:[#allocation6 + $0x218] sm:$0xff]
    %v3456 = vld [vmem:[#allocation6 + $0x220] sm:$0xff]
    %v3457 = vld [vmem:[#allocation6 + $0x228] sm:$0xff]
    %v3458 = vld [vmem:[#allocation6 + $0x230] sm:$0xff]
    %v3459 = vld [vmem:[#allocation6 + $0x238] sm:$0xff]
    %v3460 = vld [vmem:[#allocation6 + $0x240] sm:$0xff]
    %v3461 = vld [vmem:[#allocation6 + $0x248] sm:$0xff]
    %v3462 = vld [vmem:[#allocation6 + $0x250] sm:$0xff]
    %v3463 = vld [vmem:[#allocation6 + $0x258] sm:$0xff]
    %v3464 = vld [vmem:[#allocation6 + $0x260] sm:$0xff]
    %v3465 = vld [vmem:[#allocation6 + $0x268] sm:$0xff]
    %v3466 = vld [vmem:[#allocation6 + $0x270] sm:$0xff]
    %v3467 = vld [vmem:[#allocation6 + $0x278] sm:$0xff]
    %v3468 = vld [vmem:[#allocation6 + $0x280] sm:$0xff]
    %v3469 = vld [vmem:[#allocation6 + $0x288] sm:$0xff]
    %v3470 = vld [vmem:[#allocation6 + $0x290] sm:$0xff]
    %v3471 = vld [vmem:[#allocation6 + $0x298] sm:$0xff]
    %v3472 = vld [vmem:[#allocation6 + $0x2a0] sm:$0xff]
    %v3473 = vld [vmem:[#allocation6 + $0x2a8] sm:$0xff]
    %v3474 = vld [vmem:[#allocation6 + $0x2b0] sm:$0xff]
    %v3475 = vld [vmem:[#allocation6 + $0x2b8] sm:$0xff]
    %v3476 = vld [vmem:[#allocation6 + $0x2c0] sm:$0xff]
    %v3477 = vld [vmem:[#allocation6 + $0x2c8] sm:$0xff]
    %v3478 = vld [vmem:[#allocation6 + $0x2d0] sm:$0xff]
    %v3479 = vld [vmem:[#allocation6 + $0x2d8] sm:$0xff]
    %v3480 = vld [vmem:[#allocation6 + $0x2e0] sm:$0xff]
    %v3481 = vld [vmem:[#allocation6 + $0x2e8] sm:$0xff]
    %v3482 = vld [vmem:[#allocation6 + $0x2f0] sm:$0xff]
    %v3483 = vld [vmem:[#allocation6 + $0x2f8] sm:$0xff]
    %v3484 = vld [vmem:[#allocation6 + $0x300] sm:$0xff]
    %v3485 = vld [vmem:[#allocation6 + $0x308] sm:$0xff]
    %v3486 = vld [vmem:[#allocation6 + $0x310] sm:$0xff]
    %v3487 = vld [vmem:[#allocation6 + $0x318] sm:$0xff]
    %v3488 = vld [vmem:[#allocation6 + $0x320] sm:$0xff]
    %v3489 = vld [vmem:[#allocation6 + $0x328] sm:$0xff]
    %v3490 = vld [vmem:[#allocation6 + $0x330] sm:$0xff]
    %v3491 = vld [vmem:[#allocation6 + $0x338] sm:$0xff]
    %v3492 = vld [vmem:[#allocation6 + $0x340] sm:$0xff]
    %v3493 = vld [vmem:[#allocation6 + $0x348] sm:$0xff]
    %v3494 = vld [vmem:[#allocation6 + $0x350] sm:$0xff]
    %v3495 = vld [vmem:[#allocation6 + $0x358] sm:$0xff]
    %v3496 = vld [vmem:[#allocation6 + $0x360] sm:$0xff]
    %v3497 = vld [vmem:[#allocation6 + $0x368] sm:$0xff]
    %v3498 = vld [vmem:[#allocation6 + $0x370] sm:$0xff]
    %v3499 = vld [vmem:[#allocation6 + $0x378] sm:$0xff]
    %v3500 = vld [vmem:[#allocation6 + $0x380] sm:$0xff]
    %v3501 = vld [vmem:[#allocation6 + $0x388] sm:$0xff]
    %v3502 = vld [vmem:[#allocation6 + $0x390] sm:$0xff]
    %v3503 = vld [vmem:[#allocation6 + $0x398] sm:$0xff]
    %v3504 = vld [vmem:[#allocation6 + $0x3a0] sm:$0xff]
    %v3505 = vld [vmem:[#allocation6 + $0x3a8] sm:$0xff]
    %v3506 = vld [vmem:[#allocation6 + $0x3b0] sm:$0xff]
    %v3507 = vld [vmem:[#allocation6 + $0x3b8] sm:$0xff]
    %v3508 = vld [vmem:[#allocation6 + $0x3c0] sm:$0xff]
    %v3509 = vld [vmem:[#allocation6 + $0x3c8] sm:$0xff]
    %v3510 = vld [vmem:[#allocation6 + $0x3d0] sm:$0xff]
    %v3511 = vld [vmem:[#allocation6 + $0x3d8] sm:$0xff]
    %v3512 = vld [vmem:[#allocation6 + $0x3e0] sm:$0xff]
    %v3513 = vld [vmem:[#allocation6 + $0x3e8] sm:$0xff]
    %v3514 = vld [vmem:[#allocation6 + $0x3f0] sm:$0xff]
    %v3515 = vld [vmem:[#allocation6 + $0x3f8] sm:$0xff]
    %v3516 = vld [vmem:[#allocation6 + $0x400] sm:$0xff]
    %v3517 = vld [vmem:[#allocation6 + $0x408] sm:$0xff]
    %v3518 = vld [vmem:[#allocation6 + $0x410] sm:$0xff]
    %v3519 = vld [vmem:[#allocation6 + $0x418] sm:$0xff]
    %v3520 = vld [vmem:[#allocation6 + $0x420] sm:$0xff]
    %v3521 = vld [vmem:[#allocation6 + $0x428] sm:$0xff]
    %v3522 = vld [vmem:[#allocation6 + $0x430] sm:$0xff]
    %v3523 = vld [vmem:[#allocation6 + $0x438] sm:$0xff]
    %v3524 = vld [vmem:[#allocation6 + $0x440] sm:$0xff]
    %v3525 = vld [vmem:[#allocation6 + $0x448] sm:$0xff]
    %v3526 = vld [vmem:[#allocation6 + $0x450] sm:$0xff]
    %v3527 = vld [vmem:[#allocation6 + $0x458] sm:$0xff]
    %v3528 = vld [vmem:[#allocation6 + $0x460] sm:$0xff]
    %v3529 = vld [vmem:[#allocation6 + $0x468] sm:$0xff]
    %v3530 = vld [vmem:[#allocation6 + $0x470] sm:$0xff]
    %v3531 = vld [vmem:[#allocation6 + $0x478] sm:$0xff]
    %v3532 = vld [vmem:[#allocation6 + $0x480] sm:$0xff]
    %v3533 = vld [vmem:[#allocation6 + $0x488] sm:$0xff]
    %v3534 = vld [vmem:[#allocation6 + $0x490] sm:$0xff]
    %v3535 = vld [vmem:[#allocation6 + $0x498] sm:$0xff]
    %v3536 = vld [vmem:[#allocation6 + $0x4a0] sm:$0xff]
    %v3537 = vld [vmem:[#allocation6 + $0x4a8] sm:$0xff]
    %v3538 = vld [vmem:[#allocation6 + $0x4b0] sm:$0xff]
    %v3539 = vld [vmem:[#allocation6 + $0x4b8] sm:$0xff]
    %v3540 = vld [vmem:[#allocation6 + $0x4c0] sm:$0xff]
    %v3541 = vld [vmem:[#allocation6 + $0x4c8] sm:$0xff]
    %v3542 = vld [vmem:[#allocation6 + $0x4d0] sm:$0xff]
    %v3543 = vld [vmem:[#allocation6 + $0x4d8] sm:$0xff]
    %v3544 = vld [vmem:[#allocation6 + $0x4e0] sm:$0xff]
    %v3545 = vld [vmem:[#allocation6 + $0x4e8] sm:$0xff]
    %v3546 = vld [vmem:[#allocation6 + $0x4f0] sm:$0xff]
    %v3547 = vld [vmem:[#allocation6 + $0x4f8] sm:$0xff]
    %v3548 = vld [vmem:[#allocation6 + $0x500] sm:$0xff]
    %v3549 = vld [vmem:[#allocation6 + $0x508] sm:$0xff]
    %v3550 = vld [vmem:[#allocation6 + $0x510] sm:$0xff]
    %v3551 = vld [vmem:[#allocation6 + $0x518] sm:$0xff]
    %v3552 = vld [vmem:[#allocation6 + $0x520] sm:$0xff]
    %v3553 = vld [vmem:[#allocation6 + $0x528] sm:$0xff]
    %v3554 = vld [vmem:[#allocation6 + $0x530] sm:$0xff]
    %v3555 = vld [vmem:[#allocation6 + $0x538] sm:$0xff]
    %v3556 = vld [vmem:[#allocation6 + $0x540] sm:$0xff]
    %v3557 = vld [vmem:[#allocation6 + $0x548] sm:$0xff]
    %v3558 = vld [vmem:[#allocation6 + $0x550] sm:$0xff]
    %v3559 = vld [vmem:[#allocation6 + $0x558] sm:$0xff]
    %v3560 = vld [vmem:[#allocation6 + $0x560] sm:$0xff]
    %v3561 = vld [vmem:[#allocation6 + $0x568] sm:$0xff]
    %v3562 = vld [vmem:[#allocation6 + $0x570] sm:$0xff]
    %v3563 = vld [vmem:[#allocation6 + $0x578] sm:$0xff]
    %v3564 = vld [vmem:[#allocation6 + $0x580] sm:$0xff]
    %v3565 = vld [vmem:[#allocation6 + $0x588] sm:$0xff]
    %v3566 = vld [vmem:[#allocation6 + $0x590] sm:$0xff]
    %v3567 = vld [vmem:[#allocation6 + $0x598] sm:$0xff]
    %v3568 = vld [vmem:[#allocation6 + $0x5a0] sm:$0xff]
    %v3569 = vld [vmem:[#allocation6 + $0x5a8] sm:$0xff]
    %v3570 = vld [vmem:[#allocation6 + $0x5b0] sm:$0xff]
    %v3571 = vld [vmem:[#allocation6 + $0x5b8] sm:$0xff]
    %v3572 = vld [vmem:[#allocation6 + $0x5c0] sm:$0xff]
    %v3573 = vld [vmem:[#allocation6 + $0x5c8] sm:$0xff]
    %v3574 = vld [vmem:[#allocation6 + $0x5d0] sm:$0xff]
    %v3575 = vld [vmem:[#allocation6 + $0x5d8] sm:$0xff]
    %v3576 = vld [vmem:[#allocation6 + $0x5e0] sm:$0xff]
    %v3577 = vld [vmem:[#allocation6 + $0x5e8] sm:$0xff]
    %v3578 = vld [vmem:[#allocation6 + $0x5f0] sm:$0xff]
    %v3579 = vld [vmem:[#allocation6 + $0x5f8] sm:$0xff]
    %v3580 = vld [vmem:[#allocation6 + $0x600] sm:$0xff]
    %v3581 = vld [vmem:[#allocation6 + $0x608] sm:$0xff]
    %v3582 = vld [vmem:[#allocation6 + $0x610] sm:$0xff]
    %v3583 = vld [vmem:[#allocation6 + $0x618] sm:$0xff]
    %v3584 = vld [vmem:[#allocation6 + $0x620] sm:$0xff]
    %v3585 = vld [vmem:[#allocation6 + $0x628] sm:$0xff]
    %v3586 = vld [vmem:[#allocation6 + $0x630] sm:$0xff]
    %v3587 = vld [vmem:[#allocation6 + $0x638] sm:$0xff]
    %v3588 = vld [vmem:[#allocation6 + $0x640] sm:$0xff]
    %v3589 = vld [vmem:[#allocation6 + $0x648] sm:$0xff]
    %v3590 = vld [vmem:[#allocation6 + $0x650] sm:$0xff]
    %v3591 = vld [vmem:[#allocation6 + $0x658] sm:$0xff]
    %v3592 = vld [vmem:[#allocation6 + $0x660] sm:$0xff]
    %v3593 = vld [vmem:[#allocation6 + $0x668] sm:$0xff]
    %v3594 = vld [vmem:[#allocation6 + $0x670] sm:$0xff]
    %v3595 = vld [vmem:[#allocation6 + $0x678] sm:$0xff]
    %v3596 = vld [vmem:[#allocation6 + $0x680] sm:$0xff]
    %v3597 = vld [vmem:[#allocation6 + $0x688] sm:$0xff]
    %v3598 = vld [vmem:[#allocation6 + $0x690] sm:$0xff]
    %v3599 = vld [vmem:[#allocation6 + $0x698] sm:$0xff]
    %v3600 = vld [vmem:[#allocation6 + $0x6a0] sm:$0xff]
    %v3601 = vld [vmem:[#allocation6 + $0x6a8] sm:$0xff]
    %v3602 = vld [vmem:[#allocation6 + $0x6b0] sm:$0xff]
    %v3603 = vld [vmem:[#allocation6 + $0x6b8] sm:$0xff]
    %v3604 = vld [vmem:[#allocation6 + $0x6c0] sm:$0xff]
    %v3605 = vld [vmem:[#allocation6 + $0x6c8] sm:$0xff]
    %v3606 = vld [vmem:[#allocation6 + $0x6d0] sm:$0xff]
    %v3607 = vld [vmem:[#allocation6 + $0x6d8] sm:$0xff]
    %v3608 = vld [vmem:[#allocation6 + $0x6e0] sm:$0xff]
    %v3609 = vld [vmem:[#allocation6 + $0x6e8] sm:$0xff]
    %v3610 = vld [vmem:[#allocation6 + $0x6f0] sm:$0xff]
    %v3611 = vld [vmem:[#allocation6 + $0x6f8] sm:$0xff]
    %v3612 = vld [vmem:[#allocation6 + $0x700] sm:$0xff]
    %v3613 = vld [vmem:[#allocation6 + $0x708] sm:$0xff]
    %v3614 = vld [vmem:[#allocation6 + $0x710] sm:$0xff]
    %v3615 = vld [vmem:[#allocation6 + $0x718] sm:$0xff]
    %v3616 = vld [vmem:[#allocation6 + $0x720] sm:$0xff]
    %v3617 = vld [vmem:[#allocation6 + $0x728] sm:$0xff]
    %v3618 = vld [vmem:[#allocation6 + $0x730] sm:$0xff]
    %v3619 = vld [vmem:[#allocation6 + $0x738] sm:$0xff]
    %v3620 = vld [vmem:[#allocation6 + $0x740] sm:$0xff]
    %v3621 = vld [vmem:[#allocation6 + $0x748] sm:$0xff]
    %v3622 = vld [vmem:[#allocation6 + $0x750] sm:$0xff]
    %v3623 = vld [vmem:[#allocation6 + $0x758] sm:$0xff]
    %v3624 = vld [vmem:[#allocation6 + $0x760] sm:$0xff]
    %v3625 = vld [vmem:[#allocation6 + $0x768] sm:$0xff]
    %v3626 = vld [vmem:[#allocation6 + $0x770] sm:$0xff]
    %v3627 = vld [vmem:[#allocation6 + $0x778] sm:$0xff]
    %v3628 = vld [vmem:[#allocation6 + $0x780] sm:$0xff]
    %v3629 = vld [vmem:[#allocation6 + $0x788] sm:$0xff]
    %v3630 = vld [vmem:[#allocation6 + $0x790] sm:$0xff]
    %v3631 = vld [vmem:[#allocation6 + $0x798] sm:$0xff]
    %v3632 = vld [vmem:[#allocation6 + $0x7a0] sm:$0xff]
    %v3633 = vld [vmem:[#allocation6 + $0x7a8] sm:$0xff]
    %v3634 = vld [vmem:[#allocation6 + $0x7b0] sm:$0xff]
    %v3635 = vld [vmem:[#allocation6 + $0x7b8] sm:$0xff]
    %v3636 = vld [vmem:[#allocation6 + $0x7c0] sm:$0xff]
    %v3637 = vld [vmem:[#allocation6 + $0x7c8] sm:$0xff]
    %v3638 = vld [vmem:[#allocation6 + $0x7d0] sm:$0xff]
    %v3639 = vld [vmem:[#allocation6 + $0x7d8] sm:$0xff]
    %v3640 = vld [vmem:[#allocation6 + $0x7e0] sm:$0xff]
    %v3641 = vld [vmem:[#allocation6 + $0x7e8] sm:$0xff]
    %v3642 = vld [vmem:[#allocation6 + $0x7f0] sm:$0xff]
    %v3643 = vld [vmem:[#allocation6 + $0x7f8] sm:$0xff]
    %v3644 = vld [vmem:[%s16] sm:$0xf]
    %v3646 = vlaneseq
    %v3647 = vshrl.u32 %v3646, 7
    %v3648 = vsub.s32 0, %v3647
    %v3649 = vrot.slane %v3644, %v3648
    %v3650 = vlaneseq
    %v3651 = vshrl.u32 %v3650, 7
    %v3652 = vsub.s32 1, %v3651
    %v3653 = vrot.slane %v3644, %v3652
    %v3654 = vlaneseq
    %v3655 = vshrl.u32 %v3654, 7
    %v3656 = vsub.s32 2, %v3655
    %v3657 = vrot.slane %v3644, %v3656
    %v3658 = vlaneseq
    %v3659 = vshrl.u32 %v3658, 7
    %v3660 = vsub.s32 3, %v3659
    %v3661 = vrot.slane %v3644, %v3660
    %v3922 = vunpack.c.l.b16 %v3388
    %v3923 = vunpack.c.h.b16 %v3388
    %v3924 = vunpack.c.l.b16 %v3389
    %v3925 = vunpack.c.h.b16 %v3389
    %v3926 = vunpack.c.l.b16 %v3390
    %v3927 = vunpack.c.h.b16 %v3390
    %v3928 = vunpack.c.l.b16 %v3391
    %v3929 = vunpack.c.h.b16 %v3391
    %v3930 = vunpack.c.l.b16 %v3392
    %v3931 = vunpack.c.h.b16 %v3392
    %v3932 = vunpack.c.l.b16 %v3393
    %v3933 = vunpack.c.h.b16 %v3393
    %v3934 = vunpack.c.l.b16 %v3394
    %v3935 = vunpack.c.h.b16 %v3394
    %v3936 = vunpack.c.l.b16 %v3395
    %v3937 = vunpack.c.h.b16 %v3395
    %v3938 = vunpack.c.l.b16 %v3396
    %v3939 = vunpack.c.h.b16 %v3396
    %v3940 = vunpack.c.l.b16 %v3397
    %v3941 = vunpack.c.h.b16 %v3397
    %v3942 = vunpack.c.l.b16 %v3398
    %v3943 = vunpack.c.h.b16 %v3398
    %v3944 = vunpack.c.l.b16 %v3399
    %v3945 = vunpack.c.h.b16 %v3399
    %v3946 = vunpack.c.l.b16 %v3400
    %v3947 = vunpack.c.h.b16 %v3400
    %v3948 = vunpack.c.l.b16 %v3401
    %v3949 = vunpack.c.h.b16 %v3401
    %v3950 = vunpack.c.l.b16 %v3402
    %v3951 = vunpack.c.h.b16 %v3402
    %v3952 = vunpack.c.l.b16 %v3403
    %v3953 = vunpack.c.h.b16 %v3403
    %v3954 = vunpack.c.l.b16 %v3404
    %v3955 = vunpack.c.h.b16 %v3404
    %v3956 = vunpack.c.l.b16 %v3405
    %v3957 = vunpack.c.h.b16 %v3405
    %v3958 = vunpack.c.l.b16 %v3406
    %v3959 = vunpack.c.h.b16 %v3406
    %v3960 = vunpack.c.l.b16 %v3407
    %v3961 = vunpack.c.h.b16 %v3407
    %v3962 = vunpack.c.l.b16 %v3408
    %v3963 = vunpack.c.h.b16 %v3408
    %v3964 = vunpack.c.l.b16 %v3409
    %v3965 = vunpack.c.h.b16 %v3409
    %v3966 = vunpack.c.l.b16 %v3410
    %v3967 = vunpack.c.h.b16 %v3410
    %v3968 = vunpack.c.l.b16 %v3411
    %v3969 = vunpack.c.h.b16 %v3411
    %v3970 = vunpack.c.l.b16 %v3412
    %v3971 = vunpack.c.h.b16 %v3412
    %v3972 = vunpack.c.l.b16 %v3413
    %v3973 = vunpack.c.h.b16 %v3413
    %v3974 = vunpack.c.l.b16 %v3414
    %v3975 = vunpack.c.h.b16 %v3414
    %v3976 = vunpack.c.l.b16 %v3415
    %v3977 = vunpack.c.h.b16 %v3415
    %v3978 = vunpack.c.l.b16 %v3416
    %v3979 = vunpack.c.h.b16 %v3416
    %v3980 = vunpack.c.l.b16 %v3417
    %v3981 = vunpack.c.h.b16 %v3417
    %v3982 = vunpack.c.l.b16 %v3418
    %v3983 = vunpack.c.h.b16 %v3418
    %v3984 = vunpack.c.l.b16 %v3419
    %v3985 = vunpack.c.h.b16 %v3419
    %v3986 = vunpack.c.l.b16 %v3420
    %v3987 = vunpack.c.h.b16 %v3420
    %v3988 = vunpack.c.l.b16 %v3421
    %v3989 = vunpack.c.h.b16 %v3421
    %v3990 = vunpack.c.l.b16 %v3422
    %v3991 = vunpack.c.h.b16 %v3422
    %v3992 = vunpack.c.l.b16 %v3423
    %v3993 = vunpack.c.h.b16 %v3423
    %v3994 = vunpack.c.l.b16 %v3424
    %v3995 = vunpack.c.h.b16 %v3424
    %v3996 = vunpack.c.l.b16 %v3425
    %v3997 = vunpack.c.h.b16 %v3425
    %v3998 = vunpack.c.l.b16 %v3426
    %v3999 = vunpack.c.h.b16 %v3426
    %v4000 = vunpack.c.l.b16 %v3427
    %v4001 = vunpack.c.h.b16 %v3427
    %v4002 = vunpack.c.l.b16 %v3428
    %v4003 = vunpack.c.h.b16 %v3428
    %v4004 = vunpack.c.l.b16 %v3429
    %v4005 = vunpack.c.h.b16 %v3429
    %v4006 = vunpack.c.l.b16 %v3430
    %v4007 = vunpack.c.h.b16 %v3430
    %v4008 = vunpack.c.l.b16 %v3431
    %v4009 = vunpack.c.h.b16 %v3431
    %v4010 = vunpack.c.l.b16 %v3432
    %v4011 = vunpack.c.h.b16 %v3432
    %v4012 = vunpack.c.l.b16 %v3433
    %v4013 = vunpack.c.h.b16 %v3433
    %v4014 = vunpack.c.l.b16 %v3434
    %v4015 = vunpack.c.h.b16 %v3434
    %v4016 = vunpack.c.l.b16 %v3435
    %v4017 = vunpack.c.h.b16 %v3435
    %v4018 = vunpack.c.l.b16 %v3436
    %v4019 = vunpack.c.h.b16 %v3436
    %v4020 = vunpack.c.l.b16 %v3437
    %v4021 = vunpack.c.h.b16 %v3437
    %v4022 = vunpack.c.l.b16 %v3438
    %v4023 = vunpack.c.h.b16 %v3438
    %v4024 = vunpack.c.l.b16 %v3439
    %v4025 = vunpack.c.h.b16 %v3439
    %v4026 = vunpack.c.l.b16 %v3440
    %v4027 = vunpack.c.h.b16 %v3440
    %v4028 = vunpack.c.l.b16 %v3441
    %v4029 = vunpack.c.h.b16 %v3441
    %v4030 = vunpack.c.l.b16 %v3442
    %v4031 = vunpack.c.h.b16 %v3442
    %v4032 = vunpack.c.l.b16 %v3443
    %v4033 = vunpack.c.h.b16 %v3443
    %v4034 = vunpack.c.l.b16 %v3444
    %v4035 = vunpack.c.h.b16 %v3444
    %v4036 = vunpack.c.l.b16 %v3445
    %v4037 = vunpack.c.h.b16 %v3445
    %v4038 = vunpack.c.l.b16 %v3446
    %v4039 = vunpack.c.h.b16 %v3446
    %v4040 = vunpack.c.l.b16 %v3447
    %v4041 = vunpack.c.h.b16 %v3447
    %v4042 = vunpack.c.l.b16 %v3448
    %v4043 = vunpack.c.h.b16 %v3448
    %v4044 = vunpack.c.l.b16 %v3449
    %v4045 = vunpack.c.h.b16 %v3449
    %v4046 = vunpack.c.l.b16 %v3450
    %v4047 = vunpack.c.h.b16 %v3450
    %v4048 = vunpack.c.l.b16 %v3451
    %v4049 = vunpack.c.h.b16 %v3451
    %v4050 = vunpack.c.l.b16 %v3452
    %v4051 = vunpack.c.h.b16 %v3452
    %v4052 = vunpack.c.l.b16 %v3453
    %v4053 = vunpack.c.h.b16 %v3453
    %v4054 = vunpack.c.l.b16 %v3454
    %v4055 = vunpack.c.h.b16 %v3454
    %v4056 = vunpack.c.l.b16 %v3455
    %v4057 = vunpack.c.h.b16 %v3455
    %v4058 = vunpack.c.l.b16 %v3456
    %v4059 = vunpack.c.h.b16 %v3456
    %v4060 = vunpack.c.l.b16 %v3457
    %v4061 = vunpack.c.h.b16 %v3457
    %v4062 = vunpack.c.l.b16 %v3458
    %v4063 = vunpack.c.h.b16 %v3458
    %v4064 = vunpack.c.l.b16 %v3459
    %v4065 = vunpack.c.h.b16 %v3459
    %v4066 = vunpack.c.l.b16 %v3460
    %v4067 = vunpack.c.h.b16 %v3460
    %v4068 = vunpack.c.l.b16 %v3461
    %v4069 = vunpack.c.h.b16 %v3461
    %v4070 = vunpack.c.l.b16 %v3462
    %v4071 = vunpack.c.h.b16 %v3462
    %v4072 = vunpack.c.l.b16 %v3463
    %v4073 = vunpack.c.h.b16 %v3463
    %v4074 = vunpack.c.l.b16 %v3464
    %v4075 = vunpack.c.h.b16 %v3464
    %v4076 = vunpack.c.l.b16 %v3465
    %v4077 = vunpack.c.h.b16 %v3465
    %v4078 = vunpack.c.l.b16 %v3466
    %v4079 = vunpack.c.h.b16 %v3466
    %v4080 = vunpack.c.l.b16 %v3467
    %v4081 = vunpack.c.h.b16 %v3467
    %v4082 = vunpack.c.l.b16 %v3468
    %v4083 = vunpack.c.h.b16 %v3468
    %v4084 = vunpack.c.l.b16 %v3469
    %v4085 = vunpack.c.h.b16 %v3469
    %v4086 = vunpack.c.l.b16 %v3470
    %v4087 = vunpack.c.h.b16 %v3470
    %v4088 = vunpack.c.l.b16 %v3471
    %v4089 = vunpack.c.h.b16 %v3471
    %v4090 = vunpack.c.l.b16 %v3472
    %v4091 = vunpack.c.h.b16 %v3472
    %v4092 = vunpack.c.l.b16 %v3473
    %v4093 = vunpack.c.h.b16 %v3473
    %v4094 = vunpack.c.l.b16 %v3474
    %v4095 = vunpack.c.h.b16 %v3474
    %v4096 = vunpack.c.l.b16 %v3475
    %v4097 = vunpack.c.h.b16 %v3475
    %v4098 = vunpack.c.l.b16 %v3476
    %v4099 = vunpack.c.h.b16 %v3476
    %v4100 = vunpack.c.l.b16 %v3477
    %v4101 = vunpack.c.h.b16 %v3477
    %v4102 = vunpack.c.l.b16 %v3478
    %v4103 = vunpack.c.h.b16 %v3478
    %v4104 = vunpack.c.l.b16 %v3479
    %v4105 = vunpack.c.h.b16 %v3479
    %v4106 = vunpack.c.l.b16 %v3480
    %v4107 = vunpack.c.h.b16 %v3480
    %v4108 = vunpack.c.l.b16 %v3481
    %v4109 = vunpack.c.h.b16 %v3481
    %v4110 = vunpack.c.l.b16 %v3482
    %v4111 = vunpack.c.h.b16 %v3482
    %v4112 = vunpack.c.l.b16 %v3483
    %v4113 = vunpack.c.h.b16 %v3483
    %v4114 = vunpack.c.l.b16 %v3484
    %v4115 = vunpack.c.h.b16 %v3484
    %v4116 = vunpack.c.l.b16 %v3485
    %v4117 = vunpack.c.h.b16 %v3485
    %v4118 = vunpack.c.l.b16 %v3486
    %v4119 = vunpack.c.h.b16 %v3486
    %v4120 = vunpack.c.l.b16 %v3487
    %v4121 = vunpack.c.h.b16 %v3487
    %v4122 = vunpack.c.l.b16 %v3488
    %v4123 = vunpack.c.h.b16 %v3488
    %v4124 = vunpack.c.l.b16 %v3489
    %v4125 = vunpack.c.h.b16 %v3489
    %v4126 = vunpack.c.l.b16 %v3490
    %v4127 = vunpack.c.h.b16 %v3490
    %v4128 = vunpack.c.l.b16 %v3491
    %v4129 = vunpack.c.h.b16 %v3491
    %v4130 = vunpack.c.l.b16 %v3492
    %v4131 = vunpack.c.h.b16 %v3492
    %v4132 = vunpack.c.l.b16 %v3493
    %v4133 = vunpack.c.h.b16 %v3493
    %v4134 = vunpack.c.l.b16 %v3494
    %v4135 = vunpack.c.h.b16 %v3494
    %v4136 = vunpack.c.l.b16 %v3495
    %v4137 = vunpack.c.h.b16 %v3495
    %v4138 = vunpack.c.l.b16 %v3496
    %v4139 = vunpack.c.h.b16 %v3496
    %v4140 = vunpack.c.l.b16 %v3497
    %v4141 = vunpack.c.h.b16 %v3497
    %v4142 = vunpack.c.l.b16 %v3498
    %v4143 = vunpack.c.h.b16 %v3498
    %v4144 = vunpack.c.l.b16 %v3499
    %v4145 = vunpack.c.h.b16 %v3499
    %v4146 = vunpack.c.l.b16 %v3500
    %v4147 = vunpack.c.h.b16 %v3500
    %v4148 = vunpack.c.l.b16 %v3501
    %v4149 = vunpack.c.h.b16 %v3501
    %v4150 = vunpack.c.l.b16 %v3502
    %v4151 = vunpack.c.h.b16 %v3502
    %v4152 = vunpack.c.l.b16 %v3503
    %v4153 = vunpack.c.h.b16 %v3503
    %v4154 = vunpack.c.l.b16 %v3504
    %v4155 = vunpack.c.h.b16 %v3504
    %v4156 = vunpack.c.l.b16 %v3505
    %v4157 = vunpack.c.h.b16 %v3505
    %v4158 = vunpack.c.l.b16 %v3506
    %v4159 = vunpack.c.h.b16 %v3506
    %v4160 = vunpack.c.l.b16 %v3507
    %v4161 = vunpack.c.h.b16 %v3507
    %v4162 = vunpack.c.l.b16 %v3508
    %v4163 = vunpack.c.h.b16 %v3508
    %v4164 = vunpack.c.l.b16 %v3509
    %v4165 = vunpack.c.h.b16 %v3509
    %v4166 = vunpack.c.l.b16 %v3510
    %v4167 = vunpack.c.h.b16 %v3510
    %v4168 = vunpack.c.l.b16 %v3511
    %v4169 = vunpack.c.h.b16 %v3511
    %v4170 = vunpack.c.l.b16 %v3512
    %v4171 = vunpack.c.h.b16 %v3512
    %v4172 = vunpack.c.l.b16 %v3513
    %v4173 = vunpack.c.h.b16 %v3513
    %v4174 = vunpack.c.l.b16 %v3514
    %v4175 = vunpack.c.h.b16 %v3514
    %v4176 = vunpack.c.l.b16 %v3515
    %v4177 = vunpack.c.h.b16 %v3515
    %v4178 = vunpack.c.l.b16 %v3516
    %v4179 = vunpack.c.h.b16 %v3516
    %v4180 = vunpack.c.l.b16 %v3517
    %v4181 = vunpack.c.h.b16 %v3517
    %v4182 = vunpack.c.l.b16 %v3518
    %v4183 = vunpack.c.h.b16 %v3518
    %v4184 = vunpack.c.l.b16 %v3519
    %v4185 = vunpack.c.h.b16 %v3519
    %v4186 = vunpack.c.l.b16 %v3520
    %v4187 = vunpack.c.h.b16 %v3520
    %v4188 = vunpack.c.l.b16 %v3521
    %v4189 = vunpack.c.h.b16 %v3521
    %v4190 = vunpack.c.l.b16 %v3522
    %v4191 = vunpack.c.h.b16 %v3522
    %v4192 = vunpack.c.l.b16 %v3523
    %v4193 = vunpack.c.h.b16 %v3523
    %v4194 = vunpack.c.l.b16 %v3524
    %v4195 = vunpack.c.h.b16 %v3524
    %v4196 = vunpack.c.l.b16 %v3525
    %v4197 = vunpack.c.h.b16 %v3525
    %v4198 = vunpack.c.l.b16 %v3526
    %v4199 = vunpack.c.h.b16 %v3526
    %v4200 = vunpack.c.l.b16 %v3527
    %v4201 = vunpack.c.h.b16 %v3527
    %v4202 = vunpack.c.l.b16 %v3528
    %v4203 = vunpack.c.h.b16 %v3528
    %v4204 = vunpack.c.l.b16 %v3529
    %v4205 = vunpack.c.h.b16 %v3529
    %v4206 = vunpack.c.l.b16 %v3530
    %v4207 = vunpack.c.h.b16 %v3530
    %v4208 = vunpack.c.l.b16 %v3531
    %v4209 = vunpack.c.h.b16 %v3531
    %v4210 = vunpack.c.l.b16 %v3532
    %v4211 = vunpack.c.h.b16 %v3532
    %v4212 = vunpack.c.l.b16 %v3533
    %v4213 = vunpack.c.h.b16 %v3533
    %v4214 = vunpack.c.l.b16 %v3534
    %v4215 = vunpack.c.h.b16 %v3534
    %v4216 = vunpack.c.l.b16 %v3535
    %v4217 = vunpack.c.h.b16 %v3535
    %v4218 = vunpack.c.l.b16 %v3536
    %v4219 = vunpack.c.h.b16 %v3536
    %v4220 = vunpack.c.l.b16 %v3537
    %v4221 = vunpack.c.h.b16 %v3537
    %v4222 = vunpack.c.l.b16 %v3538
    %v4223 = vunpack.c.h.b16 %v3538
    %v4224 = vunpack.c.l.b16 %v3539
    %v4225 = vunpack.c.h.b16 %v3539
    %v4226 = vunpack.c.l.b16 %v3540
    %v4227 = vunpack.c.h.b16 %v3540
    %v4228 = vunpack.c.l.b16 %v3541
    %v4229 = vunpack.c.h.b16 %v3541
    %v4230 = vunpack.c.l.b16 %v3542
    %v4231 = vunpack.c.h.b16 %v3542
    %v4232 = vunpack.c.l.b16 %v3543
    %v4233 = vunpack.c.h.b16 %v3543
    %v4234 = vunpack.c.l.b16 %v3544
    %v4235 = vunpack.c.h.b16 %v3544
    %v4236 = vunpack.c.l.b16 %v3545
    %v4237 = vunpack.c.h.b16 %v3545
    %v4238 = vunpack.c.l.b16 %v3546
    %v4239 = vunpack.c.h.b16 %v3546
    %v4240 = vunpack.c.l.b16 %v3547
    %v4241 = vunpack.c.h.b16 %v3547
    %v4242 = vunpack.c.l.b16 %v3548
    %v4243 = vunpack.c.h.b16 %v3548
    %v4244 = vunpack.c.l.b16 %v3549
    %v4245 = vunpack.c.h.b16 %v3549
    %v4246 = vunpack.c.l.b16 %v3550
    %v4247 = vunpack.c.h.b16 %v3550
    %v4248 = vunpack.c.l.b16 %v3551
    %v4249 = vunpack.c.h.b16 %v3551
    %v4250 = vunpack.c.l.b16 %v3552
    %v4251 = vunpack.c.h.b16 %v3552
    %v4252 = vunpack.c.l.b16 %v3553
    %v4253 = vunpack.c.h.b16 %v3553
    %v4254 = vunpack.c.l.b16 %v3554
    %v4255 = vunpack.c.h.b16 %v3554
    %v4256 = vunpack.c.l.b16 %v3555
    %v4257 = vunpack.c.h.b16 %v3555
    %v4258 = vunpack.c.l.b16 %v3556
    %v4259 = vunpack.c.h.b16 %v3556
    %v4260 = vunpack.c.l.b16 %v3557
    %v4261 = vunpack.c.h.b16 %v3557
    %v4262 = vunpack.c.l.b16 %v3558
    %v4263 = vunpack.c.h.b16 %v3558
    %v4264 = vunpack.c.l.b16 %v3559
    %v4265 = vunpack.c.h.b16 %v3559
    %v4266 = vunpack.c.l.b16 %v3560
    %v4267 = vunpack.c.h.b16 %v3560
    %v4268 = vunpack.c.l.b16 %v3561
    %v4269 = vunpack.c.h.b16 %v3561
    %v4270 = vunpack.c.l.b16 %v3562
    %v4271 = vunpack.c.h.b16 %v3562
    %v4272 = vunpack.c.l.b16 %v3563
    %v4273 = vunpack.c.h.b16 %v3563
    %v4274 = vunpack.c.l.b16 %v3564
    %v4275 = vunpack.c.h.b16 %v3564
    %v4276 = vunpack.c.l.b16 %v3565
    %v4277 = vunpack.c.h.b16 %v3565
    %v4278 = vunpack.c.l.b16 %v3566
    %v4279 = vunpack.c.h.b16 %v3566
    %v4280 = vunpack.c.l.b16 %v3567
    %v4281 = vunpack.c.h.b16 %v3567
    %v4282 = vunpack.c.l.b16 %v3568
    %v4283 = vunpack.c.h.b16 %v3568
    %v4284 = vunpack.c.l.b16 %v3569
    %v4285 = vunpack.c.h.b16 %v3569
    %v4286 = vunpack.c.l.b16 %v3570
    %v4287 = vunpack.c.h.b16 %v3570
    %v4288 = vunpack.c.l.b16 %v3571
    %v4289 = vunpack.c.h.b16 %v3571
    %v4290 = vunpack.c.l.b16 %v3572
    %v4291 = vunpack.c.h.b16 %v3572
    %v4292 = vunpack.c.l.b16 %v3573
    %v4293 = vunpack.c.h.b16 %v3573
    %v4294 = vunpack.c.l.b16 %v3574
    %v4295 = vunpack.c.h.b16 %v3574
    %v4296 = vunpack.c.l.b16 %v3575
    %v4297 = vunpack.c.h.b16 %v3575
    %v4298 = vunpack.c.l.b16 %v3576
    %v4299 = vunpack.c.h.b16 %v3576
    %v4300 = vunpack.c.l.b16 %v3577
    %v4301 = vunpack.c.h.b16 %v3577
    %v4302 = vunpack.c.l.b16 %v3578
    %v4303 = vunpack.c.h.b16 %v3578
    %v4304 = vunpack.c.l.b16 %v3579
    %v4305 = vunpack.c.h.b16 %v3579
    %v4306 = vunpack.c.l.b16 %v3580
    %v4307 = vunpack.c.h.b16 %v3580
    %v4308 = vunpack.c.l.b16 %v3581
    %v4309 = vunpack.c.h.b16 %v3581
    %v4310 = vunpack.c.l.b16 %v3582
    %v4311 = vunpack.c.h.b16 %v3582
    %v4312 = vunpack.c.l.b16 %v3583
    %v4313 = vunpack.c.h.b16 %v3583
    %v4314 = vunpack.c.l.b16 %v3584
    %v4315 = vunpack.c.h.b16 %v3584
    %v4316 = vunpack.c.l.b16 %v3585
    %v4317 = vunpack.c.h.b16 %v3585
    %v4318 = vunpack.c.l.b16 %v3586
    %v4319 = vunpack.c.h.b16 %v3586
    %v4320 = vunpack.c.l.b16 %v3587
    %v4321 = vunpack.c.h.b16 %v3587
    %v4322 = vunpack.c.l.b16 %v3588
    %v4323 = vunpack.c.h.b16 %v3588
    %v4324 = vunpack.c.l.b16 %v3589
    %v4325 = vunpack.c.h.b16 %v3589
    %v4326 = vunpack.c.l.b16 %v3590
    %v4327 = vunpack.c.h.b16 %v3590
    %v4328 = vunpack.c.l.b16 %v3591
    %v4329 = vunpack.c.h.b16 %v3591
    %v4330 = vunpack.c.l.b16 %v3592
    %v4331 = vunpack.c.h.b16 %v3592
    %v4332 = vunpack.c.l.b16 %v3593
    %v4333 = vunpack.c.h.b16 %v3593
    %v4334 = vunpack.c.l.b16 %v3594
    %v4335 = vunpack.c.h.b16 %v3594
    %v4336 = vunpack.c.l.b16 %v3595
    %v4337 = vunpack.c.h.b16 %v3595
    %v4338 = vunpack.c.l.b16 %v3596
    %v4339 = vunpack.c.h.b16 %v3596
    %v4340 = vunpack.c.l.b16 %v3597
    %v4341 = vunpack.c.h.b16 %v3597
    %v4342 = vunpack.c.l.b16 %v3598
    %v4343 = vunpack.c.h.b16 %v3598
    %v4344 = vunpack.c.l.b16 %v3599
    %v4345 = vunpack.c.h.b16 %v3599
    %v4346 = vunpack.c.l.b16 %v3600
    %v4347 = vunpack.c.h.b16 %v3600
    %v4348 = vunpack.c.l.b16 %v3601
    %v4349 = vunpack.c.h.b16 %v3601
    %v4350 = vunpack.c.l.b16 %v3602
    %v4351 = vunpack.c.h.b16 %v3602
    %v4352 = vunpack.c.l.b16 %v3603
    %v4353 = vunpack.c.h.b16 %v3603
    %v4354 = vunpack.c.l.b16 %v3604
    %v4355 = vunpack.c.h.b16 %v3604
    %v4356 = vunpack.c.l.b16 %v3605
    %v4357 = vunpack.c.h.b16 %v3605
    %v4358 = vunpack.c.l.b16 %v3606
    %v4359 = vunpack.c.h.b16 %v3606
    %v4360 = vunpack.c.l.b16 %v3607
    %v4361 = vunpack.c.h.b16 %v3607
    %v4362 = vunpack.c.l.b16 %v3608
    %v4363 = vunpack.c.h.b16 %v3608
    %v4364 = vunpack.c.l.b16 %v3609
    %v4365 = vunpack.c.h.b16 %v3609
    %v4366 = vunpack.c.l.b16 %v3610
    %v4367 = vunpack.c.h.b16 %v3610
    %v4368 = vunpack.c.l.b16 %v3611
    %v4369 = vunpack.c.h.b16 %v3611
    %v4370 = vunpack.c.l.b16 %v3612
    %v4371 = vunpack.c.h.b16 %v3612
    %v4372 = vunpack.c.l.b16 %v3613
    %v4373 = vunpack.c.h.b16 %v3613
    %v4374 = vunpack.c.l.b16 %v3614
    %v4375 = vunpack.c.h.b16 %v3614
    %v4376 = vunpack.c.l.b16 %v3615
    %v4377 = vunpack.c.h.b16 %v3615
    %v4378 = vunpack.c.l.b16 %v3616
    %v4379 = vunpack.c.h.b16 %v3616
    %v4380 = vunpack.c.l.b16 %v3617
    %v4381 = vunpack.c.h.b16 %v3617
    %v4382 = vunpack.c.l.b16 %v3618
    %v4383 = vunpack.c.h.b16 %v3618
    %v4384 = vunpack.c.l.b16 %v3619
    %v4385 = vunpack.c.h.b16 %v3619
    %v4386 = vunpack.c.l.b16 %v3620
    %v4387 = vunpack.c.h.b16 %v3620
    %v4388 = vunpack.c.l.b16 %v3621
    %v4389 = vunpack.c.h.b16 %v3621
    %v4390 = vunpack.c.l.b16 %v3622
    %v4391 = vunpack.c.h.b16 %v3622
    %v4392 = vunpack.c.l.b16 %v3623
    %v4393 = vunpack.c.h.b16 %v3623
    %v4394 = vunpack.c.l.b16 %v3624
    %v4395 = vunpack.c.h.b16 %v3624
    %v4396 = vunpack.c.l.b16 %v3625
    %v4397 = vunpack.c.h.b16 %v3625
    %v4398 = vunpack.c.l.b16 %v3626
    %v4399 = vunpack.c.h.b16 %v3626
    %v4400 = vunpack.c.l.b16 %v3627
    %v4401 = vunpack.c.h.b16 %v3627
    %v4402 = vunpack.c.l.b16 %v3628
    %v4403 = vunpack.c.h.b16 %v3628
    %v4404 = vunpack.c.l.b16 %v3629
    %v4405 = vunpack.c.h.b16 %v3629
    %v4406 = vunpack.c.l.b16 %v3630
    %v4407 = vunpack.c.h.b16 %v3630
    %v4408 = vunpack.c.l.b16 %v3631
    %v4409 = vunpack.c.h.b16 %v3631
    %v4410 = vunpack.c.l.b16 %v3632
    %v4411 = vunpack.c.h.b16 %v3632
    %v4412 = vunpack.c.l.b16 %v3633
    %v4413 = vunpack.c.h.b16 %v3633
    %v4414 = vunpack.c.l.b16 %v3634
    %v4415 = vunpack.c.h.b16 %v3634
    %v4416 = vunpack.c.l.b16 %v3635
    %v4417 = vunpack.c.h.b16 %v3635
    %v4418 = vunpack.c.l.b16 %v3636
    %v4419 = vunpack.c.h.b16 %v3636
    %v4420 = vunpack.c.l.b16 %v3637
    %v4421 = vunpack.c.h.b16 %v3637
    %v4422 = vunpack.c.l.b16 %v3638
    %v4423 = vunpack.c.h.b16 %v3638
    %v4424 = vunpack.c.l.b16 %v3639
    %v4425 = vunpack.c.h.b16 %v3639
    %v4426 = vunpack.c.l.b16 %v3640
    %v4427 = vunpack.c.h.b16 %v3640
    %v4428 = vunpack.c.l.b16 %v3641
    %v4429 = vunpack.c.h.b16 %v3641
    %v4430 = vunpack.c.l.b16 %v3642
    %v4431 = vunpack.c.h.b16 %v3642
    %v4432 = vunpack.c.l.b16 %v3643
    %v4433 = vunpack.c.h.b16 %v3643
    %v4434 = vpack.c.b16 %v3926, %v3922
    %v4435 = vpack.c.b16 %v3927, %v3923
    %v4436 = vpack.c.b16 %v3928, %v3924
    %v4437 = vpack.c.b16 %v3929, %v3925
    %v4438 = vpack.c.b16 %v3934, %v3930
    %v4439 = vpack.c.b16 %v3935, %v3931
    %v4440 = vpack.c.b16 %v3936, %v3932
    %v4441 = vpack.c.b16 %v3937, %v3933
    %v4442 = vpack.c.b16 %v3942, %v3938
    %v4443 = vpack.c.b16 %v3943, %v3939
    %v4444 = vpack.c.b16 %v3944, %v3940
    %v4445 = vpack.c.b16 %v3945, %v3941
    %v4446 = vpack.c.b16 %v3950, %v3946
    %v4447 = vpack.c.b16 %v3951, %v3947
    %v4448 = vpack.c.b16 %v3952, %v3948
    %v4449 = vpack.c.b16 %v3953, %v3949
    %v4450 = vpack.c.b16 %v3958, %v3954
    %v4451 = vpack.c.b16 %v3959, %v3955
    %v4452 = vpack.c.b16 %v3960, %v3956
    %v4453 = vpack.c.b16 %v3961, %v3957
    %v4454 = vpack.c.b16 %v3966, %v3962
    %v4455 = vpack.c.b16 %v3967, %v3963
    %v4456 = vpack.c.b16 %v3968, %v3964
    %v4457 = vpack.c.b16 %v3969, %v3965
    %v4458 = vpack.c.b16 %v3974, %v3970
    %v4459 = vpack.c.b16 %v3975, %v3971
    %v4460 = vpack.c.b16 %v3976, %v3972
    %v4461 = vpack.c.b16 %v3977, %v3973
    %v4462 = vpack.c.b16 %v3982, %v3978
    %v4463 = vpack.c.b16 %v3983, %v3979
    %v4464 = vpack.c.b16 %v3984, %v3980
    %v4465 = vpack.c.b16 %v3985, %v3981
    %v4466 = vpack.c.b16 %v3990, %v3986
    %v4467 = vpack.c.b16 %v3991, %v3987
    %v4468 = vpack.c.b16 %v3992, %v3988
    %v4469 = vpack.c.b16 %v3993, %v3989
    %v4470 = vpack.c.b16 %v3998, %v3994
    %v4471 = vpack.c.b16 %v3999, %v3995
    %v4472 = vpack.c.b16 %v4000, %v3996
    %v4473 = vpack.c.b16 %v4001, %v3997
    %v4474 = vpack.c.b16 %v4006, %v4002
    %v4475 = vpack.c.b16 %v4007, %v4003
    %v4476 = vpack.c.b16 %v4008, %v4004
    %v4477 = vpack.c.b16 %v4009, %v4005
    %v4478 = vpack.c.b16 %v4014, %v4010
    %v4479 = vpack.c.b16 %v4015, %v4011
    %v4480 = vpack.c.b16 %v4016, %v4012
    %v4481 = vpack.c.b16 %v4017, %v4013
    %v4482 = vpack.c.b16 %v4022, %v4018
    %v4483 = vpack.c.b16 %v4023, %v4019
    %v4484 = vpack.c.b16 %v4024, %v4020
    %v4485 = vpack.c.b16 %v4025, %v4021
    %v4486 = vpack.c.b16 %v4030, %v4026
    %v4487 = vpack.c.b16 %v4031, %v4027
    %v4488 = vpack.c.b16 %v4032, %v4028
    %v4489 = vpack.c.b16 %v4033, %v4029
    %v4490 = vpack.c.b16 %v4038, %v4034
    %v4491 = vpack.c.b16 %v4039, %v4035
    %v4492 = vpack.c.b16 %v4040, %v4036
    %v4493 = vpack.c.b16 %v4041, %v4037
    %v4494 = vpack.c.b16 %v4046, %v4042
    %v4495 = vpack.c.b16 %v4047, %v4043
    %v4496 = vpack.c.b16 %v4048, %v4044
    %v4497 = vpack.c.b16 %v4049, %v4045
    %v4498 = vpack.c.b16 %v4054, %v4050
    %v4499 = vpack.c.b16 %v4055, %v4051
    %v4500 = vpack.c.b16 %v4056, %v4052
    %v4501 = vpack.c.b16 %v4057, %v4053
    %v4502 = vpack.c.b16 %v4062, %v4058
    %v4503 = vpack.c.b16 %v4063, %v4059
    %v4504 = vpack.c.b16 %v4064, %v4060
    %v4505 = vpack.c.b16 %v4065, %v4061
    %v4506 = vpack.c.b16 %v4070, %v4066
    %v4507 = vpack.c.b16 %v4071, %v4067
    %v4508 = vpack.c.b16 %v4072, %v4068
    %v4509 = vpack.c.b16 %v4073, %v4069
    %v4510 = vpack.c.b16 %v4078, %v4074
    %v4511 = vpack.c.b16 %v4079, %v4075
    %v4512 = vpack.c.b16 %v4080, %v4076
    %v4513 = vpack.c.b16 %v4081, %v4077
    %v4514 = vpack.c.b16 %v4086, %v4082
    %v4515 = vpack.c.b16 %v4087, %v4083
    %v4516 = vpack.c.b16 %v4088, %v4084
    %v4517 = vpack.c.b16 %v4089, %v4085
    %v4518 = vpack.c.b16 %v4094, %v4090
    %v4519 = vpack.c.b16 %v4095, %v4091
    %v4520 = vpack.c.b16 %v4096, %v4092
    %v4521 = vpack.c.b16 %v4097, %v4093
    %v4522 = vpack.c.b16 %v4102, %v4098
    %v4523 = vpack.c.b16 %v4103, %v4099
    %v4524 = vpack.c.b16 %v4104, %v4100
    %v4525 = vpack.c.b16 %v4105, %v4101
    %v4526 = vpack.c.b16 %v4110, %v4106
    %v4527 = vpack.c.b16 %v4111, %v4107
    %v4528 = vpack.c.b16 %v4112, %v4108
    %v4529 = vpack.c.b16 %v4113, %v4109
    %v4530 = vpack.c.b16 %v4118, %v4114
    %v4531 = vpack.c.b16 %v4119, %v4115
    %v4532 = vpack.c.b16 %v4120, %v4116
    %v4533 = vpack.c.b16 %v4121, %v4117
    %v4534 = vpack.c.b16 %v4126, %v4122
    %v4535 = vpack.c.b16 %v4127, %v4123
    %v4536 = vpack.c.b16 %v4128, %v4124
    %v4537 = vpack.c.b16 %v4129, %v4125
    %v4538 = vpack.c.b16 %v4134, %v4130
    %v4539 = vpack.c.b16 %v4135, %v4131
    %v4540 = vpack.c.b16 %v4136, %v4132
    %v4541 = vpack.c.b16 %v4137, %v4133
    %v4542 = vpack.c.b16 %v4142, %v4138
    %v4543 = vpack.c.b16 %v4143, %v4139
    %v4544 = vpack.c.b16 %v4144, %v4140
    %v4545 = vpack.c.b16 %v4145, %v4141
    %v4546 = vpack.c.b16 %v4150, %v4146
    %v4547 = vpack.c.b16 %v4151, %v4147
    %v4548 = vpack.c.b16 %v4152, %v4148
    %v4549 = vpack.c.b16 %v4153, %v4149
    %v4550 = vpack.c.b16 %v4158, %v4154
    %v4551 = vpack.c.b16 %v4159, %v4155
    %v4552 = vpack.c.b16 %v4160, %v4156
    %v4553 = vpack.c.b16 %v4161, %v4157
    %v4554 = vpack.c.b16 %v4166, %v4162
    %v4555 = vpack.c.b16 %v4167, %v4163
    %v4556 = vpack.c.b16 %v4168, %v4164
    %v4557 = vpack.c.b16 %v4169, %v4165
    %v4558 = vpack.c.b16 %v4174, %v4170
    %v4559 = vpack.c.b16 %v4175, %v4171
    %v4560 = vpack.c.b16 %v4176, %v4172
    %v4561 = vpack.c.b16 %v4177, %v4173
    %v4562 = vpack.c.b16 %v4182, %v4178
    %v4563 = vpack.c.b16 %v4183, %v4179
    %v4564 = vpack.c.b16 %v4184, %v4180
    %v4565 = vpack.c.b16 %v4185, %v4181
    %v4566 = vpack.c.b16 %v4190, %v4186
    %v4567 = vpack.c.b16 %v4191, %v4187
    %v4568 = vpack.c.b16 %v4192, %v4188
    %v4569 = vpack.c.b16 %v4193, %v4189
    %v4570 = vpack.c.b16 %v4198, %v4194
    %v4571 = vpack.c.b16 %v4199, %v4195
    %v4572 = vpack.c.b16 %v4200, %v4196
    %v4573 = vpack.c.b16 %v4201, %v4197
    %v4574 = vpack.c.b16 %v4206, %v4202
    %v4575 = vpack.c.b16 %v4207, %v4203
    %v4576 = vpack.c.b16 %v4208, %v4204
    %v4577 = vpack.c.b16 %v4209, %v4205
    %v4578 = vpack.c.b16 %v4214, %v4210
    %v4579 = vpack.c.b16 %v4215, %v4211
    %v4580 = vpack.c.b16 %v4216, %v4212
    %v4581 = vpack.c.b16 %v4217, %v4213
    %v4582 = vpack.c.b16 %v4222, %v4218
    %v4583 = vpack.c.b16 %v4223, %v4219
    %v4584 = vpack.c.b16 %v4224, %v4220
    %v4585 = vpack.c.b16 %v4225, %v4221
    %v4586 = vpack.c.b16 %v4230, %v4226
    %v4587 = vpack.c.b16 %v4231, %v4227
    %v4588 = vpack.c.b16 %v4232, %v4228
    %v4589 = vpack.c.b16 %v4233, %v4229
    %v4590 = vpack.c.b16 %v4238, %v4234
    %v4591 = vpack.c.b16 %v4239, %v4235
    %v4592 = vpack.c.b16 %v4240, %v4236
    %v4593 = vpack.c.b16 %v4241, %v4237
    %v4594 = vpack.c.b16 %v4246, %v4242
    %v4595 = vpack.c.b16 %v4247, %v4243
    %v4596 = vpack.c.b16 %v4248, %v4244
    %v4597 = vpack.c.b16 %v4249, %v4245
    %v4598 = vpack.c.b16 %v4254, %v4250
    %v4599 = vpack.c.b16 %v4255, %v4251
    %v4600 = vpack.c.b16 %v4256, %v4252
    %v4601 = vpack.c.b16 %v4257, %v4253
    %v4602 = vpack.c.b16 %v4262, %v4258
    %v4603 = vpack.c.b16 %v4263, %v4259
    %v4604 = vpack.c.b16 %v4264, %v4260
    %v4605 = vpack.c.b16 %v4265, %v4261
    %v4606 = vpack.c.b16 %v4270, %v4266
    %v4607 = vpack.c.b16 %v4271, %v4267
    %v4608 = vpack.c.b16 %v4272, %v4268
    %v4609 = vpack.c.b16 %v4273, %v4269
    %v4610 = vpack.c.b16 %v4278, %v4274
    %v4611 = vpack.c.b16 %v4279, %v4275
    %v4612 = vpack.c.b16 %v4280, %v4276
    %v4613 = vpack.c.b16 %v4281, %v4277
    %v4614 = vpack.c.b16 %v4286, %v4282
    %v4615 = vpack.c.b16 %v4287, %v4283
    %v4616 = vpack.c.b16 %v4288, %v4284
    %v4617 = vpack.c.b16 %v4289, %v4285
    %v4618 = vpack.c.b16 %v4294, %v4290
    %v4619 = vpack.c.b16 %v4295, %v4291
    %v4620 = vpack.c.b16 %v4296, %v4292
    %v4621 = vpack.c.b16 %v4297, %v4293
    %v4622 = vpack.c.b16 %v4302, %v4298
    %v4623 = vpack.c.b16 %v4303, %v4299
    %v4624 = vpack.c.b16 %v4304, %v4300
    %v4625 = vpack.c.b16 %v4305, %v4301
    %v4626 = vpack.c.b16 %v4310, %v4306
    %v4627 = vpack.c.b16 %v4311, %v4307
    %v4628 = vpack.c.b16 %v4312, %v4308
    %v4629 = vpack.c.b16 %v4313, %v4309
    %v4630 = vpack.c.b16 %v4318, %v4314
    %v4631 = vpack.c.b16 %v4319, %v4315
    %v4632 = vpack.c.b16 %v4320, %v4316
    %v4633 = vpack.c.b16 %v4321, %v4317
    %v4634 = vpack.c.b16 %v4326, %v4322
    %v4635 = vpack.c.b16 %v4327, %v4323
    %v4636 = vpack.c.b16 %v4328, %v4324
    %v4637 = vpack.c.b16 %v4329, %v4325
    %v4638 = vpack.c.b16 %v4334, %v4330
    %v4639 = vpack.c.b16 %v4335, %v4331
    %v4640 = vpack.c.b16 %v4336, %v4332
    %v4641 = vpack.c.b16 %v4337, %v4333
    %v4642 = vpack.c.b16 %v4342, %v4338
    %v4643 = vpack.c.b16 %v4343, %v4339
    %v4644 = vpack.c.b16 %v4344, %v4340
    %v4645 = vpack.c.b16 %v4345, %v4341
    %v4646 = vpack.c.b16 %v4350, %v4346
    %v4647 = vpack.c.b16 %v4351, %v4347
    %v4648 = vpack.c.b16 %v4352, %v4348
    %v4649 = vpack.c.b16 %v4353, %v4349
    %v4650 = vpack.c.b16 %v4358, %v4354
    %v4651 = vpack.c.b16 %v4359, %v4355
    %v4652 = vpack.c.b16 %v4360, %v4356
    %v4653 = vpack.c.b16 %v4361, %v4357
    %v4654 = vpack.c.b16 %v4366, %v4362
    %v4655 = vpack.c.b16 %v4367, %v4363
    %v4656 = vpack.c.b16 %v4368, %v4364
    %v4657 = vpack.c.b16 %v4369, %v4365
    %v4658 = vpack.c.b16 %v4374, %v4370
    %v4659 = vpack.c.b16 %v4375, %v4371
    %v4660 = vpack.c.b16 %v4376, %v4372
    %v4661 = vpack.c.b16 %v4377, %v4373
    %v4662 = vpack.c.b16 %v4382, %v4378
    %v4663 = vpack.c.b16 %v4383, %v4379
    %v4664 = vpack.c.b16 %v4384, %v4380
    %v4665 = vpack.c.b16 %v4385, %v4381
    %v4666 = vpack.c.b16 %v4390, %v4386
    %v4667 = vpack.c.b16 %v4391, %v4387
    %v4668 = vpack.c.b16 %v4392, %v4388
    %v4669 = vpack.c.b16 %v4393, %v4389
    %v4670 = vpack.c.b16 %v4398, %v4394
    %v4671 = vpack.c.b16 %v4399, %v4395
    %v4672 = vpack.c.b16 %v4400, %v4396
    %v4673 = vpack.c.b16 %v4401, %v4397
    %v4674 = vpack.c.b16 %v4406, %v4402
    %v4675 = vpack.c.b16 %v4407, %v4403
    %v4676 = vpack.c.b16 %v4408, %v4404
    %v4677 = vpack.c.b16 %v4409, %v4405
    %v4678 = vpack.c.b16 %v4414, %v4410
    %v4679 = vpack.c.b16 %v4415, %v4411
    %v4680 = vpack.c.b16 %v4416, %v4412
    %v4681 = vpack.c.b16 %v4417, %v4413
    %v4682 = vpack.c.b16 %v4422, %v4418
    %v4683 = vpack.c.b16 %v4423, %v4419
    %v4684 = vpack.c.b16 %v4424, %v4420
    %v4685 = vpack.c.b16 %v4425, %v4421
    %v4686 = vpack.c.b16 %v4430, %v4426
    %v4687 = vpack.c.b16 %v4431, %v4427
    %v4688 = vpack.c.b16 %v4432, %v4428
    %v4689 = vpack.c.b16 %v4433, %v4429
    %4946 = vmatprep.subr.bf16.mxu0 %v4435
    %4947 = vmatpush1.bf16.msra.mxu0 %v4434
    %4948 = vmatprep.subr.bf16.mxu0 %v4439
    %4949 = vmatpush1.bf16.msra.mxu0 %v4438
    %4950 = vmatprep.subr.bf16.mxu0 %v4443
    %4951 = vmatpush1.bf16.msra.mxu0 %v4442
    %4952 = vmatprep.subr.bf16.mxu0 %v4447
    %4953 = vmatpush1.bf16.msra.mxu0 %v4446
    %4954 = vmatprep.subr.bf16.mxu0 %v4451
    %4955 = vmatpush1.bf16.msra.mxu0 %v4450
    %4956 = vmatprep.subr.bf16.mxu0 %v4455
    %4957 = vmatpush1.bf16.msra.mxu0 %v4454
    %4958 = vmatprep.subr.bf16.mxu0 %v4459
    %4959 = vmatpush1.bf16.msra.mxu0 %v4458
    %4960 = vmatprep.subr.bf16.mxu0 %v4463
    %4961 = vmatpush1.bf16.msra.mxu0 %v4462
    %4962 = vmatprep.subr.bf16.mxu0 %v4467
    %4963 = vmatpush1.bf16.msra.mxu0 %v4466
    %4964 = vmatprep.subr.bf16.mxu0 %v4471
    %4965 = vmatpush1.bf16.msra.mxu0 %v4470
    %4966 = vmatprep.subr.bf16.mxu0 %v4475
    %4967 = vmatpush1.bf16.msra.mxu0 %v4474
    %4968 = vmatprep.subr.bf16.mxu0 %v4479
    %4969 = vmatpush1.bf16.msra.mxu0 %v4478
    %4970 = vmatprep.subr.bf16.mxu0 %v4483
    %4971 = vmatpush1.bf16.msra.mxu0 %v4482
    %4972 = vmatprep.subr.bf16.mxu0 %v4487
    %4973 = vmatpush1.bf16.msra.mxu0 %v4486
    %4974 = vmatprep.subr.bf16.mxu0 %v4491
    %4975 = vmatpush1.bf16.msra.mxu0 %v4490
    %4976 = vmatprep.subr.bf16.mxu0 %v4495
    %4977 = vmatpush1.bf16.msra.mxu0 %v4494
    %4978 = vmatprep.mubr.bf16.mxu0 %v3381
    %4979 = vmatmul.mubr.bf16.gmra.mrb[0].mxu0 %v3380
    %v4980 = vpop.f32.mrb[0].mxu0
    %v4981 = vadd.f32 %v3649, %v4980
    %v4982 = vpop.f32.mrb[0].mxu0
    %v4983 = vadd.f32 %v3653, %v4982
    %v4984 = vpop.f32.mrb[0].mxu0
    %v4985 = vpop.f32.mrb[0].mxu0
    %4986 = vdwg.mxu0
    %4987 = vmatprep.subr.bf16.mxu0 %v4499
    %4988 = vmatpush1.bf16.msra.mxu0 %v4498
    %4989 = vmatprep.subr.bf16.mxu0 %v4503
    %4990 = vmatpush1.bf16.msra.mxu0 %v4502
    %4991 = vmatprep.subr.bf16.mxu0 %v4507
    %4992 = vmatpush1.bf16.msra.mxu0 %v4506
    %4993 = vmatprep.subr.bf16.mxu0 %v4511
    %4994 = vmatpush1.bf16.msra.mxu0 %v4510
    %4995 = vmatprep.subr.bf16.mxu0 %v4515
    %4996 = vmatpush1.bf16.msra.mxu0 %v4514
    %4997 = vmatprep.subr.bf16.mxu0 %v4519
    %4998 = vmatpush1.bf16.msra.mxu0 %v4518
    %4999 = vmatprep.subr.bf16.mxu0 %v4523
    %5000 = vmatpush1.bf16.msra.mxu0 %v4522
    %5001 = vmatprep.subr.bf16.mxu0 %v4527
    %5002 = vmatpush1.bf16.msra.mxu0 %v4526
    %5003 = vmatprep.subr.bf16.mxu0 %v4531
    %5004 = vmatpush1.bf16.msra.mxu0 %v4530
    %5005 = vmatprep.subr.bf16.mxu0 %v4535
    %5006 = vmatpush1.bf16.msra.mxu0 %v4534
    %5007 = vmatprep.subr.bf16.mxu0 %v4539
    %5008 = vmatpush1.bf16.msra.mxu0 %v4538
    %5009 = vmatprep.subr.bf16.mxu0 %v4543
    %5010 = vmatpush1.bf16.msra.mxu0 %v4542
    %5011 = vmatprep.subr.bf16.mxu0 %v4547
    %5012 = vmatpush1.bf16.msra.mxu0 %v4546
    %5013 = vmatprep.subr.bf16.mxu0 %v4551
    %5014 = vmatpush1.bf16.msra.mxu0 %v4550
    %5015 = vmatprep.subr.bf16.mxu0 %v4555
    %5016 = vmatpush1.bf16.msra.mxu0 %v4554
    %5017 = vmatprep.subr.bf16.mxu0 %v4559
    %5018 = vmatpush1.bf16.msra.mxu0 %v4558
    %5019 = vmatprep.mubr.bf16.mxu0 %v3383
    %5020 = vmatmul.mubr.bf16.gmra.mrb[0].mxu0 %v3382
    %v5021 = vpop.f32.mrb[0].mxu0
    %v5022 = vadd.f32 %v4981, %v5021
    %v5023 = vpop.f32.mrb[0].mxu0
    %v5024 = vadd.f32 %v4983, %v5023
    %v5025 = vpop.f32.mrb[0].mxu0
    %v5026 = vpop.f32.mrb[0].mxu0
    %5027 = vdwg.mxu0
    %5028 = vmatprep.subr.bf16.mxu0 %v4563
    %5029 = vmatpush1.bf16.msra.mxu0 %v4562
    %5030 = vmatprep.subr.bf16.mxu0 %v4567
    %5031 = vmatpush1.bf16.msra.mxu0 %v4566
    %5032 = vmatprep.subr.bf16.mxu0 %v4571
    %5033 = vmatpush1.bf16.msra.mxu0 %v4570
    %5034 = vmatprep.subr.bf16.mxu0 %v4575
    %5035 = vmatpush1.bf16.msra.mxu0 %v4574
    %5036 = vmatprep.subr.bf16.mxu0 %v4579
    %5037 = vmatpush1.bf16.msra.mxu0 %v4578
    %5038 = vmatprep.subr.bf16.mxu0 %v4583
    %5039 = vmatpush1.bf16.msra.mxu0 %v4582
    %5040 = vmatprep.subr.bf16.mxu0 %v4587
    %5041 = vmatpush1.bf16.msra.mxu0 %v4586
    %5042 = vmatprep.subr.bf16.mxu0 %v4591
    %5043 = vmatpush1.bf16.msra.mxu0 %v4590
    %5044 = vmatprep.subr.bf16.mxu0 %v4595
    %5045 = vmatpush1.bf16.msra.mxu0 %v4594
    %5046 = vmatprep.subr.bf16.mxu0 %v4599
    %5047 = vmatpush1.bf16.msra.mxu0 %v4598
    %5048 = vmatprep.subr.bf16.mxu0 %v4603
    %5049 = vmatpush1.bf16.msra.mxu0 %v4602
    %5050 = vmatprep.subr.bf16.mxu0 %v4607
    %5051 = vmatpush1.bf16.msra.mxu0 %v4606
    %5052 = vmatprep.subr.bf16.mxu0 %v4611
    %5053 = vmatpush1.bf16.msra.mxu0 %v4610
    %5054 = vmatprep.subr.bf16.mxu0 %v4615
    %5055 = vmatpush1.bf16.msra.mxu0 %v4614
    %5056 = vmatprep.subr.bf16.mxu0 %v4619
    %5057 = vmatpush1.bf16.msra.mxu0 %v4618
    %5058 = vmatprep.subr.bf16.mxu0 %v4623
    %5059 = vmatpush1.bf16.msra.mxu0 %v4622
    %5060 = vmatprep.mubr.bf16.mxu0 %v3385
    %5061 = vmatmul.mubr.bf16.gmra.mrb[0].mxu0 %v3384
    %v5062 = vpop.f32.mrb[0].mxu0
    %v5063 = vadd.f32 %v5022, %v5062
    %v5064 = vpop.f32.mrb[0].mxu0
    %v5065 = vadd.f32 %v5024, %v5064
    %v5066 = vpop.f32.mrb[0].mxu0
    %v5067 = vpop.f32.mrb[0].mxu0
    %5068 = vdwg.mxu0
    %5069 = vmatprep.subr.bf16.mxu0 %v4627
    %5070 = vmatpush1.bf16.msra.mxu0 %v4626
    %5071 = vmatprep.subr.bf16.mxu0 %v4631
    %5072 = vmatpush1.bf16.msra.mxu0 %v4630
    %5073 = vmatprep.subr.bf16.mxu0 %v4635
    %5074 = vmatpush1.bf16.msra.mxu0 %v4634
    %5075 = vmatprep.subr.bf16.mxu0 %v4639
    %5076 = vmatpush1.bf16.msra.mxu0 %v4638
    %5077 = vmatprep.subr.bf16.mxu0 %v4643
    %5078 = vmatpush1.bf16.msra.mxu0 %v4642
    %5079 = vmatprep.subr.bf16.mxu0 %v4647
    %5080 = vmatpush1.bf16.msra.mxu0 %v4646
    %5081 = vmatprep.subr.bf16.mxu0 %v4651
    %5082 = vmatpush1.bf16.msra.mxu0 %v4650
    %5083 = vmatprep.subr.bf16.mxu0 %v4655
    %5084 = vmatpush1.bf16.msra.mxu0 %v4654
    %5085 = vmatprep.subr.bf16.mxu0 %v4659
    %5086 = vmatpush1.bf16.msra.mxu0 %v4658
    %5087 = vmatprep.subr.bf16.mxu0 %v4663
    %5088 = vmatpush1.bf16.msra.mxu0 %v4662
    %5089 = vmatprep.subr.bf16.mxu0 %v4667
    %5090 = vmatpush1.bf16.msra.mxu0 %v4666
    %5091 = vmatprep.subr.bf16.mxu0 %v4671
    %5092 = vmatpush1.bf16.msra.mxu0 %v4670
    %5093 = vmatprep.subr.bf16.mxu0 %v4675
    %5094 = vmatpush1.bf16.msra.mxu0 %v4674
    %5095 = vmatprep.subr.bf16.mxu0 %v4679
    %5096 = vmatpush1.bf16.msra.mxu0 %v4678
    %5097 = vmatprep.subr.bf16.mxu0 %v4683
    %5098 = vmatpush1.bf16.msra.mxu0 %v4682
    %5099 = vmatprep.subr.bf16.mxu0 %v4687
    %5100 = vmatpush1.bf16.msra.mxu0 %v4686
    %5101 = vmatprep.mubr.bf16.mxu0 %v3387
    %5102 = vmatmul.mubr.bf16.gmra.mrb[0].mxu0 %v3386
    %v5103 = vpop.f32.mrb[0].mxu0
    %v5104 = vadd.f32 %v5063, %v5103
    %v5105 = vpop.f32.mrb[0].mxu0
    %v5106 = vadd.f32 %v5065, %v5105
    %v5107 = vpop.f32.mrb[0].mxu0
    %v5108 = vpop.f32.mrb[0].mxu0
    %5109 = vdwg.mxu0
    %5110 = vmatprep.subr.bf16.mxu0 %v4437
    %5111 = vmatpush1.bf16.msra.mxu0 %v4436
    %5112 = vmatprep.subr.bf16.mxu0 %v4441
    %5113 = vmatpush1.bf16.msra.mxu0 %v4440
    %5114 = vmatprep.subr.bf16.mxu0 %v4445
    %5115 = vmatpush1.bf16.msra.mxu0 %v4444
    %5116 = vmatprep.subr.bf16.mxu0 %v4449
    %5117 = vmatpush1.bf16.msra.mxu0 %v4448
    %5118 = vmatprep.subr.bf16.mxu0 %v4453
    %5119 = vmatpush1.bf16.msra.mxu0 %v4452
    %5120 = vmatprep.subr.bf16.mxu0 %v4457
    %5121 = vmatpush1.bf16.msra.mxu0 %v4456
    %5122 = vmatprep.subr.bf16.mxu0 %v4461
    %5123 = vmatpush1.bf16.msra.mxu0 %v4460
    %5124 = vmatprep.subr.bf16.mxu0 %v4465
    %5125 = vmatpush1.bf16.msra.mxu0 %v4464
    %5126 = vmatprep.subr.bf16.mxu0 %v4469
    %5127 = vmatpush1.bf16.msra.mxu0 %v4468
    %5128 = vmatprep.subr.bf16.mxu0 %v4473
    %5129 = vmatpush1.bf16.msra.mxu0 %v4472
    %5130 = vmatprep.subr.bf16.mxu0 %v4477
    %5131 = vmatpush1.bf16.msra.mxu0 %v4476
    %5132 = vmatprep.subr.bf16.mxu0 %v4481
    %5133 = vmatpush1.bf16.msra.mxu0 %v4480
    %5134 = vmatprep.subr.bf16.mxu0 %v4485
    %5135 = vmatpush1.bf16.msra.mxu0 %v4484
    %5136 = vmatprep.subr.bf16.mxu0 %v4489
    %5137 = vmatpush1.bf16.msra.mxu0 %v4488
    %5138 = vmatprep.subr.bf16.mxu0 %v4493
    %5139 = vmatpush1.bf16.msra.mxu0 %v4492
    %5140 = vmatprep.subr.bf16.mxu0 %v4497
    %5141 = vmatpush1.bf16.msra.mxu0 %v4496
    %5142 = vmatprep.mubr.bf16.mxu0 %v3381
    %5143 = vmatmul.mubr.bf16.gmra.mrb[0].mxu0 %v3380
    %v5144 = vpop.f32.mrb[0].mxu0
    %v5145 = vadd.f32 %v3657, %v5144
    %v5146 = vpop.f32.mrb[0].mxu0
    %v5147 = vadd.f32 %v3661, %v5146
    %v5148 = vpop.f32.mrb[0].mxu0
    %v5149 = vpop.f32.mrb[0].mxu0
    %5150 = vdwg.mxu0
    %5151 = vmatprep.subr.bf16.mxu0 %v4501
    %5152 = vmatpush1.bf16.msra.mxu0 %v4500
    %5153 = vmatprep.subr.bf16.mxu0 %v4505
    %5154 = vmatpush1.bf16.msra.mxu0 %v4504
    %5155 = vmatprep.subr.bf16.mxu0 %v4509
    %5156 = vmatpush1.bf16.msra.mxu0 %v4508
    %5157 = vmatprep.subr.bf16.mxu0 %v4513
    %5158 = vmatpush1.bf16.msra.mxu0 %v4512
    %5159 = vmatprep.subr.bf16.mxu0 %v4517
    %5160 = vmatpush1.bf16.msra.mxu0 %v4516
    %5161 = vmatprep.subr.bf16.mxu0 %v4521
    %5162 = vmatpush1.bf16.msra.mxu0 %v4520
    %5163 = vmatprep.subr.bf16.mxu0 %v4525
    %5164 = vmatpush1.bf16.msra.mxu0 %v4524
    %5165 = vmatprep.subr.bf16.mxu0 %v4529
    %5166 = vmatpush1.bf16.msra.mxu0 %v4528
    %5167 = vmatprep.subr.bf16.mxu0 %v4533
    %5168 = vmatpush1.bf16.msra.mxu0 %v4532
    %5169 = vmatprep.subr.bf16.mxu0 %v4537
    %5170 = vmatpush1.bf16.msra.mxu0 %v4536
    %5171 = vmatprep.subr.bf16.mxu0 %v4541
    %5172 = vmatpush1.bf16.msra.mxu0 %v4540
    %5173 = vmatprep.subr.bf16.mxu0 %v4545
    %5174 = vmatpush1.bf16.msra.mxu0 %v4544
    %5175 = vmatprep.subr.bf16.mxu0 %v4549
    %5176 = vmatpush1.bf16.msra.mxu0 %v4548
    %5177 = vmatprep.subr.bf16.mxu0 %v4553
    %5178 = vmatpush1.bf16.msra.mxu0 %v4552
    %5179 = vmatprep.subr.bf16.mxu0 %v4557
    %5180 = vmatpush1.bf16.msra.mxu0 %v4556
    %5181 = vmatprep.subr.bf16.mxu0 %v4561
    %5182 = vmatpush1.bf16.msra.mxu0 %v4560
    %5183 = vmatprep.mubr.bf16.mxu0 %v3383
    %5184 = vmatmul.mubr.bf16.gmra.mrb[0].mxu0 %v3382
    %v5185 = vpop.f32.mrb[0].mxu0
    %v5186 = vadd.f32 %v5145, %v5185
    %v5187 = vpop.f32.mrb[0].mxu0
    %v5188 = vadd.f32 %v5147, %v5187
    %v5189 = vpop.f32.mrb[0].mxu0
    %v5190 = vpop.f32.mrb[0].mxu0
    %5191 = vdwg.mxu0
    %5192 = vmatprep.subr.bf16.mxu0 %v4565
    %5193 = vmatpush1.bf16.msra.mxu0 %v4564
    %5194 = vmatprep.subr.bf16.mxu0 %v4569
    %5195 = vmatpush1.bf16.msra.mxu0 %v4568
    %5196 = vmatprep.subr.bf16.mxu0 %v4573
    %5197 = vmatpush1.bf16.msra.mxu0 %v4572
    %5198 = vmatprep.subr.bf16.mxu0 %v4577
    %5199 = vmatpush1.bf16.msra.mxu0 %v4576
    %5200 = vmatprep.subr.bf16.mxu0 %v4581
    %5201 = vmatpush1.bf16.msra.mxu0 %v4580
    %5202 = vmatprep.subr.bf16.mxu0 %v4585
    %5203 = vmatpush1.bf16.msra.mxu0 %v4584
    %5204 = vmatprep.subr.bf16.mxu0 %v4589
    %5205 = vmatpush1.bf16.msra.mxu0 %v4588
    %5206 = vmatprep.subr.bf16.mxu0 %v4593
    %5207 = vmatpush1.bf16.msra.mxu0 %v4592
    %5208 = vmatprep.subr.bf16.mxu0 %v4597
    %5209 = vmatpush1.bf16.msra.mxu0 %v4596
    %5210 = vmatprep.subr.bf16.mxu0 %v4601
    %5211 = vmatpush1.bf16.msra.mxu0 %v4600
    %5212 = vmatprep.subr.bf16.mxu0 %v4605
    %5213 = vmatpush1.bf16.msra.mxu0 %v4604
    %5214 = vmatprep.subr.bf16.mxu0 %v4609
    %5215 = vmatpush1.bf16.msra.mxu0 %v4608
    %5216 = vmatprep.subr.bf16.mxu0 %v4613
    %5217 = vmatpush1.bf16.msra.mxu0 %v4612
    %5218 = vmatprep.subr.bf16.mxu0 %v4617
    %5219 = vmatpush1.bf16.msra.mxu0 %v4616
    %5220 = vmatprep.subr.bf16.mxu0 %v4621
    %5221 = vmatpush1.bf16.msra.mxu0 %v4620
    %5222 = vmatprep.subr.bf16.mxu0 %v4625
    %5223 = vmatpush1.bf16.msra.mxu0 %v4624
    %5224 = vmatprep.mubr.bf16.mxu0 %v3385
    %5225 = vmatmul.mubr.bf16.gmra.mrb[0].mxu0 %v3384
    %v5226 = vpop.f32.mrb[0].mxu0
    %v5227 = vadd.f32 %v5186, %v5226
    %v5228 = vpop.f32.mrb[0].mxu0
    %v5229 = vadd.f32 %v5188, %v5228
    %v5230 = vpop.f32.mrb[0].mxu0
    %v5231 = vpop.f32.mrb[0].mxu0
    %5232 = vdwg.mxu0
    %5233 = vmatprep.subr.bf16.mxu0 %v4629
    %5234 = vmatpush1.bf16.msra.mxu0 %v4628
    %5235 = vmatprep.subr.bf16.mxu0 %v4633
    %5236 = vmatpush1.bf16.msra.mxu0 %v4632
    %5237 = vmatprep.subr.bf16.mxu0 %v4637
    %5238 = vmatpush1.bf16.msra.mxu0 %v4636
    %5239 = vmatprep.subr.bf16.mxu0 %v4641
    %5240 = vmatpush1.bf16.msra.mxu0 %v4640
    %5241 = vmatprep.subr.bf16.mxu0 %v4645
    %5242 = vmatpush1.bf16.msra.mxu0 %v4644
    %5243 = vmatprep.subr.bf16.mxu0 %v4649
    %5244 = vmatpush1.bf16.msra.mxu0 %v4648
    %5245 = vmatprep.subr.bf16.mxu0 %v4653
    %5246 = vmatpush1.bf16.msra.mxu0 %v4652
    %5247 = vmatprep.subr.bf16.mxu0 %v4657
    %5248 = vmatpush1.bf16.msra.mxu0 %v4656
    %5249 = vmatprep.subr.bf16.mxu0 %v4661
    %5250 = vmatpush1.bf16.msra.mxu0 %v4660
    %5251 = vmatprep.subr.bf16.mxu0 %v4665
    %5252 = vmatpush1.bf16.msra.mxu0 %v4664
    %5253 = vmatprep.subr.bf16.mxu0 %v4669
    %5254 = vmatpush1.bf16.msra.mxu0 %v4668
    %5255 = vmatprep.subr.bf16.mxu0 %v4673
    %5256 = vmatpush1.bf16.msra.mxu0 %v4672
    %5257 = vmatprep.subr.bf16.mxu0 %v4677
    %5258 = vmatpush1.bf16.msra.mxu0 %v4676
    %5259 = vmatprep.subr.bf16.mxu0 %v4681
    %5260 = vmatpush1.bf16.msra.mxu0 %v4680
    %5261 = vmatprep.subr.bf16.mxu0 %v4685
    %5262 = vmatpush1.bf16.msra.mxu0 %v4684
    %5263 = vmatprep.subr.bf16.mxu0 %v4689
    %5264 = vmatpush1.bf16.msra.mxu0 %v4688
    %5265 = vmatprep.mubr.bf16.mxu0 %v3387
    %5266 = vmatmul.mubr.bf16.gmra.mrb[0].mxu0 %v3386
    %v5267 = vpop.f32.mrb[0].mxu0
    %v5268 = vadd.f32 %v5227, %v5267
    %v5269 = vpop.f32.mrb[0].mxu0
    %v5270 = vadd.f32 %v5229, %v5269
    %v5271 = vpop.f32.mrb[0].mxu0
    %v5272 = vpop.f32.mrb[0].mxu0
    %5273 = vdwg.mxu0
    %v5274 = vmax.f32 %v5104, 0.0
    %v5275 = vmax.f32 %v5106, 0.0
    %v5276 = vmax.f32 %v5268, 0.0
    %v5277 = vmax.f32 %v5270, 0.0
    %v5278 = vpack.c.bf16 %v5274, %v5274
    %v5279 = vpack.c.bf16 %v5275, %v5275
    %v5280 = vpack.c.bf16 %v5276, %v5276
    %v5281 = vpack.c.bf16 %v5277, %v5277
    %v5282 = vld [vmem:[%s17] sm:$0xff]
    %v5283 = vld [vmem:[%s17 + $0x8] sm:$0xff]
    %v5284 = vld [vmem:[%s17 + $0x10] sm:$0xff]
    %v5285 = vld [vmem:[%s17 + $0x18] sm:$0xff]
    %v5286 = vld [vmem:[%s17 + $0x20] sm:$0xff]
    %v5287 = vld [vmem:[%s17 + $0x28] sm:$0xff]
    %v5288 = vld [vmem:[%s17 + $0x30] sm:$0xff]
    %v5289 = vld [vmem:[%s17 + $0x38] sm:$0xff]
    %v5290 = vld [vmem:[%s17 + $0x40] sm:$0xff]
    %v5291 = vld [vmem:[%s17 + $0x48] sm:$0xff]
    %v5292 = vld [vmem:[%s17 + $0x50] sm:$0xff]
    %v5293 = vld [vmem:[%s17 + $0x58] sm:$0xff]
    %v5294 = vld [vmem:[%s17 + $0x60] sm:$0xff]
    %v5295 = vld [vmem:[%s17 + $0x68] sm:$0xff]
    %v5296 = vld [vmem:[%s17 + $0x70] sm:$0xff]
    %v5297 = vld [vmem:[%s17 + $0x78] sm:$0xff]
    %v5298 = vld [vmem:[%s17 + $0x80] sm:$0xff]
    %v5299 = vld [vmem:[%s17 + $0x88] sm:$0xff]
    %v5300 = vld [vmem:[%s17 + $0x90] sm:$0xff]
    %v5301 = vld [vmem:[%s17 + $0x98] sm:$0xff]
    %v5302 = vld [vmem:[%s17 + $0xa0] sm:$0xff]
    %v5303 = vld [vmem:[%s17 + $0xa8] sm:$0xff]
    %v5304 = vld [vmem:[%s17 + $0xb0] sm:$0xff]
    %v5305 = vld [vmem:[%s17 + $0xb8] sm:$0xff]
    %v5306 = vld [vmem:[%s17 + $0xc0] sm:$0xff]
    %v5307 = vld [vmem:[%s17 + $0xc8] sm:$0xff]
    %v5308 = vld [vmem:[%s17 + $0xd0] sm:$0xff]
    %v5309 = vld [vmem:[%s17 + $0xd8] sm:$0xff]
    %v5310 = vld [vmem:[%s17 + $0xe0] sm:$0xff]
    %v5311 = vld [vmem:[%s17 + $0xe8] sm:$0xff]
    %v5312 = vld [vmem:[%s17 + $0xf0] sm:$0xff]
    %v5313 = vld [vmem:[%s17 + $0xf8] sm:$0xff]
    %v5314 = vld [vmem:[%s17 + $0x100] sm:$0xff]
    %v5315 = vld [vmem:[%s17 + $0x108] sm:$0xff]
    %v5316 = vld [vmem:[%s17 + $0x110] sm:$0xff]
    %v5317 = vld [vmem:[%s17 + $0x118] sm:$0xff]
    %v5318 = vld [vmem:[%s17 + $0x120] sm:$0xff]
    %v5319 = vld [vmem:[%s17 + $0x128] sm:$0xff]
    %v5320 = vld [vmem:[%s17 + $0x130] sm:$0xff]
    %v5321 = vld [vmem:[%s17 + $0x138] sm:$0xff]
    %v5322 = vld [vmem:[%s17 + $0x140] sm:$0xff]
    %v5323 = vld [vmem:[%s17 + $0x148] sm:$0xff]
    %v5324 = vld [vmem:[%s17 + $0x150] sm:$0xff]
    %v5325 = vld [vmem:[%s17 + $0x158] sm:$0xff]
    %v5326 = vld [vmem:[%s17 + $0x160] sm:$0xff]
    %v5327 = vld [vmem:[%s17 + $0x168] sm:$0xff]
    %v5328 = vld [vmem:[%s17 + $0x170] sm:$0xff]
    %v5329 = vld [vmem:[%s17 + $0x178] sm:$0xff]
    %v5330 = vld [vmem:[%s17 + $0x180] sm:$0xff]
    %v5331 = vld [vmem:[%s17 + $0x188] sm:$0xff]
    %v5332 = vld [vmem:[%s17 + $0x190] sm:$0xff]
    %v5333 = vld [vmem:[%s17 + $0x198] sm:$0xff]
    %v5334 = vld [vmem:[%s17 + $0x1a0] sm:$0xff]
    %v5335 = vld [vmem:[%s17 + $0x1a8] sm:$0xff]
    %v5336 = vld [vmem:[%s17 + $0x1b0] sm:$0xff]
    %v5337 = vld [vmem:[%s17 + $0x1b8] sm:$0xff]
    %v5338 = vld [vmem:[%s17 + $0x1c0] sm:$0xff]
    %v5339 = vld [vmem:[%s17 + $0x1c8] sm:$0xff]
    %v5340 = vld [vmem:[%s17 + $0x1d0] sm:$0xff]
    %v5341 = vld [vmem:[%s17 + $0x1d8] sm:$0xff]
    %v5342 = vld [vmem:[%s17 + $0x1e0] sm:$0xff]
    %v5343 = vld [vmem:[%s17 + $0x1e8] sm:$0xff]
    %v5344 = vld [vmem:[%s17 + $0x1f0] sm:$0xff]
    %v5345 = vld [vmem:[%s17 + $0x1f8] sm:$0xff]
    %v5346 = vld [vmem:[%s18] sm:$0x3]
    %v5348 = vlaneseq
    %v5349 = vshrl.u32 %v5348, 7
    %v5350 = vsub.s32 0, %v5349
    %v5351 = vrot.slane %v5346, %v5350
    %v5352 = vlaneseq
    %v5353 = vshrl.u32 %v5352, 7
    %v5354 = vsub.s32 1, %v5353
    %v5355 = vrot.slane %v5346, %v5354
    %v5422 = vunpack.c.l.b16 %v5282
    %v5423 = vunpack.c.h.b16 %v5282
    %v5424 = vunpack.c.l.b16 %v5283
    %v5425 = vunpack.c.h.b16 %v5283
    %v5426 = vunpack.c.l.b16 %v5284
    %v5427 = vunpack.c.h.b16 %v5284
    %v5428 = vunpack.c.l.b16 %v5285
    %v5429 = vunpack.c.h.b16 %v5285
    %v5430 = vunpack.c.l.b16 %v5286
    %v5431 = vunpack.c.h.b16 %v5286
    %v5432 = vunpack.c.l.b16 %v5287
    %v5433 = vunpack.c.h.b16 %v5287
    %v5434 = vunpack.c.l.b16 %v5288
    %v5435 = vunpack.c.h.b16 %v5288
    %v5436 = vunpack.c.l.b16 %v5289
    %v5437 = vunpack.c.h.b16 %v5289
    %v5438 = vunpack.c.l.b16 %v5290
    %v5439 = vunpack.c.h.b16 %v5290
    %v5440 = vunpack.c.l.b16 %v5291
    %v5441 = vunpack.c.h.b16 %v5291
    %v5442 = vunpack.c.l.b16 %v5292
    %v5443 = vunpack.c.h.b16 %v5292
    %v5444 = vunpack.c.l.b16 %v5293
    %v5445 = vunpack.c.h.b16 %v5293
    %v5446 = vunpack.c.l.b16 %v5294
    %v5447 = vunpack.c.h.b16 %v5294
    %v5448 = vunpack.c.l.b16 %v5295
    %v5449 = vunpack.c.h.b16 %v5295
    %v5450 = vunpack.c.l.b16 %v5296
    %v5451 = vunpack.c.h.b16 %v5296
    %v5452 = vunpack.c.l.b16 %v5297
    %v5453 = vunpack.c.h.b16 %v5297
    %v5454 = vunpack.c.l.b16 %v5298
    %v5455 = vunpack.c.h.b16 %v5298
    %v5456 = vunpack.c.l.b16 %v5299
    %v5457 = vunpack.c.h.b16 %v5299
    %v5458 = vunpack.c.l.b16 %v5300
    %v5459 = vunpack.c.h.b16 %v5300
    %v5460 = vunpack.c.l.b16 %v5301
    %v5461 = vunpack.c.h.b16 %v5301
    %v5462 = vunpack.c.l.b16 %v5302
    %v5463 = vunpack.c.h.b16 %v5302
    %v5464 = vunpack.c.l.b16 %v5303
    %v5465 = vunpack.c.h.b16 %v5303
    %v5466 = vunpack.c.l.b16 %v5304
    %v5467 = vunpack.c.h.b16 %v5304
    %v5468 = vunpack.c.l.b16 %v5305
    %v5469 = vunpack.c.h.b16 %v5305
    %v5470 = vunpack.c.l.b16 %v5306
    %v5471 = vunpack.c.h.b16 %v5306
    %v5472 = vunpack.c.l.b16 %v5307
    %v5473 = vunpack.c.h.b16 %v5307
    %v5474 = vunpack.c.l.b16 %v5308
    %v5475 = vunpack.c.h.b16 %v5308
    %v5476 = vunpack.c.l.b16 %v5309
    %v5477 = vunpack.c.h.b16 %v5309
    %v5478 = vunpack.c.l.b16 %v5310
    %v5479 = vunpack.c.h.b16 %v5310
    %v5480 = vunpack.c.l.b16 %v5311
    %v5481 = vunpack.c.h.b16 %v5311
    %v5482 = vunpack.c.l.b16 %v5312
    %v5483 = vunpack.c.h.b16 %v5312
    %v5484 = vunpack.c.l.b16 %v5313
    %v5485 = vunpack.c.h.b16 %v5313
    %v5486 = vunpack.c.l.b16 %v5314
    %v5487 = vunpack.c.h.b16 %v5314
    %v5488 = vunpack.c.l.b16 %v5315
    %v5489 = vunpack.c.h.b16 %v5315
    %v5490 = vunpack.c.l.b16 %v5316
    %v5491 = vunpack.c.h.b16 %v5316
    %v5492 = vunpack.c.l.b16 %v5317
    %v5493 = vunpack.c.h.b16 %v5317
    %v5494 = vunpack.c.l.b16 %v5318
    %v5495 = vunpack.c.h.b16 %v5318
    %v5496 = vunpack.c.l.b16 %v5319
    %v5497 = vunpack.c.h.b16 %v5319
    %v5498 = vunpack.c.l.b16 %v5320
    %v5499 = vunpack.c.h.b16 %v5320
    %v5500 = vunpack.c.l.b16 %v5321
    %v5501 = vunpack.c.h.b16 %v5321
    %v5502 = vunpack.c.l.b16 %v5322
    %v5503 = vunpack.c.h.b16 %v5322
    %v5504 = vunpack.c.l.b16 %v5323
    %v5505 = vunpack.c.h.b16 %v5323
    %v5506 = vunpack.c.l.b16 %v5324
    %v5507 = vunpack.c.h.b16 %v5324
    %v5508 = vunpack.c.l.b16 %v5325
    %v5509 = vunpack.c.h.b16 %v5325
    %v5510 = vunpack.c.l.b16 %v5326
    %v5511 = vunpack.c.h.b16 %v5326
    %v5512 = vunpack.c.l.b16 %v5327
    %v5513 = vunpack.c.h.b16 %v5327
    %v5514 = vunpack.c.l.b16 %v5328
    %v5515 = vunpack.c.h.b16 %v5328
    %v5516 = vunpack.c.l.b16 %v5329
    %v5517 = vunpack.c.h.b16 %v5329
    %v5518 = vunpack.c.l.b16 %v5330
    %v5519 = vunpack.c.h.b16 %v5330
    %v5520 = vunpack.c.l.b16 %v5331
    %v5521 = vunpack.c.h.b16 %v5331
    %v5522 = vunpack.c.l.b16 %v5332
    %v5523 = vunpack.c.h.b16 %v5332
    %v5524 = vunpack.c.l.b16 %v5333
    %v5525 = vunpack.c.h.b16 %v5333
    %v5526 = vunpack.c.l.b16 %v5334
    %v5527 = vunpack.c.h.b16 %v5334
    %v5528 = vunpack.c.l.b16 %v5335
    %v5529 = vunpack.c.h.b16 %v5335
    %v5530 = vunpack.c.l.b16 %v5336
    %v5531 = vunpack.c.h.b16 %v5336
    %v5532 = vunpack.c.l.b16 %v5337
    %v5533 = vunpack.c.h.b16 %v5337
    %v5534 = vunpack.c.l.b16 %v5338
    %v5535 = vunpack.c.h.b16 %v5338
    %v5536 = vunpack.c.l.b16 %v5339
    %v5537 = vunpack.c.h.b16 %v5339
    %v5538 = vunpack.c.l.b16 %v5340
    %v5539 = vunpack.c.h.b16 %v5340
    %v5540 = vunpack.c.l.b16 %v5341
    %v5541 = vunpack.c.h.b16 %v5341
    %v5542 = vunpack.c.l.b16 %v5342
    %v5543 = vunpack.c.h.b16 %v5342
    %v5544 = vunpack.c.l.b16 %v5343
    %v5545 = vunpack.c.h.b16 %v5343
    %v5546 = vunpack.c.l.b16 %v5344
    %v5547 = vunpack.c.h.b16 %v5344
    %v5548 = vunpack.c.l.b16 %v5345
    %v5549 = vunpack.c.h.b16 %v5345
    %v5550 = vpack.c.b16 %v5424, %v5422
    %v5551 = vpack.c.b16 %v5425, %v5423
    %v5552 = vpack.c.b16 %v5428, %v5426
    %v5553 = vpack.c.b16 %v5429, %v5427
    %v5554 = vpack.c.b16 %v5432, %v5430
    %v5555 = vpack.c.b16 %v5433, %v5431
    %v5556 = vpack.c.b16 %v5436, %v5434
    %v5557 = vpack.c.b16 %v5437, %v5435
    %v5558 = vpack.c.b16 %v5440, %v5438
    %v5559 = vpack.c.b16 %v5441, %v5439
    %v5560 = vpack.c.b16 %v5444, %v5442
    %v5561 = vpack.c.b16 %v5445, %v5443
    %v5562 = vpack.c.b16 %v5448, %v5446
    %v5563 = vpack.c.b16 %v5449, %v5447
    %v5564 = vpack.c.b16 %v5452, %v5450
    %v5565 = vpack.c.b16 %v5453, %v5451
    %v5566 = vpack.c.b16 %v5456, %v5454
    %v5567 = vpack.c.b16 %v5457, %v5455
    %v5568 = vpack.c.b16 %v5460, %v5458
    %v5569 = vpack.c.b16 %v5461, %v5459
    %v5570 = vpack.c.b16 %v5464, %v5462
    %v5571 = vpack.c.b16 %v5465, %v5463
    %v5572 = vpack.c.b16 %v5468, %v5466
    %v5573 = vpack.c.b16 %v5469, %v5467
    %v5574 = vpack.c.b16 %v5472, %v5470
    %v5575 = vpack.c.b16 %v5473, %v5471
    %v5576 = vpack.c.b16 %v5476, %v5474
    %v5577 = vpack.c.b16 %v5477, %v5475
    %v5578 = vpack.c.b16 %v5480, %v5478
    %v5579 = vpack.c.b16 %v5481, %v5479
    %v5580 = vpack.c.b16 %v5484, %v5482
    %v5581 = vpack.c.b16 %v5485, %v5483
    %v5582 = vpack.c.b16 %v5488, %v5486
    %v5583 = vpack.c.b16 %v5489, %v5487
    %v5584 = vpack.c.b16 %v5492, %v5490
    %v5585 = vpack.c.b16 %v5493, %v5491
    %v5586 = vpack.c.b16 %v5496, %v5494
    %v5587 = vpack.c.b16 %v5497, %v5495
    %v5588 = vpack.c.b16 %v5500, %v5498
    %v5589 = vpack.c.b16 %v5501, %v5499
    %v5590 = vpack.c.b16 %v5504, %v5502
    %v5591 = vpack.c.b16 %v5505, %v5503
    %v5592 = vpack.c.b16 %v5508, %v5506
    %v5593 = vpack.c.b16 %v5509, %v5507
    %v5594 = vpack.c.b16 %v5512, %v5510
    %v5595 = vpack.c.b16 %v5513, %v5511
    %v5596 = vpack.c.b16 %v5516, %v5514
    %v5597 = vpack.c.b16 %v5517, %v5515
    %v5598 = vpack.c.b16 %v5520, %v5518
    %v5599 = vpack.c.b16 %v5521, %v5519
    %v5600 = vpack.c.b16 %v5524, %v5522
    %v5601 = vpack.c.b16 %v5525, %v5523
    %v5602 = vpack.c.b16 %v5528, %v5526
    %v5603 = vpack.c.b16 %v5529, %v5527
    %v5604 = vpack.c.b16 %v5532, %v5530
    %v5605 = vpack.c.b16 %v5533, %v5531
    %v5606 = vpack.c.b16 %v5536, %v5534
    %v5607 = vpack.c.b16 %v5537, %v5535
    %v5608 = vpack.c.b16 %v5540, %v5538
    %v5609 = vpack.c.b16 %v5541, %v5539
    %v5610 = vpack.c.b16 %v5544, %v5542
    %v5611 = vpack.c.b16 %v5545, %v5543
    %v5612 = vpack.c.b16 %v5548, %v5546
    %v5613 = vpack.c.b16 %v5549, %v5547
    %5678 = vmatprep.subr.bf16.mxu0 %v5551
    %5679 = vmatpush1.bf16.msra.mxu0 %v5550
    %5680 = vmatprep.subr.bf16.mxu0 %v5553
    %5681 = vmatpush1.bf16.msra.mxu0 %v5552
    %5682 = vmatprep.subr.bf16.mxu0 %v5555
    %5683 = vmatpush1.bf16.msra.mxu0 %v5554
    %5684 = vmatprep.subr.bf16.mxu0 %v5557
    %5685 = vmatpush1.bf16.msra.mxu0 %v5556
    %5686 = vmatprep.subr.bf16.mxu0 %v5559
    %5687 = vmatpush1.bf16.msra.mxu0 %v5558
    %5688 = vmatprep.subr.bf16.mxu0 %v5561
    %5689 = vmatpush1.bf16.msra.mxu0 %v5560
    %5690 = vmatprep.subr.bf16.mxu0 %v5563
    %5691 = vmatpush1.bf16.msra.mxu0 %v5562
    %5692 = vmatprep.subr.bf16.mxu0 %v5565
    %5693 = vmatpush1.bf16.msra.mxu0 %v5564
    %5694 = vmatprep.subr.bf16.mxu0 %v5567
    %5695 = vmatpush1.bf16.msra.mxu0 %v5566
    %5696 = vmatprep.subr.bf16.mxu0 %v5569
    %5697 = vmatpush1.bf16.msra.mxu0 %v5568
    %5698 = vmatprep.subr.bf16.mxu0 %v5571
    %5699 = vmatpush1.bf16.msra.mxu0 %v5570
    %5700 = vmatprep.subr.bf16.mxu0 %v5573
    %5701 = vmatpush1.bf16.msra.mxu0 %v5572
    %5702 = vmatprep.subr.bf16.mxu0 %v5575
    %5703 = vmatpush1.bf16.msra.mxu0 %v5574
    %5704 = vmatprep.subr.bf16.mxu0 %v5577
    %5705 = vmatpush1.bf16.msra.mxu0 %v5576
    %5706 = vmatprep.subr.bf16.mxu0 %v5579
    %5707 = vmatpush1.bf16.msra.mxu0 %v5578
    %5708 = vmatprep.subr.bf16.mxu0 %v5581
    %5709 = vmatpush1.bf16.msra.mxu0 %v5580
    %5710 = vmatprep.mubr.bf16.mxu0 %v5279
    %5711 = vmatmul.mubr.bf16.gmra.mrb[0].mxu0 %v5278
    %v5712 = vpop.f32.mrb[0].mxu0
    %v5713 = vadd.f32 %v5351, %v5712
    %v5714 = vpop.f32.mrb[0].mxu0
    %v5715 = vadd.f32 %v5355, %v5714
    %v5716 = vpop.f32.mrb[0].mxu0
    %v5717 = vpop.f32.mrb[0].mxu0
    %5718 = vdwg.mxu0
    %5719 = vmatprep.subr.bf16.mxu0 %v5583
    %5720 = vmatpush1.bf16.msra.mxu0 %v5582
    %5721 = vmatprep.subr.bf16.mxu0 %v5585
    %5722 = vmatpush1.bf16.msra.mxu0 %v5584
    %5723 = vmatprep.subr.bf16.mxu0 %v5587
    %5724 = vmatpush1.bf16.msra.mxu0 %v5586
    %5725 = vmatprep.subr.bf16.mxu0 %v5589
    %5726 = vmatpush1.bf16.msra.mxu0 %v5588
    %5727 = vmatprep.subr.bf16.mxu0 %v5591
    %5728 = vmatpush1.bf16.msra.mxu0 %v5590
    %5729 = vmatprep.subr.bf16.mxu0 %v5593
    %5730 = vmatpush1.bf16.msra.mxu0 %v5592
    %5731 = vmatprep.subr.bf16.mxu0 %v5595
    %5732 = vmatpush1.bf16.msra.mxu0 %v5594
    %5733 = vmatprep.subr.bf16.mxu0 %v5597
    %5734 = vmatpush1.bf16.msra.mxu0 %v5596
    %5735 = vmatprep.subr.bf16.mxu0 %v5599
    %5736 = vmatpush1.bf16.msra.mxu0 %v5598
    %5737 = vmatprep.subr.bf16.mxu0 %v5601
    %5738 = vmatpush1.bf16.msra.mxu0 %v5600
    %5739 = vmatprep.subr.bf16.mxu0 %v5603
    %5740 = vmatpush1.bf16.msra.mxu0 %v5602
    %5741 = vmatprep.subr.bf16.mxu0 %v5605
    %5742 = vmatpush1.bf16.msra.mxu0 %v5604
    %5743 = vmatprep.subr.bf16.mxu0 %v5607
    %5744 = vmatpush1.bf16.msra.mxu0 %v5606
    %5745 = vmatprep.subr.bf16.mxu0 %v5609
    %5746 = vmatpush1.bf16.msra.mxu0 %v5608
    %5747 = vmatprep.subr.bf16.mxu0 %v5611
    %5748 = vmatpush1.bf16.msra.mxu0 %v5610
    %5749 = vmatprep.subr.bf16.mxu0 %v5613
    %5750 = vmatpush1.bf16.msra.mxu0 %v5612
    %5751 = vmatprep.mubr.bf16.mxu0 %v5281
    %5752 = vmatmul.mubr.bf16.gmra.mrb[0].mxu0 %v5280
    %v5753 = vpop.f32.mrb[0].mxu0
    %v5754 = vadd.f32 %v5713, %v5753
    %v5755 = vpop.f32.mrb[0].mxu0
    %v5756 = vadd.f32 %v5715, %v5755
    %v5757 = vpop.f32.mrb[0].mxu0
    %v5758 = vpop.f32.mrb[0].mxu0
    %5759 = vdwg.mxu0
    %vm5760 = vcmask 1041408
    %v5761 = vsel %vm5760, %v5754, -inf
    %5762 = vmax.xlane.f32.xlu0 %v5761
    %v5763 = vpop.xlane.xlu0 %5762
    %v5764 = vsub.f32 %v5754, %v5763
    %v5765 = vmul.f32 %v5764, 1.442695
    %v5766 = vpow.pop %v5765
    %v5767 = vsel %vm5760, %v5766, 0.0
    %5768 = vadd.xlane.f32.xlu0 %v5767
    %v5769 = vpop.xlane.xlu0 %5768
    %v5770 = vlog2.pop %v5769
    %v5771 = vmul.f32 %v5770, 0.6931472
    %v5772 = vadd.f32 %v5771, %v5763
    %v5773 = vsub.f32 %v5754, %v5772
    %5774 = vst [vmem:[#allocation8] sm:$0x3] %v5773
    %v5775 = vtanh.pop %v5756
    %vm5776 = vcmask 1024
    %5777 = vst.msk [vmem:[%s20] sm:$0x3] %vm5776, %v5775
    // Predicated region
    $region86: #{chess_nnet_forward.1} parent=1 // pred_check
      _
    $region87: #{chess_nnet_forward.1} parent=1 // pred_check_branch
      %5779 = sbr.rel (0) target = $region89
    $region88: #{chess_nnet_forward.1} parent=1 // pred_region
      %s5781 = ssub.s32 32, 32
      %5782 = vsyncadd [#allocation5], %s5781
      %s5784 = sshll.u32 [#allocation8], 4
      %s5785 = int_to_ptr.vmem [resolvable:$true] %s5784
      %5787 = dma.vmem_to_hbm [thread:$0]  %s5785, 32, %s19, [#allocation5]
    $region89: #{chess_nnet_forward.1} parent=1 // pred_fallthru
      _
    // Predicated region
    $region90: #{chess_nnet_forward.1} parent=1 // pred_check
      _
    $region91: #{chess_nnet_forward.1} parent=1 // pred_check_branch
      %5789 = sbr.rel (0) target = $region93
    $region92: #{chess_nnet_forward.1} parent=1 // pred_region
      _
    $region93: #{chess_nnet_forward.1} parent=1 // pred_fallthru
      _
    // Predicated region
    $region94: #{chess_nnet_forward.1} parent=1 // pred_check
      _
    $region95: #{chess_nnet_forward.1} parent=1 // pred_check_branch
      %5791 = sbr.rel (0) target = $region97
    $region96: #{chess_nnet_forward.1} parent=1 // pred_region
      %5792 = dma.done [#allocation5], 32
    $region97: #{chess_nnet_forward.1} parent=1 // pred_fallthru
      _
    // Predicated region
    $region98: #{chess_nnet_forward.1} parent=1 // pred_check
      _
    $region99: #{chess_nnet_forward.1} parent=1 // pred_check_branch
      %5794 = sbr.rel (0) target = $region101
    $region100: #{chess_nnet_forward.1} parent=1 // pred_region
      _
    $region101: #{chess_nnet_forward.1} parent=1 // pred_fallthru
      _
    %5795 = vsyncpa [#allocation4], 1
    %5796 = vsyncpa [#allocation7], 1
    %5797 = vsyncpa [#allocation5], 1

</llo_original>
